<compile_context>
chip_gen: v5e
topology: v5e:2x2
jax: 0.10.0
libtpu: 0.0.40
codegen_flags: <defaults>
</compile_context>

<pallas_src>
import functools
import math

import jax
import jax.numpy as jnp
from jax import lax
from jax.experimental import pallas as pl
from jax.experimental.pallas import tpu as pltpu


# Original-module parameter layout (used by the pure-JAX reference).
PARAM_ORDER = ("w_sa", "b_sa", "w_ma", "b_ma", "w_la", "b_la",
               "ep_mem", "ep_w", "ep_b", "wm_buf", "ln_g", "ln_b", "head_mask")

# Fused / kernel-side parameter layout (order matches the kernel signature).
KPARAM_ORDER = ("w_sa_vo", "b_sa_vo",
                "w_ma_q", "w_ma_kv", "w_ma_o", "b_ma_q", "b_ma_kv", "b_ma_o",
                "w_la_qkv", "w_la_o", "b_la_qkv", "b_la_o",
                "ep_mem", "ep_w", "ep_b", "wm_buf",
                "ln_g", "ln_b", "head_sum")


def _layernorm(h, gamma, beta, eps=1e-5):
    mu = jnp.mean(h, axis=-1, keepdims=True)
    var = jnp.mean((h - mu) ** 2, axis=-1, keepdims=True)
    return (h - mu) * lax.rsqrt(var + eps) * gamma + beta


# ----------------------------------------------------------------------------
# Pure-JAX reference (the semantic spec; original unfused parameter layout).
# ----------------------------------------------------------------------------
def _softmax(s):
    m = jnp.max(s, axis=-1, keepdims=True)
    e = jnp.exp(s - m)
    return e / jnp.sum(e, axis=-1, keepdims=True)


def _block_math(x, w_sa, b_sa, w_ma, b_ma, w_la, b_la,
                ep_mem, ep_w, ep_b, wm_buf, ln_g, ln_b, head_mask):
    B, D = x.shape
    H = head_mask.shape[1]
    hd = D // H

    def proj(h, w, b, i):
        return jnp.dot(h, w[i], preferred_element_type=jnp.float32) + b[i]

    # 1. self attention (length-1 sequence -> out(v(x)))
    v_sa = proj(x, w_sa, b_sa, 2)
    attended = proj(v_sa, w_sa, b_sa, 3)
    x1 = _layernorm(x + attended, ln_g[0], ln_b[0])

    # 2. episodic memory read
    q_e = jnp.dot(x1, ep_w, preferred_element_type=jnp.float32) + ep_b
    sc_e = jnp.einsum("bd,md->bm", q_e, ep_mem,
                      preferred_element_type=jnp.float32) / math.sqrt(D)
    episodic = jnp.dot(_softmax(sc_e), ep_mem,
                       preferred_element_type=jnp.float32)

    # 3. working memory: write x1 into slot 0, then attention read
    Mw = wm_buf.shape[0]
    sc_full = jnp.einsum("bd,md->bm", x1, wm_buf,
                         preferred_element_type=jnp.float32) / math.sqrt(D)
    sc_self = jnp.sum(x1 * x1, axis=-1, keepdims=True) / math.sqrt(D)
    col0 = lax.broadcasted_iota(jnp.int32, (B, Mw), 1) == 0
    attn_w = _softmax(jnp.where(col0, sc_self, sc_full))
    attn_rest = jnp.where(col0, 0.0, attn_w)
    working = attn_w[:, 0:1] * x1 + jnp.dot(
        attn_rest, wm_buf, preferred_element_type=jnp.float32)

    # 4. multi-head cross attention of x1 over the 2 memory states
    q = proj(x1, w_ma, b_ma, 0)
    k_e = proj(episodic, w_ma, b_ma, 1)
    k_w = proj(working, w_ma, b_ma, 1)
    v_e = proj(episodic, w_ma, b_ma, 2)
    v_w = proj(working, w_ma, b_ma, 2)
    s_e = jnp.dot(q * k_e, head_mask,
                  preferred_element_type=jnp.float32) / math.sqrt(hd)
    s_w = jnp.dot(q * k_w, head_mask,
                  preferred_element_type=jnp.float32) / math.sqrt(hd)
    m = jnp.maximum(s_e, s_w)
    e_e = jnp.exp(s_e - m)
    e_w = jnp.exp(s_w - m)
    inv_den = 1.0 / (e_e + e_w)
    a_e = jnp.einsum("bh,dh->bd", e_e * inv_den, head_mask,
                     preferred_element_type=jnp.float32)
    a_w = jnp.einsum("bh,dh->bd", e_w * inv_den, head_mask,
                     preferred_element_type=jnp.float32)
    context = a_e * v_e + a_w * v_w
    mem_ctx = proj(context, w_ma, b_ma, 3)
    x2 = _layernorm(x1 + mem_ctx, ln_g[1], ln_b[1])

    # 5. linear attention (elu+1 feature map, length-1 sequence)
    q_l = proj(x2, w_la, b_la, 0)
    k_l = proj(x2, w_la, b_la, 1)
    v_l = proj(x2, w_la, b_la, 2)
    phi_q = jnp.where(q_l > 0, q_l + 1.0, jnp.exp(q_l))
    phi_k = jnp.where(k_l > 0, k_l + 1.0, jnp.exp(k_l))
    z = jnp.sum(phi_q * phi_k, axis=-1, keepdims=True)
    local = proj((z * v_l) / (z + 1e-6), w_la, b_la, 3)
    x3 = _layernorm(x2 + local, ln_g[2], ln_b[2])
    return x3


# ----------------------------------------------------------------------------
# Pallas kernel (fused weight layout, bf16 MXU matmuls, EUP reciprocals).
# ----------------------------------------------------------------------------
def _softmax_recip(s):
    """Softmax with the denominator reciprocal on the EUP slot."""
    m = jnp.max(s, axis=-1, keepdims=True)
    e = jnp.exp(s - m)
    return e * pl.reciprocal(jnp.sum(e, axis=-1, keepdims=True), approx=True)


def memory_attention_kernel(x_ref, w_sa_ref, b_sa_ref,
                            w_ma_q_ref, w_ma_kv_ref, w_ma_o_ref,
                            b_ma_q_ref, b_ma_kv_ref, b_ma_o_ref,
                            w_la_qkv_ref, w_la_o_ref, b_la_qkv_ref, b_la_o_ref,
                            ep_mem_ref, ep_w_ref, ep_b_ref, wm_buf_ref,
                            ln_g_ref, ln_b_ref, head_sum_ref, out_ref, *,
                            num_heads):
    bf16 = jnp.bfloat16
    x = x_ref[...]                                   # (TB, D) f32
    TB, D = x.shape
    hd = D // num_heads
    inv_sqrt_d = 1.0 / math.sqrt(D)
    inv_sqrt_hd = 1.0 / math.sqrt(hd)
    ln_g = ln_g_ref[...]
    ln_b = ln_b_ref[...]

    def bdot(h, w):                                  # bf16 MXU matmul, f32 acc
        return jnp.dot(h.astype(bf16), w, preferred_element_type=jnp.float32)

    # --- 1. self attention: length-1 sequence -> out_proj(v_proj(x)) ---------
    w_sa = w_sa_ref[...]                             # (2, D, D) bf16: [v, out]
    b_sa = b_sa_ref[...]                             # (2, D)    f32
    v_sa = bdot(x, w_sa[0]) + b_sa[0]
    attended = bdot(v_sa, w_sa[1]) + b_sa[1]
    x1 = _layernorm(x + attended, ln_g[0], ln_b[0])

    # --- 2. episodic memory read (softmax attention over the bank) -----------
    ep_mem = ep_mem_ref[...]                         # (M, D) f32
    q_e = bdot(x1, ep_w_ref[...]) + ep_b_ref[...]
    sc_e = jnp.einsum("bd,md->bm", q_e, ep_mem,
                      preferred_element_type=jnp.float32) * inv_sqrt_d
    p_e = _softmax_recip(sc_e)
    episodic = jnp.dot(p_e, ep_mem, preferred_element_type=jnp.float32)

    # --- 3. working memory: write x1 into slot 0, then attention read --------
    wm_buf = wm_buf_ref[...]                         # (Mw, D) f32
    Mw = wm_buf.shape[0]
    sc_full = jnp.einsum("bd,md->bm", x1, wm_buf,
                         preferred_element_type=jnp.float32) * inv_sqrt_d
    sc_self = jnp.sum(x1 * x1, axis=-1, keepdims=True) * inv_sqrt_d
    col0 = lax.broadcasted_iota(jnp.int32, (TB, Mw), 1) == 0
    p_w = _softmax_recip(jnp.where(col0, sc_self, sc_full))
    p_rest = jnp.where(col0, 0.0, p_w)
    working = p_w[:, 0:1] * x1 + jnp.dot(p_rest, wm_buf,
                                         preferred_element_type=jnp.float32)

    # --- 4. multi-head cross attention of x1 over the 2 memory states --------
    q = bdot(x1, w_ma_q_ref[...]) + b_ma_q_ref[...]
    # one fused K|V matmul over the stacked [episodic; working] operand
    mem2 = jnp.concatenate([episodic, working], axis=0)           # (2*TB, D)
    kv = bdot(mem2, w_ma_kv_ref[...]) + b_ma_kv_ref[...]          # (2*TB, 2D)
    k_e, v_e = kv[:TB, :D], kv[:TB, D:]
    k_w, v_w = kv[TB:, :D], kv[TB:, D:]
    # 2-way per-head softmax == sigmoid of per-head score difference; the
    # block-diagonal ones matrix broadcasts the per-head sum back to all lanes
    # of that head, so everything stays lane-dense (TB, D).
    diff = bdot(q * (k_e - k_w), head_sum_ref[...]) * inv_sqrt_hd
    a_e = pl.reciprocal(1.0 + jnp.exp(-diff), approx=True)        # sigmoid
    context = v_w + a_e * (v_e - v_w)
    mem_ctx = bdot(context, w_ma_o_ref[...]) + b_ma_o_ref[...]
    x2 = _layernorm(x1 + mem_ctx, ln_g[1], ln_b[1])

    # --- 5. linear attention (elu+1 feature map, length-1 sequence) ----------
    qkv = bdot(x2, w_la_qkv_ref[...]) + b_la_qkv_ref[...]         # (TB, 3D)
    q_l, k_l, v_l = qkv[:, :D], qkv[:, D:2 * D], qkv[:, 2 * D:]
    phi_q = jnp.where(q_l > 0, q_l + 1.0, jnp.exp(jnp.minimum(q_l, 0.0)))
    phi_k = jnp.where(k_l > 0, k_l + 1.0, jnp.exp(jnp.minimum(k_l, 0.0)))
    z = jnp.sum(phi_q * phi_k, axis=-1, keepdims=True)
    local_in = (z * v_l) * pl.reciprocal(z + 1e-6, approx=True)
    local = bdot(local_in, w_la_o_ref[...]) + b_la_o_ref[...]
    x3 = _layernorm(x2 + local, ln_g[2], ln_b[2])

    out_ref[...] = x3.astype(out_ref.dtype)


def _const_index_map(nd):
    return lambda i: (0,) * nd


def memory_attention_block(x, kparams, num_heads, block_rows=128):
    """Grid over 128-row batch tiles; weights VMEM-resident across the grid."""
    B, D = x.shape
    TB = min(block_rows, B)
    assert B % TB == 0, "batch must be a multiple of the row tile"
    grid = (B // TB,)

    args = [x] + [kparams[k] for k in KPARAM_ORDER]
    in_specs = [pl.BlockSpec((TB, D), lambda i: (i, 0))]
    for k in KPARAM_ORDER:
        a = kparams[k]
        # Full-array block with a constant index_map: fetched once, stays in
        # VMEM for every grid iteration (no per-tile weight re-DMA).
        in_specs.append(pl.BlockSpec(a.shape, _const_index_map(a.ndim)))

    return pl.pallas_call(
        functools.partial(memory_attention_kernel, num_heads=num_heads),
        out_shape=jax.ShapeDtypeStruct((B, D), jnp.float32),
        grid=grid,
        in_specs=in_specs,
        out_specs=pl.BlockSpec((TB, D), lambda i: (i, 0)),
        compiler_params=pltpu.CompilerParams(
            dimension_semantics=("parallel",)),   # v7x: 2 TCs split the rows
    )(*args)


# ----------------------------------------------------------------------------
# Parameter construction / layout plumbing (wrapper side, done once).
# ----------------------------------------------------------------------------
def init_params(key, D, H, memory_size):
    Mw = memory_size // 2
    ks = jax.random.split(key, 10)
    s = 0.05
    return {
        "w_sa": jax.random.normal(ks[0], (4, D, D), jnp.float32) * s,
        "b_sa": jax.random.normal(ks[1], (4, D), jnp.float32) * 0.01,
        "w_ma": jax.random.normal(ks[2], (4, D, D), jnp.float32) * s,
        "b_ma": jax.random.normal(ks[3], (4, D), jnp.float32) * 0.01,
        "w_la": jax.random.normal(ks[4], (4, D, D), jnp.float32) * s,
        "b_la": jax.random.normal(ks[5], (4, D), jnp.float32) * 0.01,
        "ep_mem": jax.random.normal(ks[6], (memory_size, D), jnp.float32) * 0.5,
        "ep_w": jax.random.normal(ks[7], (D, D), jnp.float32) * s,
        "ep_b": jax.random.normal(ks[8], (1, D), jnp.float32) * 0.01,
        "wm_buf": jax.random.normal(ks[9], (Mw, D), jnp.float32) * 0.5,
        "ln_g": jnp.ones((3, D), jnp.float32),
        "ln_b": jnp.zeros((3, D), jnp.float32),
        # head h owns contiguous feature chunk [h*hd, (h+1)*hd)
        "head_mask": jnp.repeat(jnp.eye(H, dtype=jnp.float32), D // H, axis=0),
    }


def prepare_kernel_params(p):
    """Fuse stacked q/k/v/out weights, drop dead planes, cast weights to bf16."""
    bf = jnp.bfloat16
    head_mask = p["head_mask"]                       # (D, H), 0/1
    head_sum = head_mask @ head_mask.T               # (D, D) block-diag ones
    return {
        # self-attention: only v/out planes are used (length-1 shortcut)
        "w_sa_vo": jnp.stack([p["w_sa"][2], p["w_sa"][3]]).astype(bf),
        "b_sa_vo": jnp.stack([p["b_sa"][2], p["b_sa"][3]]),
        # memory attention: q, fused k|v, out
        "w_ma_q": p["w_ma"][0].astype(bf),
        "w_ma_kv": jnp.concatenate([p["w_ma"][1], p["w_ma"][2]], axis=1).astype(bf),
        "w_ma_o": p["w_ma"][3].astype(bf),
        "b_ma_q": p["b_ma"][0][None, :],
        "b_ma_kv": jnp.concatenate([p["b_ma"][1], p["b_ma"][2]])[None, :],
        "b_ma_o": p["b_ma"][3][None, :],
        # linear attention: fused q|k|v, out
        "w_la_qkv": jnp.concatenate(
            [p["w_la"][0], p["w_la"][1], p["w_la"][2]], axis=1).astype(bf),
        "w_la_o": p["w_la"][3].astype(bf),
        "b_la_qkv": jnp.concatenate(
            [p["b_la"][0], p["b_la"][1], p["b_la"][2]])[None, :],
        "b_la_o": p["b_la"][3][None, :],
        # memories / norms kept f32 (small; used in element-wise paths too)
        "ep_mem": p["ep_mem"],
        "ep_w": p["ep_w"].astype(bf),
        "ep_b": p["ep_b"],
        "wm_buf": p["wm_buf"],
        "ln_g": p["ln_g"],
        "ln_b": p["ln_b"],
        "head_sum": head_sum.astype(bf),             # 0/1 -> exact in bf16
    }


def _bf16_roundtrip_ref_params(p):
    """Reference params with the same bf16 weight quantization as the kernel."""
    q = dict(p)
    for k in ("w_sa", "w_ma", "w_la", "ep_w"):
        q[k] = p[k].astype(jnp.bfloat16).astype(jnp.float32)
    return q


if __name__ == "__main__":
    B = 256          # batched rows per call: 2 grid tiles of 128 rows
    D = 128          # input_dim
    H = 8            # num_heads
    MEMORY_SIZE = 64  # (module default is 100; small deterministic bank here)

    key = jax.random.PRNGKey(0)
    kx, kp = jax.random.split(key)
    x = jax.random.normal(kx, (B, D), jnp.float32)
    params = init_params(kp, D, H, MEMORY_SIZE)
    kparams = prepare_kernel_params(params)

    out = memory_attention_block(x, kparams, num_heads=H)
    out = jax.block_until_ready(out)

    # Reference uses the same bf16-rounded projection weights, so remaining
    # differences come only from bf16 activation rounding at the MXU inputs
    # and the approximate EUP reciprocals.
    ref_params = _bf16_roundtrip_ref_params(params)
    ref = _block_math(x, *[ref_params[k] for k in PARAM_ORDER])

    assert out.shape == (B, D) and out.dtype == jnp.float32
    max_err = float(jnp.max(jnp.abs(out - ref)))
    assert jnp.allclose(out, ref, atol=3e-2, rtol=3e-2), f"max_err={max_err}"

    print("KERNEL_OK")
</pallas_src>

<mosaic_0001>
module attributes {stable_mosaic.version = 11 : i64} {
  func.func @memory_attention_kernel(%arg0: i32, %arg1: memref<128x128xf32, #tpu.memory_space<vmem>>, %arg2: memref<2x128x128xbf16, #tpu.memory_space<vmem>>, %arg3: memref<2x128xf32, #tpu.memory_space<vmem>>, %arg4: memref<128x128xbf16, #tpu.memory_space<vmem>>, %arg5: memref<128x256xbf16, #tpu.memory_space<vmem>>, %arg6: memref<128x128xbf16, #tpu.memory_space<vmem>>, %arg7: memref<1x128xf32, #tpu.memory_space<vmem>>, %arg8: memref<1x256xf32, #tpu.memory_space<vmem>>, %arg9: memref<1x128xf32, #tpu.memory_space<vmem>>, %arg10: memref<128x384xbf16, #tpu.memory_space<vmem>>, %arg11: memref<128x128xbf16, #tpu.memory_space<vmem>>, %arg12: memref<1x384xf32, #tpu.memory_space<vmem>>, %arg13: memref<1x128xf32, #tpu.memory_space<vmem>>, %arg14: memref<64x128xf32, #tpu.memory_space<vmem>>, %arg15: memref<128x128xbf16, #tpu.memory_space<vmem>>, %arg16: memref<1x128xf32, #tpu.memory_space<vmem>>, %arg17: memref<32x128xf32, #tpu.memory_space<vmem>>, %arg18: memref<3x128xf32, #tpu.memory_space<vmem>>, %arg19: memref<3x128xf32, #tpu.memory_space<vmem>>, %arg20: memref<128x128xbf16, #tpu.memory_space<vmem>>, %arg21: memref<128x128xf32, #tpu.memory_space<vmem>>) attributes {dimension_semantics = [#tpu.dimension_semantics<parallel>], iteration_bounds = array<i64: 2>, scalar_prefetch = 0 : i64, scratch_operands = 0 : i64, tpu.core_type = #tpu.core_type<tc>, window_params = [{transform_indices = @transform_0, window_bounds = array<i64: 128, 128>}, {pipeline_mode = #tpu.pipeline_mode<synchronous>, transform_indices = @transform_1, window_bounds = array<i64: 2, 128, 128>}, {pipeline_mode = #tpu.pipeline_mode<synchronous>, transform_indices = @transform_2, window_bounds = array<i64: 2, 128>}, {pipeline_mode = #tpu.pipeline_mode<synchronous>, transform_indices = @transform_3, window_bounds = array<i64: 128, 128>}, {pipeline_mode = #tpu.pipeline_mode<synchronous>, transform_indices = @transform_4, window_bounds = array<i64: 128, 256>}, {pipeline_mode = #tpu.pipeline_mode<synchronous>, transform_indices = @transform_5, window_bounds = array<i64: 128, 128>}, {pipeline_mode = #tpu.pipeline_mode<synchronous>, transform_indices = @transform_6, window_bounds = array<i64: 1, 128>}, {pipeline_mode = #tpu.pipeline_mode<synchronous>, transform_indices = @transform_7, window_bounds = array<i64: 1, 256>}, {pipeline_mode = #tpu.pipeline_mode<synchronous>, transform_indices = @transform_8, window_bounds = array<i64: 1, 128>}, {pipeline_mode = #tpu.pipeline_mode<synchronous>, transform_indices = @transform_9, window_bounds = array<i64: 128, 384>}, {pipeline_mode = #tpu.pipeline_mode<synchronous>, transform_indices = @transform_10, window_bounds = array<i64: 128, 128>}, {pipeline_mode = #tpu.pipeline_mode<synchronous>, transform_indices = @transform_11, window_bounds = array<i64: 1, 384>}, {pipeline_mode = #tpu.pipeline_mode<synchronous>, transform_indices = @transform_12, window_bounds = array<i64: 1, 128>}, {pipeline_mode = #tpu.pipeline_mode<synchronous>, transform_indices = @transform_13, window_bounds = array<i64: 64, 128>}, {pipeline_mode = #tpu.pipeline_mode<synchronous>, transform_indices = @transform_14, window_bounds = array<i64: 128, 128>}, {pipeline_mode = #tpu.pipeline_mode<synchronous>, transform_indices = @transform_15, window_bounds = array<i64: 1, 128>}, {pipeline_mode = #tpu.pipeline_mode<synchronous>, transform_indices = @transform_16, window_bounds = array<i64: 32, 128>}, {pipeline_mode = #tpu.pipeline_mode<synchronous>, transform_indices = @transform_17, window_bounds = array<i64: 3, 128>}, {pipeline_mode = #tpu.pipeline_mode<synchronous>, transform_indices = @transform_18, window_bounds = array<i64: 3, 128>}, {pipeline_mode = #tpu.pipeline_mode<synchronous>, transform_indices = @transform_19, window_bounds = array<i64: 128, 128>}, {transform_indices = @transform_20, window_bounds = array<i64: 128, 128>}]} {
    %c0 = arith.constant 0 : index
    %c0_0 = arith.constant 0 : index
    %0 = vector.load %arg1[%c0, %c0_0] : memref<128x128xf32, #tpu.memory_space<vmem>>, vector<128x128xf32>
    %c0_1 = arith.constant 0 : index
    %c0_2 = arith.constant 0 : index
    %1 = vector.load %arg18[%c0_1, %c0_2] : memref<3x128xf32, #tpu.memory_space<vmem>>, vector<3x128xf32>
    %c0_3 = arith.constant 0 : index
    %c0_4 = arith.constant 0 : index
    %2 = vector.load %arg19[%c0_3, %c0_4] : memref<3x128xf32, #tpu.memory_space<vmem>>, vector<3x128xf32>
    %c0_5 = arith.constant 0 : index
    %c0_6 = arith.constant 0 : index
    %c0_7 = arith.constant 0 : index
    %3 = vector.load %arg2[%c0_5, %c0_6, %c0_7] : memref<2x128x128xbf16, #tpu.memory_space<vmem>>, vector<2x128x128xbf16>
    %c0_8 = arith.constant 0 : index
    %c0_9 = arith.constant 0 : index
    %4 = vector.load %arg3[%c0_8, %c0_9] : memref<2x128xf32, #tpu.memory_space<vmem>>, vector<2x128xf32>
    %5 = vector.extract_strided_slice %3 {offsets = [0, 0, 0], sizes = [1, 128, 128], strides = [1, 1, 1]} : vector<2x128x128xbf16> to vector<1x128x128xbf16>
    %6 = vector.shape_cast %5 : vector<1x128x128xbf16> to vector<128x128xbf16>
    %7 = arith.truncf %0 : vector<128x128xf32> to vector<128x128xbf16>
    %cst = arith.constant dense<0.000000e+00> : vector<128x128xf32>
    %8 = tpu.matmul %7, %6, %cst {dimension_numbers = #tpu.dot_dimension_numbers<[1], [0], [0], [1], [0, 0, 1, 1], [], []>} : vector<128x128xbf16>, vector<128x128xbf16>, vector<128x128xf32> -> vector<128x128xf32>
    %9 = vector.extract_strided_slice %4 {offsets = [0, 0], sizes = [1, 128], strides = [1, 1]} : vector<2x128xf32> to vector<1x128xf32>
    %10 = vector.shape_cast %9 : vector<1x128xf32> to vector<128xf32>
    %11 = vector.shape_cast %10 : vector<128xf32> to vector<1x128xf32>
    %12 = vector.broadcast %11 : vector<1x128xf32> to vector<128x128xf32>
    %13 = arith.addf %8, %12 : vector<128x128xf32>
    %14 = vector.extract_strided_slice %3 {offsets = [1, 0, 0], sizes = [1, 128, 128], strides = [1, 1, 1]} : vector<2x128x128xbf16> to vector<1x128x128xbf16>
    %15 = vector.shape_cast %14 : vector<1x128x128xbf16> to vector<128x128xbf16>
    %16 = arith.truncf %13 : vector<128x128xf32> to vector<128x128xbf16>
    %cst_10 = arith.constant dense<0.000000e+00> : vector<128x128xf32>
    %17 = tpu.matmul %16, %15, %cst_10 {dimension_numbers = #tpu.dot_dimension_numbers<[1], [0], [0], [1], [0, 0, 1, 1], [], []>} : vector<128x128xbf16>, vector<128x128xbf16>, vector<128x128xf32> -> vector<128x128xf32>
    %18 = vector.extract_strided_slice %4 {offsets = [1, 0], sizes = [1, 128], strides = [1, 1]} : vector<2x128xf32> to vector<1x128xf32>
    %19 = vector.shape_cast %18 : vector<1x128xf32> to vector<128xf32>
    %20 = vector.shape_cast %19 : vector<128xf32> to vector<1x128xf32>
    %21 = vector.broadcast %20 : vector<1x128xf32> to vector<128x128xf32>
    %22 = arith.addf %17, %21 : vector<128x128xf32>
    %23 = arith.addf %0, %22 : vector<128x128xf32>
    %24 = vector.extract_strided_slice %1 {offsets = [0, 0], sizes = [1, 128], strides = [1, 1]} : vector<3x128xf32> to vector<1x128xf32>
    %25 = vector.shape_cast %24 : vector<1x128xf32> to vector<128xf32>
    %26 = vector.extract_strided_slice %2 {offsets = [0, 0], sizes = [1, 128], strides = [1, 1]} : vector<3x128xf32> to vector<1x128xf32>
    %27 = vector.shape_cast %26 : vector<1x128xf32> to vector<128xf32>
    %cst_11 = arith.constant dense<0.000000e+00> : vector<128xf32>
    %28 = vector.multi_reduction <add>, %23, %cst_11 [1] : vector<128x128xf32> to vector<128xf32>
    %29 = vector.shape_cast %28 : vector<128xf32> to vector<128x1xf32>
    %cst_12 = arith.constant 1.280000e+02 : f32
    %30 = vector.broadcast %cst_12 : f32 to vector<128x1xf32>
    %31 = arith.divf %29, %30 : vector<128x1xf32>
    %32 = vector.broadcast %31 : vector<128x1xf32> to vector<128x128xf32>
    %33 = arith.subf %23, %32 : vector<128x128xf32>
    %34 = arith.mulf %33, %33 : vector<128x128xf32>
    %cst_13 = arith.constant dense<0.000000e+00> : vector<128xf32>
    %35 = vector.multi_reduction <add>, %34, %cst_13 [1] : vector<128x128xf32> to vector<128xf32>
    %36 = vector.shape_cast %35 : vector<128xf32> to vector<128x1xf32>
    %cst_14 = arith.constant 1.280000e+02 : f32
    %37 = vector.broadcast %cst_14 : f32 to vector<128x1xf32>
    %38 = arith.divf %36, %37 : vector<128x1xf32>
    %39 = vector.broadcast %31 : vector<128x1xf32> to vector<128x128xf32>
    %40 = arith.subf %23, %39 : vector<128x128xf32>
    %cst_15 = arith.constant 9.99999974E-6 : f32
    %41 = vector.broadcast %cst_15 : f32 to vector<128x1xf32>
    %42 = arith.addf %38, %41 : vector<128x1xf32>
    %43 = math.rsqrt %42 : vector<128x1xf32>
    %44 = vector.broadcast %43 : vector<128x1xf32> to vector<128x128xf32>
    %45 = arith.mulf %40, %44 : vector<128x128xf32>
    %46 = vector.shape_cast %25 : vector<128xf32> to vector<1x128xf32>
    %47 = vector.broadcast %46 : vector<1x128xf32> to vector<128x128xf32>
    %48 = arith.mulf %45, %47 : vector<128x128xf32>
    %49 = vector.shape_cast %27 : vector<128xf32> to vector<1x128xf32>
    %50 = vector.broadcast %49 : vector<1x128xf32> to vector<128x128xf32>
    %51 = arith.addf %48, %50 : vector<128x128xf32>
    %c0_16 = arith.constant 0 : index
    %c0_17 = arith.constant 0 : index
    %52 = vector.load %arg14[%c0_16, %c0_17] : memref<64x128xf32, #tpu.memory_space<vmem>>, vector<64x128xf32>
    %c0_18 = arith.constant 0 : index
    %c0_19 = arith.constant 0 : index
    %53 = vector.load %arg15[%c0_18, %c0_19] : memref<128x128xbf16, #tpu.memory_space<vmem>>, vector<128x128xbf16>
    %54 = arith.truncf %51 : vector<128x128xf32> to vector<128x128xbf16>
    %cst_20 = arith.constant dense<0.000000e+00> : vector<128x128xf32>
    %55 = tpu.matmul %54, %53, %cst_20 {dimension_numbers = #tpu.dot_dimension_numbers<[1], [0], [0], [1], [0, 0, 1, 1], [], []>} : vector<128x128xbf16>, vector<128x128xbf16>, vector<128x128xf32> -> vector<128x128xf32>
    %c0_21 = arith.constant 0 : index
    %c0_22 = arith.constant 0 : index
    %56 = vector.load %arg16[%c0_21, %c0_22] : memref<1x128xf32, #tpu.memory_space<vmem>>, vector<1x128xf32>
    %57 = vector.broadcast %56 : vector<1x128xf32> to vector<128x128xf32>
    %58 = arith.addf %55, %57 : vector<128x128xf32>
    "tpu.trace_start"() <{level = 10 : i32, message = "bd,md->bm"}> : () -> ()
    %cst_23 = arith.constant dense<0.000000e+00> : vector<128x64xf32>
    %59 = tpu.matmul %58, %52, %cst_23 {dimension_numbers = #tpu.dot_dimension_numbers<[1], [1], [0], [0], [0, 0, 1, 0], [], []>} : vector<128x128xf32>, vector<64x128xf32>, vector<128x64xf32> -> vector<128x64xf32>
    "tpu.trace_stop"() : () -> ()
    %cst_24 = arith.constant 0.0883883461 : f32
    %60 = vector.broadcast %cst_24 : f32 to vector<128x64xf32>
    %61 = arith.mulf %59, %60 : vector<128x64xf32>
    %cst_25 = arith.constant dense<0xFF800000> : vector<128xf32>
    %62 = vector.multi_reduction <maximumf>, %61, %cst_25 [1] : vector<128x64xf32> to vector<128xf32>
    %63 = vector.shape_cast %62 : vector<128xf32> to vector<128x1xf32>
    %64 = vector.broadcast %63 : vector<128x1xf32> to vector<128x64xf32>
    %65 = arith.subf %61, %64 : vector<128x64xf32>
    %66 = math.exp %65 : vector<128x64xf32>
    %cst_26 = arith.constant dense<0.000000e+00> : vector<128xf32>
    %67 = vector.multi_reduction <add>, %66, %cst_26 [1] : vector<128x64xf32> to vector<128xf32>
    %68 = vector.shape_cast %67 : vector<128xf32> to vector<128x1xf32>
    %69 = tpu.reciprocal %68 {approx = true} : vector<128x1xf32> -> vector<128x1xf32>
    %70 = vector.broadcast %69 : vector<128x1xf32> to vector<128x64xf32>
    %71 = arith.mulf %66, %70 : vector<128x64xf32>
    %cst_27 = arith.constant dense<0.000000e+00> : vector<128x128xf32>
    %72 = tpu.matmul %71, %52, %cst_27 {dimension_numbers = #tpu.dot_dimension_numbers<[1], [0], [0], [1], [0, 0, 1, 1], [], []>} : vector<128x64xf32>, vector<64x128xf32>, vector<128x128xf32> -> vector<128x128xf32>
    %c0_28 = arith.constant 0 : index
    %c0_29 = arith.constant 0 : index
    %73 = vector.load %arg17[%c0_28, %c0_29] : memref<32x128xf32, #tpu.memory_space<vmem>>, vector<32x128xf32>
    "tpu.trace_start"() <{level = 10 : i32, message = "bd,md->bm"}> : () -> ()
    %cst_30 = arith.constant dense<0.000000e+00> : vector<128x32xf32>
    %74 = tpu.matmul %51, %73, %cst_30 {dimension_numbers = #tpu.dot_dimension_numbers<[1], [1], [0], [0], [0, 0, 1, 0], [], []>} : vector<128x128xf32>, vector<32x128xf32>, vector<128x32xf32> -> vector<128x32xf32>
    "tpu.trace_stop"() : () -> ()
    %cst_31 = arith.constant 0.0883883461 : f32
    %75 = vector.broadcast %cst_31 : f32 to vector<128x32xf32>
    %76 = arith.mulf %74, %75 : vector<128x32xf32>
    %77 = arith.mulf %51, %51 : vector<128x128xf32>
    %cst_32 = arith.constant dense<0.000000e+00> : vector<128xf32>
    %78 = vector.multi_reduction <add>, %77, %cst_32 [1] : vector<128x128xf32> to vector<128xf32>
    %79 = vector.shape_cast %78 : vector<128xf32> to vector<128x1xf32>
    %cst_33 = arith.constant 0.0883883461 : f32
    %80 = vector.broadcast %cst_33 : f32 to vector<128x1xf32>
    %81 = arith.mulf %79, %80 : vector<128x1xf32>
    %82 = tpu.iota {dimensions = array<i32: 1>} : vector<128x32xi32>
    %c0_i32 = arith.constant 0 : i32
    %83 = vector.broadcast %c0_i32 : i32 to vector<128x32xi32>
    %84 = arith.cmpi eq, %82, %83 : vector<128x32xi32>
    %85 = vector.shape_cast %81 : vector<128x1xf32> to vector<128x1xf32>
    %86 = vector.broadcast %85 : vector<128x1xf32> to vector<128x32xf32>
    %87 = arith.select %84, %86, %76 : vector<128x32xi1>, vector<128x32xf32>
    %cst_34 = arith.constant dense<0xFF800000> : vector<128xf32>
    %88 = vector.multi_reduction <maximumf>, %87, %cst_34 [1] : vector<128x32xf32> to vector<128xf32>
    %89 = vector.shape_cast %88 : vector<128xf32> to vector<128x1xf32>
    %90 = vector.broadcast %89 : vector<128x1xf32> to vector<128x32xf32>
    %91 = arith.subf %87, %90 : vector<128x32xf32>
    %92 = math.exp %91 : vector<128x32xf32>
    %cst_35 = arith.constant dense<0.000000e+00> : vector<128xf32>
    %93 = vector.multi_reduction <add>, %92, %cst_35 [1] : vector<128x32xf32> to vector<128xf32>
    %94 = vector.shape_cast %93 : vector<128xf32> to vector<128x1xf32>
    %95 = tpu.reciprocal %94 {approx = true} : vector<128x1xf32> -> vector<128x1xf32>
    %96 = vector.broadcast %95 : vector<128x1xf32> to vector<128x32xf32>
    %97 = arith.mulf %92, %96 : vector<128x32xf32>
    %cst_36 = arith.constant 0.000000e+00 : f32
    %98 = vector.broadcast %cst_36 : f32 to vector<128x32xf32>
    %99 = arith.select %84, %98, %97 : vector<128x32xi1>, vector<128x32xf32>
    %100 = vector.extract_strided_slice %97 {offsets = [0, 0], sizes = [128, 1], strides = [1, 1]} : vector<128x32xf32> to vector<128x1xf32>
    %101 = vector.broadcast %100 : vector<128x1xf32> to vector<128x128xf32>
    %102 = arith.mulf %101, %51 : vector<128x128xf32>
    %cst_37 = arith.constant dense<0.000000e+00> : vector<128x128xf32>
    %103 = tpu.matmul %99, %73, %cst_37 {dimension_numbers = #tpu.dot_dimension_numbers<[1], [0], [0], [1], [0, 0, 1, 1], [], []>} : vector<128x32xf32>, vector<32x128xf32>, vector<128x128xf32> -> vector<128x128xf32>
    %104 = arith.addf %102, %103 : vector<128x128xf32>
    %c0_38 = arith.constant 0 : index
    %c0_39 = arith.constant 0 : index
    %105 = vector.load %arg4[%c0_38, %c0_39] : memref<128x128xbf16, #tpu.memory_space<vmem>>, vector<128x128xbf16>
    %106 = arith.truncf %51 : vector<128x128xf32> to vector<128x128xbf16>
    %cst_40 = arith.constant dense<0.000000e+00> : vector<128x128xf32>
    %107 = tpu.matmul %106, %105, %cst_40 {dimension_numbers = #tpu.dot_dimension_numbers<[1], [0], [0], [1], [0, 0, 1, 1], [], []>} : vector<128x128xbf16>, vector<128x128xbf16>, vector<128x128xf32> -> vector<128x128xf32>
    %c0_41 = arith.constant 0 : index
    %c0_42 = arith.constant 0 : index
    %108 = vector.load %arg7[%c0_41, %c0_42] : memref<1x128xf32, #tpu.memory_space<vmem>>, vector<1x128xf32>
    %109 = vector.broadcast %108 : vector<1x128xf32> to vector<128x128xf32>
    %110 = arith.addf %107, %109 : vector<128x128xf32>
    %111 = tpu.concatenate %72, %104 in 0 : vector<128x128xf32>, vector<128x128xf32> -> vector<256x128xf32>
    %c0_43 = arith.constant 0 : index
    %c0_44 = arith.constant 0 : index
    %112 = vector.load %arg5[%c0_43, %c0_44] : memref<128x256xbf16, #tpu.memory_space<vmem>>, vector<128x256xbf16>
    %113 = arith.truncf %111 : vector<256x128xf32> to vector<256x128xbf16>
    %cst_45 = arith.constant dense<0.000000e+00> : vector<256x256xf32>
    %114 = tpu.matmul %113, %112, %cst_45 {dimension_numbers = #tpu.dot_dimension_numbers<[1], [0], [0], [1], [0, 0, 1, 1], [], []>} : vector<256x128xbf16>, vector<128x256xbf16>, vector<256x256xf32> -> vector<256x256xf32>
    %c0_46 = arith.constant 0 : index
    %c0_47 = arith.constant 0 : index
    %115 = vector.load %arg8[%c0_46, %c0_47] : memref<1x256xf32, #tpu.memory_space<vmem>>, vector<1x256xf32>
    %116 = vector.broadcast %115 : vector<1x256xf32> to vector<256x256xf32>
    %117 = arith.addf %114, %116 : vector<256x256xf32>
    %118 = vector.extract_strided_slice %117 {offsets = [0, 0], sizes = [128, 128], strides = [1, 1]} : vector<256x256xf32> to vector<128x128xf32>
    %119 = vector.extract_strided_slice %117 {offsets = [0, 128], sizes = [128, 128], strides = [1, 1]} : vector<256x256xf32> to vector<128x128xf32>
    %120 = vector.extract_strided_slice %117 {offsets = [128, 0], sizes = [128, 128], strides = [1, 1]} : vector<256x256xf32> to vector<128x128xf32>
    %121 = vector.extract_strided_slice %117 {offsets = [128, 128], sizes = [128, 128], strides = [1, 1]} : vector<256x256xf32> to vector<128x128xf32>
    %122 = arith.subf %118, %120 : vector<128x128xf32>
    %123 = arith.mulf %110, %122 : vector<128x128xf32>
    %c0_48 = arith.constant 0 : index
    %c0_49 = arith.constant 0 : index
    %124 = vector.load %arg20[%c0_48, %c0_49] : memref<128x128xbf16, #tpu.memory_space<vmem>>, vector<128x128xbf16>
    %125 = arith.truncf %123 : vector<128x128xf32> to vector<128x128xbf16>
    %cst_50 = arith.constant dense<0.000000e+00> : vector<128x128xf32>
    %126 = tpu.matmul %125, %124, %cst_50 {dimension_numbers = #tpu.dot_dimension_numbers<[1], [0], [0], [1], [0, 0, 1, 1], [], []>} : vector<128x128xbf16>, vector<128x128xbf16>, vector<128x128xf32> -> vector<128x128xf32>
    %cst_51 = arith.constant 2.500000e-01 : f32
    %127 = vector.broadcast %cst_51 : f32 to vector<128x128xf32>
    %128 = arith.mulf %126, %127 : vector<128x128xf32>
    %cst_52 = arith.constant 0.000000e+00 : f32
    %129 = vector.broadcast %cst_52 : f32 to vector<128x128xf32>
    %130 = arith.subf %129, %128 : vector<128x128xf32>
    %131 = math.exp %130 : vector<128x128xf32>
    %cst_53 = arith.constant 1.000000e+00 : f32
    %132 = vector.broadcast %cst_53 : f32 to vector<128x128xf32>
    %133 = arith.addf %132, %131 : vector<128x128xf32>
    %134 = tpu.reciprocal %133 {approx = true} : vector<128x128xf32> -> vector<128x128xf32>
    %135 = arith.subf %119, %121 : vector<128x128xf32>
    %136 = arith.mulf %134, %135 : vector<128x128xf32>
    %137 = arith.addf %121, %136 : vector<128x128xf32>
    %c0_54 = arith.constant 0 : index
    %c0_55 = arith.constant 0 : index
    %138 = vector.load %arg6[%c0_54, %c0_55] : memref<128x128xbf16, #tpu.memory_space<vmem>>, vector<128x128xbf16>
    %139 = arith.truncf %137 : vector<128x128xf32> to vector<128x128xbf16>
    %cst_56 = arith.constant dense<0.000000e+00> : vector<128x128xf32>
    %140 = tpu.matmul %139, %138, %cst_56 {dimension_numbers = #tpu.dot_dimension_numbers<[1], [0], [0], [1], [0, 0, 1, 1], [], []>} : vector<128x128xbf16>, vector<128x128xbf16>, vector<128x128xf32> -> vector<128x128xf32>
    %c0_57 = arith.constant 0 : index
    %c0_58 = arith.constant 0 : index
    %141 = vector.load %arg9[%c0_57, %c0_58] : memref<1x128xf32, #tpu.memory_space<vmem>>, vector<1x128xf32>
    %142 = vector.broadcast %141 : vector<1x128xf32> to vector<128x128xf32>
    %143 = arith.addf %140, %142 : vector<128x128xf32>
    %144 = arith.addf %51, %143 : vector<128x128xf32>
    %145 = vector.extract_strided_slice %1 {offsets = [1, 0], sizes = [1, 128], strides = [1, 1]} : vector<3x128xf32> to vector<1x128xf32>
    %146 = vector.shape_cast %145 : vector<1x128xf32> to vector<128xf32>
    %147 = vector.extract_strided_slice %2 {offsets = [1, 0], sizes = [1, 128], strides = [1, 1]} : vector<3x128xf32> to vector<1x128xf32>
    %148 = vector.shape_cast %147 : vector<1x128xf32> to vector<128xf32>
    %cst_59 = arith.constant dense<0.000000e+00> : vector<128xf32>
    %149 = vector.multi_reduction <add>, %144, %cst_59 [1] : vector<128x128xf32> to vector<128xf32>
    %150 = vector.shape_cast %149 : vector<128xf32> to vector<128x1xf32>
    %cst_60 = arith.constant 1.280000e+02 : f32
    %151 = vector.broadcast %cst_60 : f32 to vector<128x1xf32>
    %152 = arith.divf %150, %151 : vector<128x1xf32>
    %153 = vector.broadcast %152 : vector<128x1xf32> to vector<128x128xf32>
    %154 = arith.subf %144, %153 : vector<128x128xf32>
    %155 = arith.mulf %154, %154 : vector<128x128xf32>
    %cst_61 = arith.constant dense<0.000000e+00> : vector<128xf32>
    %156 = vector.multi_reduction <add>, %155, %cst_61 [1] : vector<128x128xf32> to vector<128xf32>
    %157 = vector.shape_cast %156 : vector<128xf32> to vector<128x1xf32>
    %cst_62 = arith.constant 1.280000e+02 : f32
    %158 = vector.broadcast %cst_62 : f32 to vector<128x1xf32>
    %159 = arith.divf %157, %158 : vector<128x1xf32>
    %160 = vector.broadcast %152 : vector<128x1xf32> to vector<128x128xf32>
    %161 = arith.subf %144, %160 : vector<128x128xf32>
    %cst_63 = arith.constant 9.99999974E-6 : f32
    %162 = vector.broadcast %cst_63 : f32 to vector<128x1xf32>
    %163 = arith.addf %159, %162 : vector<128x1xf32>
    %164 = math.rsqrt %163 : vector<128x1xf32>
    %165 = vector.broadcast %164 : vector<128x1xf32> to vector<128x128xf32>
    %166 = arith.mulf %161, %165 : vector<128x128xf32>
    %167 = vector.shape_cast %146 : vector<128xf32> to vector<1x128xf32>
    %168 = vector.broadcast %167 : vector<1x128xf32> to vector<128x128xf32>
    %169 = arith.mulf %166, %168 : vector<128x128xf32>
    %170 = vector.shape_cast %148 : vector<128xf32> to vector<1x128xf32>
    %171 = vector.broadcast %170 : vector<1x128xf32> to vector<128x128xf32>
    %172 = arith.addf %169, %171 : vector<128x128xf32>
    %c0_64 = arith.constant 0 : index
    %c0_65 = arith.constant 0 : index
    %173 = vector.load %arg10[%c0_64, %c0_65] : memref<128x384xbf16, #tpu.memory_space<vmem>>, vector<128x384xbf16>
    %174 = arith.truncf %172 : vector<128x128xf32> to vector<128x128xbf16>
    %cst_66 = arith.constant dense<0.000000e+00> : vector<128x384xf32>
    %175 = tpu.matmul %174, %173, %cst_66 {dimension_numbers = #tpu.dot_dimension_numbers<[1], [0], [0], [1], [0, 0, 1, 1], [], []>} : vector<128x128xbf16>, vector<128x384xbf16>, vector<128x384xf32> -> vector<128x384xf32>
    %c0_67 = arith.constant 0 : index
    %c0_68 = arith.constant 0 : index
    %176 = vector.load %arg12[%c0_67, %c0_68] : memref<1x384xf32, #tpu.memory_space<vmem>>, vector<1x384xf32>
    %177 = vector.broadcast %176 : vector<1x384xf32> to vector<128x384xf32>
    %178 = arith.addf %175, %177 : vector<128x384xf32>
    %179 = vector.extract_strided_slice %178 {offsets = [0, 0], sizes = [128, 128], strides = [1, 1]} : vector<128x384xf32> to vector<128x128xf32>
    %180 = vector.extract_strided_slice %178 {offsets = [0, 128], sizes = [128, 128], strides = [1, 1]} : vector<128x384xf32> to vector<128x128xf32>
    %181 = vector.extract_strided_slice %178 {offsets = [0, 256], sizes = [128, 128], strides = [1, 1]} : vector<128x384xf32> to vector<128x128xf32>
    %cst_69 = arith.constant 0.000000e+00 : f32
    %182 = vector.broadcast %cst_69 : f32 to vector<128x128xf32>
    %183 = arith.cmpf ogt, %179, %182 : vector<128x128xf32>
    %cst_70 = arith.constant 1.000000e+00 : f32
    %184 = vector.broadcast %cst_70 : f32 to vector<128x128xf32>
    %185 = arith.addf %179, %184 : vector<128x128xf32>
    %cst_71 = arith.constant 0.000000e+00 : f32
    %186 = vector.broadcast %cst_71 : f32 to vector<128x128xf32>
    %187 = arith.minimumf %179, %186 : vector<128x128xf32>
    %188 = math.exp %187 : vector<128x128xf32>
    %189 = arith.select %183, %185, %188 : vector<128x128xi1>, vector<128x128xf32>
    %cst_72 = arith.constant 0.000000e+00 : f32
    %190 = vector.broadcast %cst_72 : f32 to vector<128x128xf32>
    %191 = arith.cmpf ogt, %180, %190 : vector<128x128xf32>
    %cst_73 = arith.constant 1.000000e+00 : f32
    %192 = vector.broadcast %cst_73 : f32 to vector<128x128xf32>
    %193 = arith.addf %180, %192 : vector<128x128xf32>
    %cst_74 = arith.constant 0.000000e+00 : f32
    %194 = vector.broadcast %cst_74 : f32 to vector<128x128xf32>
    %195 = arith.minimumf %180, %194 : vector<128x128xf32>
    %196 = math.exp %195 : vector<128x128xf32>
    %197 = arith.select %191, %193, %196 : vector<128x128xi1>, vector<128x128xf32>
    %198 = arith.mulf %189, %197 : vector<128x128xf32>
    %cst_75 = arith.constant dense<0.000000e+00> : vector<128xf32>
    %199 = vector.multi_reduction <add>, %198, %cst_75 [1] : vector<128x128xf32> to vector<128xf32>
    %200 = vector.shape_cast %199 : vector<128xf32> to vector<128x1xf32>
    %201 = vector.broadcast %200 : vector<128x1xf32> to vector<128x128xf32>
    %202 = arith.mulf %201, %181 : vector<128x128xf32>
    %cst_76 = arith.constant 9.99999997E-7 : f32
    %203 = vector.broadcast %cst_76 : f32 to vector<128x1xf32>
    %204 = arith.addf %200, %203 : vector<128x1xf32>
    %205 = tpu.reciprocal %204 {approx = true} : vector<128x1xf32> -> vector<128x1xf32>
    %206 = vector.broadcast %205 : vector<128x1xf32> to vector<128x128xf32>
    %207 = arith.mulf %202, %206 : vector<128x128xf32>
    %c0_77 = arith.constant 0 : index
    %c0_78 = arith.constant 0 : index
    %208 = vector.load %arg11[%c0_77, %c0_78] : memref<128x128xbf16, #tpu.memory_space<vmem>>, vector<128x128xbf16>
    %209 = arith.truncf %207 : vector<128x128xf32> to vector<128x128xbf16>
    %cst_79 = arith.constant dense<0.000000e+00> : vector<128x128xf32>
    %210 = tpu.matmul %209, %208, %cst_79 {dimension_numbers = #tpu.dot_dimension_numbers<[1], [0], [0], [1], [0, 0, 1, 1], [], []>} : vector<128x128xbf16>, vector<128x128xbf16>, vector<128x128xf32> -> vector<128x128xf32>
    %c0_80 = arith.constant 0 : index
    %c0_81 = arith.constant 0 : index
    %211 = vector.load %arg13[%c0_80, %c0_81] : memref<1x128xf32, #tpu.memory_space<vmem>>, vector<1x128xf32>
    %212 = vector.broadcast %211 : vector<1x128xf32> to vector<128x128xf32>
    %213 = arith.addf %210, %212 : vector<128x128xf32>
    %214 = arith.addf %172, %213 : vector<128x128xf32>
    %215 = vector.extract_strided_slice %1 {offsets = [2, 0], sizes = [1, 128], strides = [1, 1]} : vector<3x128xf32> to vector<1x128xf32>
    %216 = vector.shape_cast %215 : vector<1x128xf32> to vector<128xf32>
    %217 = vector.extract_strided_slice %2 {offsets = [2, 0], sizes = [1, 128], strides = [1, 1]} : vector<3x128xf32> to vector<1x128xf32>
    %218 = vector.shape_cast %217 : vector<1x128xf32> to vector<128xf32>
    %cst_82 = arith.constant dense<0.000000e+00> : vector<128xf32>
    %219 = vector.multi_reduction <add>, %214, %cst_82 [1] : vector<128x128xf32> to vector<128xf32>
    %220 = vector.shape_cast %219 : vector<128xf32> to vector<128x1xf32>
    %cst_83 = arith.constant 1.280000e+02 : f32
    %221 = vector.broadcast %cst_83 : f32 to vector<128x1xf32>
    %222 = arith.divf %220, %221 : vector<128x1xf32>
    %223 = vector.broadcast %222 : vector<128x1xf32> to vector<128x128xf32>
    %224 = arith.subf %214, %223 : vector<128x128xf32>
    %225 = arith.mulf %224, %224 : vector<128x128xf32>
    %cst_84 = arith.constant dense<0.000000e+00> : vector<128xf32>
    %226 = vector.multi_reduction <add>, %225, %cst_84 [1] : vector<128x128xf32> to vector<128xf32>
    %227 = vector.shape_cast %226 : vector<128xf32> to vector<128x1xf32>
    %cst_85 = arith.constant 1.280000e+02 : f32
    %228 = vector.broadcast %cst_85 : f32 to vector<128x1xf32>
    %229 = arith.divf %227, %228 : vector<128x1xf32>
    %230 = vector.broadcast %222 : vector<128x1xf32> to vector<128x128xf32>
    %231 = arith.subf %214, %230 : vector<128x128xf32>
    %cst_86 = arith.constant 9.99999974E-6 : f32
    %232 = vector.broadcast %cst_86 : f32 to vector<128x1xf32>
    %233 = arith.addf %229, %232 : vector<128x1xf32>
    %234 = math.rsqrt %233 : vector<128x1xf32>
    %235 = vector.broadcast %234 : vector<128x1xf32> to vector<128x128xf32>
    %236 = arith.mulf %231, %235 : vector<128x128xf32>
    %237 = vector.shape_cast %216 : vector<128xf32> to vector<1x128xf32>
    %238 = vector.broadcast %237 : vector<1x128xf32> to vector<128x128xf32>
    %239 = arith.mulf %236, %238 : vector<128x128xf32>
    %240 = vector.shape_cast %218 : vector<128xf32> to vector<1x128xf32>
    %241 = vector.broadcast %240 : vector<1x128xf32> to vector<128x128xf32>
    %242 = arith.addf %239, %241 : vector<128x128xf32>
    %c0_87 = arith.constant 0 : index
    %c0_88 = arith.constant 0 : index
    %243 = vector.load %arg21[%c0_87, %c0_88] : memref<128x128xf32, #tpu.memory_space<vmem>>, vector<128x128xf32>
    tpu.vector_store %arg21[%c0_87, %c0_88], %242 {strides = array<i32>} : memref<128x128xf32, #tpu.memory_space<vmem>>, vector<128x128xf32>,
    return
  }
  func.func @transform_0(%arg0: i32) -> (i32, i32) {
    %c0_i32 = arith.constant 0 : i32
    %c0_i32_0 = arith.constant 0 : i32
    return %arg0, %c0_i32 : i32, i32
  }
  func.func @transform_1(%arg0: i32) -> (i32, i32, i32) {
    %c0_i32 = arith.constant 0 : i32
    %c0_i32_0 = arith.constant 0 : i32
    %c0_i32_1 = arith.constant 0 : i32
    %c0_i32_2 = arith.constant 0 : i32
    return %c0_i32, %c0_i32_0, %c0_i32_1 : i32, i32, i32
  }
  func.func @transform_2(%arg0: i32) -> (i32, i32) {
    %c0_i32 = arith.constant 0 : i32
    %c0_i32_0 = arith.constant 0 : i32
    %c0_i32_1 = arith.constant 0 : i32
    return %c0_i32, %c0_i32_0 : i32, i32
  }
  func.func @transform_3(%arg0: i32) -> (i32, i32) {
    %c0_i32 = arith.constant 0 : i32
    %c0_i32_0 = arith.constant 0 : i32
    %c0_i32_1 = arith.constant 0 : i32
    return %c0_i32, %c0_i32_0 : i32, i32
  }
  func.func @transform_4(%arg0: i32) -> (i32, i32) {
    %c0_i32 = arith.constant 0 : i32
    %c0_i32_0 = arith.constant 0 : i32
    %c0_i32_1 = arith.constant 0 : i32
    return %c0_i32, %c0_i32_0 : i32, i32
  }
  func.func @transform_5(%arg0: i32) -> (i32, i32) {
    %c0_i32 = arith.constant 0 : i32
    %c0_i32_0 = arith.constant 0 : i32
    %c0_i32_1 = arith.constant 0 : i32
    return %c0_i32, %c0_i32_0 : i32, i32
  }
  func.func @transform_6(%arg0: i32) -> (i32, i32) {
    %c0_i32 = arith.constant 0 : i32
    %c0_i32_0 = arith.constant 0 : i32
    %c0_i32_1 = arith.constant 0 : i32
    return %c0_i32, %c0_i32_0 : i32, i32
  }
  func.func @transform_7(%arg0: i32) -> (i32, i32) {
    %c0_i32 = arith.constant 0 : i32
    %c0_i32_0 = arith.constant 0 : i32
    %c0_i32_1 = arith.constant 0 : i32
    return %c0_i32, %c0_i32_0 : i32, i32
  }
  func.func @transform_8(%arg0: i32) -> (i32, i32) {
    %c0_i32 = arith.constant 0 : i32
    %c0_i32_0 = arith.constant 0 : i32
    %c0_i32_1 = arith.constant 0 : i32
    return %c0_i32, %c0_i32_0 : i32, i32
  }
  func.func @transform_9(%arg0: i32) -> (i32, i32) {
    %c0_i32 = arith.constant 0 : i32
    %c0_i32_0 = arith.constant 0 : i32
    %c0_i32_1 = arith.constant 0 : i32
    return %c0_i32, %c0_i32_0 : i32, i32
  }
  func.func @transform_10(%arg0: i32) -> (i32, i32) {
    %c0_i32 = arith.constant 0 : i32
    %c0_i32_0 = arith.constant 0 : i32
    %c0_i32_1 = arith.constant 0 : i32
    return %c0_i32, %c0_i32_0 : i32, i32
  }
  func.func @transform_11(%arg0: i32) -> (i32, i32) {
    %c0_i32 = arith.constant 0 : i32
    %c0_i32_0 = arith.constant 0 : i32
    %c0_i32_1 = arith.constant 0 : i32
    return %c0_i32, %c0_i32_0 : i32, i32
  }
  func.func @transform_12(%arg0: i32) -> (i32, i32) {
    %c0_i32 = arith.constant 0 : i32
    %c0_i32_0 = arith.constant 0 : i32
    %c0_i32_1 = arith.constant 0 : i32
    return %c0_i32, %c0_i32_0 : i32, i32
  }
  func.func @transform_13(%arg0: i32) -> (i32, i32) {
    %c0_i32 = arith.constant 0 : i32
    %c0_i32_0 = arith.constant 0 : i32
    %c0_i32_1 = arith.constant 0 : i32
    return %c0_i32, %c0_i32_0 : i32, i32
  }
  func.func @transform_14(%arg0: i32) -> (i32, i32) {
    %c0_i32 = arith.constant 0 : i32
    %c0_i32_0 = arith.constant 0 : i32
    %c0_i32_1 = arith.constant 0 : i32
    return %c0_i32, %c0_i32_0 : i32, i32
  }
  func.func @transform_15(%arg0: i32) -> (i32, i32) {
    %c0_i32 = arith.constant 0 : i32
    %c0_i32_0 = arith.constant 0 : i32
    %c0_i32_1 = arith.constant 0 : i32
    return %c0_i32, %c0_i32_0 : i32, i32
  }
  func.func @transform_16(%arg0: i32) -> (i32, i32) {
    %c0_i32 = arith.constant 0 : i32
    %c0_i32_0 = arith.constant 0 : i32
    %c0_i32_1 = arith.constant 0 : i32
    return %c0_i32, %c0_i32_0 : i32, i32
  }
  func.func @transform_17(%arg0: i32) -> (i32, i32) {
    %c0_i32 = arith.constant 0 : i32
    %c0_i32_0 = arith.constant 0 : i32
    %c0_i32_1 = arith.constant 0 : i32
    return %c0_i32, %c0_i32_0 : i32, i32
  }
  func.func @transform_18(%arg0: i32) -> (i32, i32) {
    %c0_i32 = arith.constant 0 : i32
    %c0_i32_0 = arith.constant 0 : i32
    %c0_i32_1 = arith.constant 0 : i32
    return %c0_i32, %c0_i32_0 : i32, i32
  }
  func.func @transform_19(%arg0: i32) -> (i32, i32) {
    %c0_i32 = arith.constant 0 : i32
    %c0_i32_0 = arith.constant 0 : i32
    %c0_i32_1 = arith.constant 0 : i32
    return %c0_i32, %c0_i32_0 : i32, i32
  }
  func.func @transform_20(%arg0: i32) -> (i32, i32) {
    %c0_i32 = arith.constant 0 : i32
    %c0_i32_0 = arith.constant 0 : i32
    return %arg0, %c0_i32 : i32, i32
  }
}

</mosaic_0001>

<llo_original>
// kernel: tpu_custom_call.1
$region0: #{tpu_custom_call.1}
  #allocation0 [shape = 'u32[]', space=smem, size = 0x4, offset = 0x4, fixed_abs, tag = 'smem constant byte address 0x4 - core index']
  #allocation1 [shape = 'u32[72,128]{1,0:T(1,128)}', space=vmem, size = 0x9000, scoped, tag = 'internal scratch']
  %s0 = inlined_call_operand.hbm [shape: f32[256,128], index: 0, kind: input, shape index: {}]
  %s1 = inlined_call_operand.hbm [shape: bf16[2,128,128], index: 1, kind: input, shape index: {}]
  %s2 = inlined_call_operand.hbm [shape: f32[2,128], index: 2, kind: input, shape index: {}]
  %s3 = inlined_call_operand.hbm [shape: bf16[128,128], index: 3, kind: input, shape index: {}]
  %s4 = inlined_call_operand.hbm [shape: bf16[128,256], index: 4, kind: input, shape index: {}]
  %s5 = inlined_call_operand.hbm [shape: bf16[128,128], index: 5, kind: input, shape index: {}]
  %s6 = inlined_call_operand.hbm [shape: f32[1,128], index: 6, kind: input, shape index: {}]
  %s7 = inlined_call_operand.hbm [shape: f32[1,256], index: 7, kind: input, shape index: {}]
  %s8 = inlined_call_operand.hbm [shape: f32[1,128], index: 8, kind: input, shape index: {}]
  %s9 = inlined_call_operand.hbm [shape: bf16[128,384], index: 9, kind: input, shape index: {}]
  %s10 = inlined_call_operand.hbm [shape: bf16[128,128], index: 10, kind: input, shape index: {}]
  %s11 = inlined_call_operand.hbm [shape: f32[1,384], index: 11, kind: input, shape index: {}]
  %s12 = inlined_call_operand.vmem [shape: f32[1,128], index: 12, kind: input, shape index: {}]
  %s13 = inlined_call_operand.hbm [shape: f32[64,128], index: 13, kind: input, shape index: {}]
  %s14 = inlined_call_operand.hbm [shape: bf16[128,128], index: 14, kind: input, shape index: {}]
  %s15 = inlined_call_operand.vmem [shape: f32[1,128], index: 15, kind: input, shape index: {}]
  %s16 = inlined_call_operand.hbm [shape: f32[32,128], index: 16, kind: input, shape index: {}]
  %s17 = inlined_call_operand.vmem [shape: f32[3,128], index: 17, kind: input, shape index: {}]
  %s18 = inlined_call_operand.vmem [shape: f32[3,128], index: 18, kind: input, shape index: {}]
  %s19 = inlined_call_operand.hbm [shape: bf16[128,128], index: 19, kind: input, shape index: {}]
  %s20 = inlined_call_operand.hbm [shape: f32[256,128], index: 20, kind: output, shape index: {}]
  %s21 = sld [smem:[#allocation0]]
  $region177: #{tpu_custom_call.1} parent=0
    _
  %s23 = ssub.s32 1, %s21
  %s24 = scalar_select 0, %s23, %s21
  $region1: #{tpu_custom_call.1} parent=0
    #allocation2 [shape = 'u8[131072]{0}', space=vmem, size = 0x20000, scoped, tag = 'input window, operand 0']
    #allocation3 [shape = 's32[2]{0}', space=sflag, size = 0x8, scoped, tag = 'scoped memory for tpu_custom_call.1']
    #allocation4 [shape = 's32[2]{0}', space=sflag, size = 0x8, scoped, tag = 'scoped memory for tpu_custom_call.1']
    #allocation5 [shape = 'u8[65536]{0}', space=vmem, size = 0x10000, scoped, tag = 'input window, operand 1, single buffered']
    #allocation6 [shape = 's32[1]{0}', space=sflag, size = 0x4, scoped, tag = 'scoped memory for tpu_custom_call.1']
    #allocation7 [shape = 'u8[1024]{0}', space=vmem, size = 0x400, scoped, tag = 'input window, operand 2, single buffered']
    #allocation8 [shape = 'u8[32768]{0}', space=vmem, size = 0x8000, scoped, tag = 'input window, operand 3, single buffered']
    #allocation9 [shape = 's32[1]{0}', space=sflag, size = 0x4, scoped, tag = 'scoped memory for tpu_custom_call.1']
    #allocation10 [shape = 'u8[65536]{0}', space=vmem, size = 0x10000, scoped, tag = 'input window, operand 4, single buffered']
    #allocation11 [shape = 'u8[32768]{0}', space=vmem, size = 0x8000, scoped, tag = 'input window, operand 5, single buffered']
    #allocation12 [shape = 's32[1]{0}', space=sflag, size = 0x4, scoped, tag = 'scoped memory for tpu_custom_call.1']
    #allocation13 [shape = 'u8[512]{0}', space=vmem, size = 0x400, scoped, tag = 'input window, operand 6, single buffered']
    #allocation14 [shape = 'u8[1024]{0}', space=vmem, size = 0x400, scoped, tag = 'input window, operand 7, single buffered']
    #allocation15 [shape = 's32[1]{0}', space=sflag, size = 0x4, scoped, tag = 'scoped memory for tpu_custom_call.1']
    #allocation16 [shape = 'u8[512]{0}', space=vmem, size = 0x400, scoped, tag = 'input window, operand 8, single buffered']
    #allocation17 [shape = 'u8[98304]{0}', space=vmem, size = 0x18000, scoped, tag = 'input window, operand 9, single buffered']
    #allocation18 [shape = 's32[1]{0}', space=sflag, size = 0x4, scoped, tag = 'scoped memory for tpu_custom_call.1']
    #allocation19 [shape = 'u8[32768]{0}', space=vmem, size = 0x8000, scoped, tag = 'input window, operand 10, single buffered']
    #allocation20 [shape = 'u8[1536]{0}', space=vmem, size = 0x800, scoped, tag = 'input window, operand 11, single buffered']
    #allocation21 [shape = 's32[1]{0}', space=sflag, size = 0x4, scoped, tag = 'scoped memory for tpu_custom_call.1']
    #allocation22 [shape = 'u8[32768]{0}', space=vmem, size = 0x8000, scoped, tag = 'input window, operand 13, single buffered']
    #allocation23 [shape = 'u8[32768]{0}', space=vmem, size = 0x8000, scoped, tag = 'input window, operand 14, single buffered']
    #allocation24 [shape = 's32[1]{0}', space=sflag, size = 0x4, scoped, tag = 'scoped memory for tpu_custom_call.1']
    #allocation25 [shape = 'u8[16384]{0}', space=vmem, size = 0x4000, scoped, tag = 'input window, operand 16, single buffered']
    #allocation26 [shape = 'u8[32768]{0}', space=vmem, size = 0x8000, scoped, tag = 'input window, operand 19, single buffered']
    #allocation27 [shape = 's32[1]{0}', space=sflag, size = 0x4, scoped, tag = 'scoped memory for tpu_custom_call.1']
    #allocation28 [shape = 'u8[131072]{0}', space=vmem, size = 0x20000, scoped, tag = 'output window, operand 0']
    %25 = vsyncpa [#allocation3], 0
    %s26 = scalar_lea.sflag [#allocation3], 1
    %27 = vsyncpa %s26, 0
    %28 = vsyncpa [#allocation6], 0
    %29 = vsyncpa [#allocation9], 0
    %30 = vsyncpa [#allocation12], 0
    %31 = vsyncpa [#allocation15], 0
    %32 = vsyncpa [#allocation18], 0
    %33 = vsyncpa [#allocation21], 0
    %34 = vsyncpa [#allocation24], 0
    %35 = vsyncpa [#allocation27], 0
    %36 = vsyncpa [#allocation4], 0
    %s37 = scalar_lea.sflag [#allocation4], 1
    %38 = vsyncpa %s37, 0
    loop: start=0, step=1, limit=4
    $region2: #{tpu_custom_call.1} parent=1 // loop_pre_header
      _
    $region3: #{tpu_custom_call.1} parent=1 // loop_header
      %s40 = sphi 0, %s44
      %p41 = scmp.ge.s32.totalorder %s40, 4
      %s50 = sphi 0, %s52
      %s53 = sphi 0, %s50
      %s54 = sphi 0, %s53
      %s70 = sphi 0, %s54
      %s74 = sphi 0, %s74
      %s76 = sphi 0, %s74
      %s77 = sphi 0, %s76
      %s91 = sphi 0, %s77
      %s95 = sphi 0, %s95
      %s97 = sphi 0, %s95
      %s98 = sphi 0, %s97
      %s112 = sphi 0, %s98
      %s116 = sphi 0, %s116
      %s118 = sphi 0, %s116
      %s119 = sphi 0, %s118
      %s133 = sphi 0, %s119
      %s137 = sphi 0, %s137
      %s139 = sphi 0, %s137
      %s140 = sphi 0, %s139
      %s154 = sphi 0, %s140
      %s158 = sphi 0, %s158
      %s160 = sphi 0, %s158
      %s161 = sphi 0, %s160
      %s175 = sphi 0, %s161
      %s179 = sphi 0, %s179
      %s181 = sphi 0, %s179
      %s182 = sphi 0, %s181
      %s196 = sphi 0, %s182
      %s200 = sphi 0, %s200
      %s202 = sphi 0, %s200
      %s203 = sphi 0, %s202
      %s217 = sphi 0, %s203
      %s221 = sphi 0, %s221
      %s223 = sphi 0, %s221
      %s224 = sphi 0, %s223
      %s238 = sphi 0, %s224
      %s242 = sphi 0, %s242
      %s244 = sphi 0, %s242
      %s245 = sphi 0, %s244
      %s259 = sphi 0, %s245
      %s263 = sphi 0, %s263
      %s265 = sphi 0, %s263
      %s266 = sphi 0, %s265
      %s280 = sphi 0, %s266
      %s284 = sphi 0, %s284
      %s286 = sphi 0, %s284
      %s287 = sphi 0, %s286
      %s301 = sphi 0, %s287
      %s305 = sphi 0, %s305
      %s307 = sphi 0, %s305
      %s308 = sphi 0, %s307
      %s322 = sphi 0, %s308
      %s326 = sphi 0, %s326
      %s328 = sphi 0, %s326
      %s329 = sphi 0, %s328
      %s343 = sphi 0, %s329
      %s347 = sphi 0, %s347
      %s349 = sphi 0, %s347
      %s350 = sphi 0, %s349
      %s364 = sphi 0, %s350
      %s368 = sphi 0, %s368
      %s370 = sphi 0, %s368
      %s371 = sphi 0, %s370
      %s385 = sphi 0, %s371
      %s389 = sphi 0, %s389
      %s391 = sphi 0, %s389
      %s392 = sphi 0, %s391
      %s406 = sphi 0, %s392
      %s410 = sphi 0, %s410
      %s412 = sphi 0, %s410
      %s413 = sphi 0, %s412
      %s427 = sphi 0, %s413
      %s431 = sphi 0, %s431
      %s433 = sphi 0, %s431
      %s434 = sphi 0, %s433
      %s448 = sphi 0, %s434
      %s452 = sphi 0, %s452
      %s454 = sphi 0, %s452
      %s455 = sphi 0, %s454
      %s469 = sphi 0, %s455
      %s475 = sphi 0, %s477
      %s478 = sphi 0, %s475
      %s479 = sphi 0, %s478
      %s495 = sphi 0, %s479
    $region4: #{tpu_custom_call.1} parent=1 // loop_header_branch
      %43 = sbr.rel (%p41) target = $region8
    $region5: #{tpu_custom_call.1} parent=1 // loop_body
      %s45 = ssub.s32 %s40, 1
      %s46 = ssub.s32 %s40, 2
      %s47 = sadd.s32 %s40, 1
      %s48 = ssub.s32 %s40, %s47
      %p49 = scmp.eq.s32.totalorder %s48, 0
      %s51 = sadd.s32 %s50, 1
      %s52 = scalar_select %p49, %s50, %s51
      %p55 = pneg %p49
      %p56 = scmp.eq.s32.totalorder %s40, 1
      %p57 = por %p55, %p56
      %p58 = scmp.ne.s32.totalorder %s50, %s53
      %p59 = scmp.eq.s32.totalorder %s40, 0
      %p60 = por %p58, %p59
      %p61 = scmp.ne.s32.totalorder %s50, %s53
      %p62 = scmp.eq.s32.totalorder %s45, 1
      %p63 = por %p61, %p62
      %p64 = scmp.ne.s32.totalorder %s53, %s54
      %p65 = scmp.eq.s32.totalorder %s45, 0
      %p66 = por %p64, %p65
      %p67 = scmp.ne.s32.totalorder %s53, %s54
      %p68 = scmp.eq.s32.totalorder %s46, 1
      %p69 = por %p67, %p68
      %p71 = scmp.ne.s32.totalorder %s54, %s70
      %p72 = scmp.eq.s32.totalorder %s46, 0
      %p73 = por %p71, %p72
      %s75 = sadd.s32 %s74, 1
      %p78 = scmp.eq.s32.totalorder %s40, 1
      %p79 = scmp.ne.s32.totalorder %s74, %s76
      %p80 = scmp.eq.s32.totalorder %s40, 0
      %p81 = por %p79, %p80
      %p82 = scmp.ne.s32.totalorder %s74, %s76
      %p83 = scmp.eq.s32.totalorder %s45, 1
      %p84 = por %p82, %p83
      %p85 = scmp.ne.s32.totalorder %s76, %s77
      %p86 = scmp.eq.s32.totalorder %s45, 0
      %p87 = por %p85, %p86
      %p88 = scmp.ne.s32.totalorder %s76, %s77
      %p89 = scmp.eq.s32.totalorder %s46, 1
      %p90 = por %p88, %p89
      %p92 = scmp.ne.s32.totalorder %s77, %s91
      %p93 = scmp.eq.s32.totalorder %s46, 0
      %p94 = por %p92, %p93
      %s96 = sadd.s32 %s95, 1
      %p99 = scmp.eq.s32.totalorder %s40, 1
      %p100 = scmp.ne.s32.totalorder %s95, %s97
      %p101 = scmp.eq.s32.totalorder %s40, 0
      %p102 = por %p100, %p101
      %p103 = scmp.ne.s32.totalorder %s95, %s97
      %p104 = scmp.eq.s32.totalorder %s45, 1
      %p105 = por %p103, %p104
      %p106 = scmp.ne.s32.totalorder %s97, %s98
      %p107 = scmp.eq.s32.totalorder %s45, 0
      %p108 = por %p106, %p107
      %p109 = scmp.ne.s32.totalorder %s97, %s98
      %p110 = scmp.eq.s32.totalorder %s46, 1
      %p111 = por %p109, %p110
      %p113 = scmp.ne.s32.totalorder %s98, %s112
      %p114 = scmp.eq.s32.totalorder %s46, 0
      %p115 = por %p113, %p114
      %s117 = sadd.s32 %s116, 1
      %p120 = scmp.eq.s32.totalorder %s40, 1
      %p121 = scmp.ne.s32.totalorder %s116, %s118
      %p122 = scmp.eq.s32.totalorder %s40, 0
      %p123 = por %p121, %p122
      %p124 = scmp.ne.s32.totalorder %s116, %s118
      %p125 = scmp.eq.s32.totalorder %s45, 1
      %p126 = por %p124, %p125
      %p127 = scmp.ne.s32.totalorder %s118, %s119
      %p128 = scmp.eq.s32.totalorder %s45, 0
      %p129 = por %p127, %p128
      %p130 = scmp.ne.s32.totalorder %s118, %s119
      %p131 = scmp.eq.s32.totalorder %s46, 1
      %p132 = por %p130, %p131
      %p134 = scmp.ne.s32.totalorder %s119, %s133
      %p135 = scmp.eq.s32.totalorder %s46, 0
      %p136 = por %p134, %p135
      %s138 = sadd.s32 %s137, 1
      %p141 = scmp.eq.s32.totalorder %s40, 1
      %p142 = scmp.ne.s32.totalorder %s137, %s139
      %p143 = scmp.eq.s32.totalorder %s40, 0
      %p144 = por %p142, %p143
      %p145 = scmp.ne.s32.totalorder %s137, %s139
      %p146 = scmp.eq.s32.totalorder %s45, 1
      %p147 = por %p145, %p146
      %p148 = scmp.ne.s32.totalorder %s139, %s140
      %p149 = scmp.eq.s32.totalorder %s45, 0
      %p150 = por %p148, %p149
      %p151 = scmp.ne.s32.totalorder %s139, %s140
      %p152 = scmp.eq.s32.totalorder %s46, 1
      %p153 = por %p151, %p152
      %p155 = scmp.ne.s32.totalorder %s140, %s154
      %p156 = scmp.eq.s32.totalorder %s46, 0
      %p157 = por %p155, %p156
      %s159 = sadd.s32 %s158, 1
      %p162 = scmp.eq.s32.totalorder %s40, 1
      %p163 = scmp.ne.s32.totalorder %s158, %s160
      %p164 = scmp.eq.s32.totalorder %s40, 0
      %p165 = por %p163, %p164
      %p166 = scmp.ne.s32.totalorder %s158, %s160
      %p167 = scmp.eq.s32.totalorder %s45, 1
      %p168 = por %p166, %p167
      %p169 = scmp.ne.s32.totalorder %s160, %s161
      %p170 = scmp.eq.s32.totalorder %s45, 0
      %p171 = por %p169, %p170
      %p172 = scmp.ne.s32.totalorder %s160, %s161
      %p173 = scmp.eq.s32.totalorder %s46, 1
      %p174 = por %p172, %p173
      %p176 = scmp.ne.s32.totalorder %s161, %s175
      %p177 = scmp.eq.s32.totalorder %s46, 0
      %p178 = por %p176, %p177
      %s180 = sadd.s32 %s179, 1
      %p183 = scmp.eq.s32.totalorder %s40, 1
      %p184 = scmp.ne.s32.totalorder %s179, %s181
      %p185 = scmp.eq.s32.totalorder %s40, 0
      %p186 = por %p184, %p185
      %p187 = scmp.ne.s32.totalorder %s179, %s181
      %p188 = scmp.eq.s32.totalorder %s45, 1
      %p189 = por %p187, %p188
      %p190 = scmp.ne.s32.totalorder %s181, %s182
      %p191 = scmp.eq.s32.totalorder %s45, 0
      %p192 = por %p190, %p191
      %p193 = scmp.ne.s32.totalorder %s181, %s182
      %p194 = scmp.eq.s32.totalorder %s46, 1
      %p195 = por %p193, %p194
      %p197 = scmp.ne.s32.totalorder %s182, %s196
      %p198 = scmp.eq.s32.totalorder %s46, 0
      %p199 = por %p197, %p198
      %s201 = sadd.s32 %s200, 1
      %p204 = scmp.eq.s32.totalorder %s40, 1
      %p205 = scmp.ne.s32.totalorder %s200, %s202
      %p206 = scmp.eq.s32.totalorder %s40, 0
      %p207 = por %p205, %p206
      %p208 = scmp.ne.s32.totalorder %s200, %s202
      %p209 = scmp.eq.s32.totalorder %s45, 1
      %p210 = por %p208, %p209
      %p211 = scmp.ne.s32.totalorder %s202, %s203
      %p212 = scmp.eq.s32.totalorder %s45, 0
      %p213 = por %p211, %p212
      %p214 = scmp.ne.s32.totalorder %s202, %s203
      %p215 = scmp.eq.s32.totalorder %s46, 1
      %p216 = por %p214, %p215
      %p218 = scmp.ne.s32.totalorder %s203, %s217
      %p219 = scmp.eq.s32.totalorder %s46, 0
      %p220 = por %p218, %p219
      %s222 = sadd.s32 %s221, 1
      %p225 = scmp.eq.s32.totalorder %s40, 1
      %p226 = scmp.ne.s32.totalorder %s221, %s223
      %p227 = scmp.eq.s32.totalorder %s40, 0
      %p228 = por %p226, %p227
      %p229 = scmp.ne.s32.totalorder %s221, %s223
      %p230 = scmp.eq.s32.totalorder %s45, 1
      %p231 = por %p229, %p230
      %p232 = scmp.ne.s32.totalorder %s223, %s224
      %p233 = scmp.eq.s32.totalorder %s45, 0
      %p234 = por %p232, %p233
      %p235 = scmp.ne.s32.totalorder %s223, %s224
      %p236 = scmp.eq.s32.totalorder %s46, 1
      %p237 = por %p235, %p236
      %p239 = scmp.ne.s32.totalorder %s224, %s238
      %p240 = scmp.eq.s32.totalorder %s46, 0
      %p241 = por %p239, %p240
      %s243 = sadd.s32 %s242, 1
      %p246 = scmp.eq.s32.totalorder %s40, 1
      %p247 = scmp.ne.s32.totalorder %s242, %s244
      %p248 = scmp.eq.s32.totalorder %s40, 0
      %p249 = por %p247, %p248
      %p250 = scmp.ne.s32.totalorder %s242, %s244
      %p251 = scmp.eq.s32.totalorder %s45, 1
      %p252 = por %p250, %p251
      %p253 = scmp.ne.s32.totalorder %s244, %s245
      %p254 = scmp.eq.s32.totalorder %s45, 0
      %p255 = por %p253, %p254
      %p256 = scmp.ne.s32.totalorder %s244, %s245
      %p257 = scmp.eq.s32.totalorder %s46, 1
      %p258 = por %p256, %p257
      %p260 = scmp.ne.s32.totalorder %s245, %s259
      %p261 = scmp.eq.s32.totalorder %s46, 0
      %p262 = por %p260, %p261
      %s264 = sadd.s32 %s263, 1
      %p267 = scmp.eq.s32.totalorder %s40, 1
      %p268 = scmp.ne.s32.totalorder %s263, %s265
      %p269 = scmp.eq.s32.totalorder %s40, 0
      %p270 = por %p268, %p269
      %p271 = scmp.ne.s32.totalorder %s263, %s265
      %p272 = scmp.eq.s32.totalorder %s45, 1
      %p273 = por %p271, %p272
      %p274 = scmp.ne.s32.totalorder %s265, %s266
      %p275 = scmp.eq.s32.totalorder %s45, 0
      %p276 = por %p274, %p275
      %p277 = scmp.ne.s32.totalorder %s265, %s266
      %p278 = scmp.eq.s32.totalorder %s46, 1
      %p279 = por %p277, %p278
      %p281 = scmp.ne.s32.totalorder %s266, %s280
      %p282 = scmp.eq.s32.totalorder %s46, 0
      %p283 = por %p281, %p282
      %s285 = sadd.s32 %s284, 1
      %p288 = scmp.eq.s32.totalorder %s40, 1
      %p289 = scmp.ne.s32.totalorder %s284, %s286
      %p290 = scmp.eq.s32.totalorder %s40, 0
      %p291 = por %p289, %p290
      %p292 = scmp.ne.s32.totalorder %s284, %s286
      %p293 = scmp.eq.s32.totalorder %s45, 1
      %p294 = por %p292, %p293
      %p295 = scmp.ne.s32.totalorder %s286, %s287
      %p296 = scmp.eq.s32.totalorder %s45, 0
      %p297 = por %p295, %p296
      %p298 = scmp.ne.s32.totalorder %s286, %s287
      %p299 = scmp.eq.s32.totalorder %s46, 1
      %p300 = por %p298, %p299
      %p302 = scmp.ne.s32.totalorder %s287, %s301
      %p303 = scmp.eq.s32.totalorder %s46, 0
      %p304 = por %p302, %p303
      %s306 = sadd.s32 %s305, 1
      %p309 = scmp.eq.s32.totalorder %s40, 1
      %p310 = scmp.ne.s32.totalorder %s305, %s307
      %p311 = scmp.eq.s32.totalorder %s40, 0
      %p312 = por %p310, %p311
      %p313 = scmp.ne.s32.totalorder %s305, %s307
      %p314 = scmp.eq.s32.totalorder %s45, 1
      %p315 = por %p313, %p314
      %p316 = scmp.ne.s32.totalorder %s307, %s308
      %p317 = scmp.eq.s32.totalorder %s45, 0
      %p318 = por %p316, %p317
      %p319 = scmp.ne.s32.totalorder %s307, %s308
      %p320 = scmp.eq.s32.totalorder %s46, 1
      %p321 = por %p319, %p320
      %p323 = scmp.ne.s32.totalorder %s308, %s322
      %p324 = scmp.eq.s32.totalorder %s46, 0
      %p325 = por %p323, %p324
      %s327 = sadd.s32 %s326, 1
      %p330 = scmp.eq.s32.totalorder %s40, 1
      %p331 = scmp.ne.s32.totalorder %s326, %s328
      %p332 = scmp.eq.s32.totalorder %s40, 0
      %p333 = por %p331, %p332
      %p334 = scmp.ne.s32.totalorder %s326, %s328
      %p335 = scmp.eq.s32.totalorder %s45, 1
      %p336 = por %p334, %p335
      %p337 = scmp.ne.s32.totalorder %s328, %s329
      %p338 = scmp.eq.s32.totalorder %s45, 0
      %p339 = por %p337, %p338
      %p340 = scmp.ne.s32.totalorder %s328, %s329
      %p341 = scmp.eq.s32.totalorder %s46, 1
      %p342 = por %p340, %p341
      %p344 = scmp.ne.s32.totalorder %s329, %s343
      %p345 = scmp.eq.s32.totalorder %s46, 0
      %p346 = por %p344, %p345
      %s348 = sadd.s32 %s347, 1
      %p351 = scmp.eq.s32.totalorder %s40, 1
      %p352 = scmp.ne.s32.totalorder %s347, %s349
      %p353 = scmp.eq.s32.totalorder %s40, 0
      %p354 = por %p352, %p353
      %p355 = scmp.ne.s32.totalorder %s347, %s349
      %p356 = scmp.eq.s32.totalorder %s45, 1
      %p357 = por %p355, %p356
      %p358 = scmp.ne.s32.totalorder %s349, %s350
      %p359 = scmp.eq.s32.totalorder %s45, 0
      %p360 = por %p358, %p359
      %p361 = scmp.ne.s32.totalorder %s349, %s350
      %p362 = scmp.eq.s32.totalorder %s46, 1
      %p363 = por %p361, %p362
      %p365 = scmp.ne.s32.totalorder %s350, %s364
      %p366 = scmp.eq.s32.totalorder %s46, 0
      %p367 = por %p365, %p366
      %s369 = sadd.s32 %s368, 1
      %p372 = scmp.eq.s32.totalorder %s40, 1
      %p373 = scmp.ne.s32.totalorder %s368, %s370
      %p374 = scmp.eq.s32.totalorder %s40, 0
      %p375 = por %p373, %p374
      %p376 = scmp.ne.s32.totalorder %s368, %s370
      %p377 = scmp.eq.s32.totalorder %s45, 1
      %p378 = por %p376, %p377
      %p379 = scmp.ne.s32.totalorder %s370, %s371
      %p380 = scmp.eq.s32.totalorder %s45, 0
      %p381 = por %p379, %p380
      %p382 = scmp.ne.s32.totalorder %s370, %s371
      %p383 = scmp.eq.s32.totalorder %s46, 1
      %p384 = por %p382, %p383
      %p386 = scmp.ne.s32.totalorder %s371, %s385
      %p387 = scmp.eq.s32.totalorder %s46, 0
      %p388 = por %p386, %p387
      %s390 = sadd.s32 %s389, 1
      %p393 = scmp.eq.s32.totalorder %s40, 1
      %p394 = scmp.ne.s32.totalorder %s389, %s391
      %p395 = scmp.eq.s32.totalorder %s40, 0
      %p396 = por %p394, %p395
      %p397 = scmp.ne.s32.totalorder %s389, %s391
      %p398 = scmp.eq.s32.totalorder %s45, 1
      %p399 = por %p397, %p398
      %p400 = scmp.ne.s32.totalorder %s391, %s392
      %p401 = scmp.eq.s32.totalorder %s45, 0
      %p402 = por %p400, %p401
      %p403 = scmp.ne.s32.totalorder %s391, %s392
      %p404 = scmp.eq.s32.totalorder %s46, 1
      %p405 = por %p403, %p404
      %p407 = scmp.ne.s32.totalorder %s392, %s406
      %p408 = scmp.eq.s32.totalorder %s46, 0
      %p409 = por %p407, %p408
      %s411 = sadd.s32 %s410, 1
      %p414 = scmp.eq.s32.totalorder %s40, 1
      %p415 = scmp.ne.s32.totalorder %s410, %s412
      %p416 = scmp.eq.s32.totalorder %s40, 0
      %p417 = por %p415, %p416
      %p418 = scmp.ne.s32.totalorder %s410, %s412
      %p419 = scmp.eq.s32.totalorder %s45, 1
      %p420 = por %p418, %p419
      %p421 = scmp.ne.s32.totalorder %s412, %s413
      %p422 = scmp.eq.s32.totalorder %s45, 0
      %p423 = por %p421, %p422
      %p424 = scmp.ne.s32.totalorder %s412, %s413
      %p425 = scmp.eq.s32.totalorder %s46, 1
      %p426 = por %p424, %p425
      %p428 = scmp.ne.s32.totalorder %s413, %s427
      %p429 = scmp.eq.s32.totalorder %s46, 0
      %p430 = por %p428, %p429
      %s432 = sadd.s32 %s431, 1
      %p435 = scmp.eq.s32.totalorder %s40, 1
      %p436 = scmp.ne.s32.totalorder %s431, %s433
      %p437 = scmp.eq.s32.totalorder %s40, 0
      %p438 = por %p436, %p437
      %p439 = scmp.ne.s32.totalorder %s431, %s433
      %p440 = scmp.eq.s32.totalorder %s45, 1
      %p441 = por %p439, %p440
      %p442 = scmp.ne.s32.totalorder %s433, %s434
      %p443 = scmp.eq.s32.totalorder %s45, 0
      %p444 = por %p442, %p443
      %p445 = scmp.ne.s32.totalorder %s433, %s434
      %p446 = scmp.eq.s32.totalorder %s46, 1
      %p447 = por %p445, %p446
      %p449 = scmp.ne.s32.totalorder %s434, %s448
      %p450 = scmp.eq.s32.totalorder %s46, 0
      %p451 = por %p449, %p450
      %s453 = sadd.s32 %s452, 1
      %p456 = scmp.eq.s32.totalorder %s40, 1
      %p457 = scmp.ne.s32.totalorder %s452, %s454
      %p458 = scmp.eq.s32.totalorder %s40, 0
      %p459 = por %p457, %p458
      %p460 = scmp.ne.s32.totalorder %s452, %s454
      %p461 = scmp.eq.s32.totalorder %s45, 1
      %p462 = por %p460, %p461
      %p463 = scmp.ne.s32.totalorder %s454, %s455
      %p464 = scmp.eq.s32.totalorder %s45, 0
      %p465 = por %p463, %p464
      %p466 = scmp.ne.s32.totalorder %s454, %s455
      %p467 = scmp.eq.s32.totalorder %s46, 1
      %p468 = por %p466, %p467
      %p470 = scmp.ne.s32.totalorder %s455, %s469
      %p471 = scmp.eq.s32.totalorder %s46, 0
      %p472 = por %p470, %p471
      %s473 = ssub.s32 %s40, %s47
      %p474 = scmp.eq.s32.totalorder %s473, 0
      %s476 = sadd.s32 %s475, 1
      %s477 = scalar_select %p474, %s475, %s476
      %p480 = pneg %p474
      %p481 = scmp.eq.s32.totalorder %s40, 1
      %p482 = por %p480, %p481
      %p483 = scmp.ne.s32.totalorder %s475, %s478
      %p484 = scmp.eq.s32.totalorder %s40, 0
      %p485 = por %p483, %p484
      %p486 = scmp.ne.s32.totalorder %s475, %s478
      %p487 = scmp.eq.s32.totalorder %s45, 1
      %p488 = por %p486, %p487
      %p489 = scmp.ne.s32.totalorder %s478, %s479
      %p490 = scmp.eq.s32.totalorder %s45, 0
      %p491 = por %p489, %p490
      %p492 = scmp.ne.s32.totalorder %s478, %s479
      %p493 = scmp.eq.s32.totalorder %s46, 1
      %p494 = por %p492, %p493
      %p496 = scmp.ne.s32.totalorder %s479, %s495
      %p497 = scmp.eq.s32.totalorder %s46, 0
      %p498 = por %p496, %p497
      %p499 = scmp.le.s32.totalorder 1, %s40
      %p500 = scmp.lt.s32.totalorder %s40, 3
      %p501 = pnand %p499, %p500
      %p502 = pneg %p501
      // Predicated region
      $region9: #{tpu_custom_call.1} parent=5 // pred_check
        _
      $region10: #{tpu_custom_call.1} parent=5 // pred_check_branch
        %504 = sbr.rel (%p501) target = $region12
      $region11: #{tpu_custom_call.1} parent=5 // pred_region
        %s505 = ssub.s32 %s40, 1
        // Predicated region
        $region13: #{tpu_custom_call.1} parent=11 // pred_check
          %p506 = pneg %p87
        $region14: #{tpu_custom_call.1} parent=11 // pred_check_branch
          %508 = sbr.rel (%p506) target = $region16
        $region15: #{tpu_custom_call.1} parent=11 // pred_region
          %510 = vsyncadd [#allocation6], 0
          %s511 = sshll.u32 %s1, 4
          %s512 = int_to_ptr.hbm [resolvable:$true] %s511
          %s513 = sshll.u32 [#allocation5], 4
          %s514 = int_to_ptr.vmem [resolvable:$true] %s513
          %519 = dma.hbm_to_vmem [thread:$0]  %s512, 2048, %s514, [#allocation6], 64, 64, 4
        $region16: #{tpu_custom_call.1} parent=11 // pred_fallthru
          _
        // Predicated region
        $region17: #{tpu_custom_call.1} parent=11 // pred_check
          %p520 = pneg %p108
        $region18: #{tpu_custom_call.1} parent=11 // pred_check_branch
          %522 = sbr.rel (%p520) target = $region20
        $region19: #{tpu_custom_call.1} parent=11 // pred_region
          %524 = vsyncadd [#allocation6], 0
          %s526 = sshll.u32 %s2, 4
          %s527 = int_to_ptr.hbm [resolvable:$true] %s526
          %s528 = sshll.u32 [#allocation7], 4
          %s529 = int_to_ptr.vmem [resolvable:$true] %s528
          %531 = dma.hbm_to_vmem [thread:$0]  %s527, 32, %s529, [#allocation6]
        $region20: #{tpu_custom_call.1} parent=11 // pred_fallthru
          _
        // Predicated region
        $region21: #{tpu_custom_call.1} parent=11 // pred_check
          %p532 = pneg %p129
        $region22: #{tpu_custom_call.1} parent=11 // pred_check_branch
          %534 = sbr.rel (%p532) target = $region24
        $region23: #{tpu_custom_call.1} parent=11 // pred_region
          %536 = vsyncadd [#allocation9], 0
          %s537 = sshll.u32 %s3, 4
          %s538 = int_to_ptr.hbm [resolvable:$true] %s537
          %s539 = sshll.u32 [#allocation8], 4
          %s540 = int_to_ptr.vmem [resolvable:$true] %s539
          %545 = dma.hbm_to_vmem [thread:$0]  %s538, 1024, %s540, [#allocation9], 64, 64, 4
        $region24: #{tpu_custom_call.1} parent=11 // pred_fallthru
          _
        // Predicated region
        $region25: #{tpu_custom_call.1} parent=11 // pred_check
          %p546 = pneg %p150
        $region26: #{tpu_custom_call.1} parent=11 // pred_check_branch
          %548 = sbr.rel (%p546) target = $region28
        $region27: #{tpu_custom_call.1} parent=11 // pred_region
          %550 = vsyncadd [#allocation9], 0
          %s551 = sshll.u32 %s4, 4
          %s552 = int_to_ptr.hbm [resolvable:$true] %s551
          %s553 = sshll.u32 [#allocation10], 4
          %s554 = int_to_ptr.vmem [resolvable:$true] %s553
          %559 = dma.hbm_to_vmem [thread:$0]  %s552, 2048, %s554, [#allocation9], 128, 128, 8
        $region28: #{tpu_custom_call.1} parent=11 // pred_fallthru
          _
        // Predicated region
        $region29: #{tpu_custom_call.1} parent=11 // pred_check
          %p560 = pneg %p171
        $region30: #{tpu_custom_call.1} parent=11 // pred_check_branch
          %562 = sbr.rel (%p560) target = $region32
        $region31: #{tpu_custom_call.1} parent=11 // pred_region
          %564 = vsyncadd [#allocation12], 0
          %s565 = sshll.u32 %s5, 4
          %s566 = int_to_ptr.hbm [resolvable:$true] %s565
          %s567 = sshll.u32 [#allocation11], 4
          %s568 = int_to_ptr.vmem [resolvable:$true] %s567
          %573 = dma.hbm_to_vmem [thread:$0]  %s566, 1024, %s568, [#allocation12], 64, 64, 4
        $region32: #{tpu_custom_call.1} parent=11 // pred_fallthru
          _
        // Predicated region
        $region33: #{tpu_custom_call.1} parent=11 // pred_check
          %p574 = pneg %p192
        $region34: #{tpu_custom_call.1} parent=11 // pred_check_branch
          %576 = sbr.rel (%p574) target = $region36
        $region35: #{tpu_custom_call.1} parent=11 // pred_region
          %578 = vsyncadd [#allocation12], 0
          %s580 = sshll.u32 %s6, 4
          %s581 = int_to_ptr.hbm [resolvable:$true] %s580
          %s582 = sshll.u32 [#allocation13], 4
          %s583 = int_to_ptr.vmem [resolvable:$true] %s582
          %585 = dma.hbm_to_vmem [thread:$0]  %s581, 16, %s583, [#allocation12]
        $region36: #{tpu_custom_call.1} parent=11 // pred_fallthru
          _
        // Predicated region
        $region37: #{tpu_custom_call.1} parent=11 // pred_check
          %p586 = pneg %p213
        $region38: #{tpu_custom_call.1} parent=11 // pred_check_branch
          %588 = sbr.rel (%p586) target = $region40
        $region39: #{tpu_custom_call.1} parent=11 // pred_region
          %590 = vsyncadd [#allocation15], 0
          %s592 = sshll.u32 %s7, 4
          %s593 = int_to_ptr.hbm [resolvable:$true] %s592
          %s594 = sshll.u32 [#allocation14], 4
          %s595 = int_to_ptr.vmem [resolvable:$true] %s594
          %597 = dma.hbm_to_vmem [thread:$0]  %s593, 32, %s595, [#allocation15]
        $region40: #{tpu_custom_call.1} parent=11 // pred_fallthru
          _
        // Predicated region
        $region41: #{tpu_custom_call.1} parent=11 // pred_check
          %p598 = pneg %p234
        $region42: #{tpu_custom_call.1} parent=11 // pred_check_branch
          %600 = sbr.rel (%p598) target = $region44
        $region43: #{tpu_custom_call.1} parent=11 // pred_region
          %602 = vsyncadd [#allocation15], 0
          %s604 = sshll.u32 %s8, 4
          %s605 = int_to_ptr.hbm [resolvable:$true] %s604
          %s606 = sshll.u32 [#allocation16], 4
          %s607 = int_to_ptr.vmem [resolvable:$true] %s606
          %609 = dma.hbm_to_vmem [thread:$0]  %s605, 16, %s607, [#allocation15]
        $region44: #{tpu_custom_call.1} parent=11 // pred_fallthru
          _
        // Predicated region
        $region45: #{tpu_custom_call.1} parent=11 // pred_check
          %p610 = pneg %p255
        $region46: #{tpu_custom_call.1} parent=11 // pred_check_branch
          %612 = sbr.rel (%p610) target = $region48
        $region47: #{tpu_custom_call.1} parent=11 // pred_region
          %614 = vsyncadd [#allocation18], 0
          %s615 = sshll.u32 %s9, 4
          %s616 = int_to_ptr.hbm [resolvable:$true] %s615
          %s617 = sshll.u32 [#allocation17], 4
          %s618 = int_to_ptr.vmem [resolvable:$true] %s617
          %623 = dma.hbm_to_vmem [thread:$0]  %s616, 3072, %s618, [#allocation18], 192, 192, 12
        $region48: #{tpu_custom_call.1} parent=11 // pred_fallthru
          _
        // Predicated region
        $region49: #{tpu_custom_call.1} parent=11 // pred_check
          %p624 = pneg %p276
        $region50: #{tpu_custom_call.1} parent=11 // pred_check_branch
          %626 = sbr.rel (%p624) target = $region52
        $region51: #{tpu_custom_call.1} parent=11 // pred_region
          %628 = vsyncadd [#allocation18], 0
          %s629 = sshll.u32 %s10, 4
          %s630 = int_to_ptr.hbm [resolvable:$true] %s629
          %s631 = sshll.u32 [#allocation19], 4
          %s632 = int_to_ptr.vmem [resolvable:$true] %s631
          %637 = dma.hbm_to_vmem [thread:$0]  %s630, 1024, %s632, [#allocation18], 64, 64, 4
        $region52: #{tpu_custom_call.1} parent=11 // pred_fallthru
          _
        // Predicated region
        $region53: #{tpu_custom_call.1} parent=11 // pred_check
          %p638 = pneg %p297
        $region54: #{tpu_custom_call.1} parent=11 // pred_check_branch
          %640 = sbr.rel (%p638) target = $region56
        $region55: #{tpu_custom_call.1} parent=11 // pred_region
          %642 = vsyncadd [#allocation21], 0
          %s644 = sshll.u32 %s11, 4
          %s645 = int_to_ptr.hbm [resolvable:$true] %s644
          %s646 = sshll.u32 [#allocation20], 4
          %s647 = int_to_ptr.vmem [resolvable:$true] %s646
          %649 = dma.hbm_to_vmem [thread:$0]  %s645, 48, %s647, [#allocation21]
        $region56: #{tpu_custom_call.1} parent=11 // pred_fallthru
          _
        // Predicated region
        $region57: #{tpu_custom_call.1} parent=11 // pred_check
          %p650 = pneg %p318
        $region58: #{tpu_custom_call.1} parent=11 // pred_check_branch
          %652 = sbr.rel (%p650) target = $region60
        $region59: #{tpu_custom_call.1} parent=11 // pred_region
          _
        $region60: #{tpu_custom_call.1} parent=11 // pred_fallthru
          _
        // Predicated region
        $region61: #{tpu_custom_call.1} parent=11 // pred_check
          %p653 = pneg %p339
        $region62: #{tpu_custom_call.1} parent=11 // pred_check_branch
          %655 = sbr.rel (%p653) target = $region64
        $region63: #{tpu_custom_call.1} parent=11 // pred_region
          %657 = vsyncadd [#allocation21], 0
          %s658 = sshll.u32 %s13, 4
          %s659 = int_to_ptr.hbm [resolvable:$true] %s658
          %s660 = sshll.u32 [#allocation22], 4
          %s661 = int_to_ptr.vmem [resolvable:$true] %s660
          %666 = dma.hbm_to_vmem [thread:$0]  %s659, 1024, %s661, [#allocation21], 128, 128, 8
        $region64: #{tpu_custom_call.1} parent=11 // pred_fallthru
          _
        // Predicated region
        $region65: #{tpu_custom_call.1} parent=11 // pred_check
          %p667 = pneg %p360
        $region66: #{tpu_custom_call.1} parent=11 // pred_check_branch
          %669 = sbr.rel (%p667) target = $region68
        $region67: #{tpu_custom_call.1} parent=11 // pred_region
          %671 = vsyncadd [#allocation24], 0
          %s672 = sshll.u32 %s14, 4
          %s673 = int_to_ptr.hbm [resolvable:$true] %s672
          %s674 = sshll.u32 [#allocation23], 4
          %s675 = int_to_ptr.vmem [resolvable:$true] %s674
          %680 = dma.hbm_to_vmem [thread:$0]  %s673, 1024, %s675, [#allocation24], 64, 64, 4
        $region68: #{tpu_custom_call.1} parent=11 // pred_fallthru
          _
        // Predicated region
        $region69: #{tpu_custom_call.1} parent=11 // pred_check
          %p681 = pneg %p381
        $region70: #{tpu_custom_call.1} parent=11 // pred_check_branch
          %683 = sbr.rel (%p681) target = $region72
        $region71: #{tpu_custom_call.1} parent=11 // pred_region
          _
        $region72: #{tpu_custom_call.1} parent=11 // pred_fallthru
          _
        // Predicated region
        $region73: #{tpu_custom_call.1} parent=11 // pred_check
          %p684 = pneg %p402
        $region74: #{tpu_custom_call.1} parent=11 // pred_check_branch
          %686 = sbr.rel (%p684) target = $region76
        $region75: #{tpu_custom_call.1} parent=11 // pred_region
          %688 = vsyncadd [#allocation24], 0
          %s689 = sshll.u32 %s16, 4
          %s690 = int_to_ptr.hbm [resolvable:$true] %s689
          %s691 = sshll.u32 [#allocation25], 4
          %s692 = int_to_ptr.vmem [resolvable:$true] %s691
          %697 = dma.hbm_to_vmem [thread:$0]  %s690, 512, %s692, [#allocation24], 128, 128, 8
        $region76: #{tpu_custom_call.1} parent=11 // pred_fallthru
          _
        // Predicated region
        $region77: #{tpu_custom_call.1} parent=11 // pred_check
          %p698 = pneg %p423
        $region78: #{tpu_custom_call.1} parent=11 // pred_check_branch
          %700 = sbr.rel (%p698) target = $region80
        $region79: #{tpu_custom_call.1} parent=11 // pred_region
          _
        $region80: #{tpu_custom_call.1} parent=11 // pred_fallthru
          _
        // Predicated region
        $region81: #{tpu_custom_call.1} parent=11 // pred_check
          %p701 = pneg %p444
        $region82: #{tpu_custom_call.1} parent=11 // pred_check_branch
          %703 = sbr.rel (%p701) target = $region84
        $region83: #{tpu_custom_call.1} parent=11 // pred_region
          _
        $region84: #{tpu_custom_call.1} parent=11 // pred_fallthru
          _
        // Predicated region
        $region85: #{tpu_custom_call.1} parent=11 // pred_check
          %p704 = pneg %p465
        $region86: #{tpu_custom_call.1} parent=11 // pred_check_branch
          %706 = sbr.rel (%p704) target = $region88
        $region87: #{tpu_custom_call.1} parent=11 // pred_region
          %708 = vsyncadd [#allocation27], 0
          %s709 = sshll.u32 %s19, 4
          %s710 = int_to_ptr.hbm [resolvable:$true] %s709
          %s711 = sshll.u32 [#allocation26], 4
          %s712 = int_to_ptr.vmem [resolvable:$true] %s711
          %717 = dma.hbm_to_vmem [thread:$0]  %s710, 1024, %s712, [#allocation27], 64, 64, 4
        $region88: #{tpu_custom_call.1} parent=11 // pred_fallthru
          _
      $region12: #{tpu_custom_call.1} parent=5 // pred_fallthru
        _
      %p718 = scmp.lt.s32.totalorder %s40, 2
      // Predicated region
      $region89: #{tpu_custom_call.1} parent=5 // pred_check
        %p719 = pneg %p718
      $region90: #{tpu_custom_call.1} parent=5 // pred_check_branch
        %721 = sbr.rel (%p719) target = $region92
      $region91: #{tpu_custom_call.1} parent=5 // pred_region
        // Predicated region
        $region93: #{tpu_custom_call.1} parent=91 // pred_check
          %p722 = pneg %p60
        $region94: #{tpu_custom_call.1} parent=91 // pred_check_branch
          %724 = sbr.rel (%p722) target = $region96
        $region95: #{tpu_custom_call.1} parent=91 // pred_region
          %s725 = sand.u32 %s50, 1
          %s726 = scalar_lea.sflag [#allocation3], %s725
          %s727 = sand.u32 %s50, 1
          %s728 = smul.addr %s727, 128
          %s729 = scalar_lea.vmem [#allocation2], %s728
          %s730 = smul.u32 16, %s40
          %732 = vsyncadd %s726, 0
          %s733 = smul.addr %s730, 8
          %s734 = scalar_lea.hbm %s0, %s733
          %s735 = sshll.u32 %s734, 4
          %s736 = int_to_ptr.hbm [resolvable:$true] %s735
          %s737 = sshll.u32 %s729, 4
          %s738 = int_to_ptr.vmem [resolvable:$true] %s737
          %743 = dma.hbm_to_vmem [thread:$0]  %s736, 2048, %s738, %s726, 128, 128, 8
        $region96: #{tpu_custom_call.1} parent=91 // pred_fallthru
          _
      $region92: #{tpu_custom_call.1} parent=5 // pred_fallthru
        _
      %p744 = scmp.le.s32.totalorder 1, %s40
      %p745 = scmp.lt.s32.totalorder %s40, 3
      %p746 = pnand %p744, %p745
      %p747 = pneg %p746
      // Predicated region
      $region97: #{tpu_custom_call.1} parent=5 // pred_check
        _
      $region98: #{tpu_custom_call.1} parent=5 // pred_check_branch
        %749 = sbr.rel (%p746) target = $region100
      $region99: #{tpu_custom_call.1} parent=5 // pred_region
        %s750 = ssub.s32 %s40, 1
        %s751 = sand.u32 %s53, 1
        %s752 = scalar_lea.sflag [#allocation3], %s751
        %s753 = sand.u32 %s53, 1
        %s754 = smul.addr %s753, 128
        %s755 = scalar_lea.vmem [#allocation2], %s754
        // Predicated region
        $region101: #{tpu_custom_call.1} parent=99 // pred_check
          %p756 = pneg %p66
        $region102: #{tpu_custom_call.1} parent=99 // pred_check_branch
          %758 = sbr.rel (%p756) target = $region104
        $region103: #{tpu_custom_call.1} parent=99 // pred_region
          %760 = dma.done %s752, 2048
        $region104: #{tpu_custom_call.1} parent=99 // pred_fallthru
          _
        // Predicated region
        $region105: #{tpu_custom_call.1} parent=99 // pred_check
          %p761 = pneg %p87
        $region106: #{tpu_custom_call.1} parent=99 // pred_check_branch
          %763 = sbr.rel (%p761) target = $region108
        $region107: #{tpu_custom_call.1} parent=99 // pred_region
          %765 = dma.done [#allocation6], 2048
        $region108: #{tpu_custom_call.1} parent=99 // pred_fallthru
          _
        // Predicated region
        $region109: #{tpu_custom_call.1} parent=99 // pred_check
          %p766 = pneg %p108
        $region110: #{tpu_custom_call.1} parent=99 // pred_check_branch
          %768 = sbr.rel (%p766) target = $region112
        $region111: #{tpu_custom_call.1} parent=99 // pred_region
          %770 = dma.done [#allocation6], 32
        $region112: #{tpu_custom_call.1} parent=99 // pred_fallthru
          _
        // Predicated region
        $region113: #{tpu_custom_call.1} parent=99 // pred_check
          %p771 = pneg %p129
        $region114: #{tpu_custom_call.1} parent=99 // pred_check_branch
          %773 = sbr.rel (%p771) target = $region116
        $region115: #{tpu_custom_call.1} parent=99 // pred_region
          %775 = dma.done [#allocation9], 1024
        $region116: #{tpu_custom_call.1} parent=99 // pred_fallthru
          _
        // Predicated region
        $region117: #{tpu_custom_call.1} parent=99 // pred_check
          %p776 = pneg %p150
        $region118: #{tpu_custom_call.1} parent=99 // pred_check_branch
          %778 = sbr.rel (%p776) target = $region120
        $region119: #{tpu_custom_call.1} parent=99 // pred_region
          %780 = dma.done [#allocation9], 2048
        $region120: #{tpu_custom_call.1} parent=99 // pred_fallthru
          _
        // Predicated region
        $region121: #{tpu_custom_call.1} parent=99 // pred_check
          %p781 = pneg %p171
        $region122: #{tpu_custom_call.1} parent=99 // pred_check_branch
          %783 = sbr.rel (%p781) target = $region124
        $region123: #{tpu_custom_call.1} parent=99 // pred_region
          %785 = dma.done [#allocation12], 1024
        $region124: #{tpu_custom_call.1} parent=99 // pred_fallthru
          _
        // Predicated region
        $region125: #{tpu_custom_call.1} parent=99 // pred_check
          %p786 = pneg %p192
        $region126: #{tpu_custom_call.1} parent=99 // pred_check_branch
          %788 = sbr.rel (%p786) target = $region128
        $region127: #{tpu_custom_call.1} parent=99 // pred_region
          %790 = dma.done [#allocation12], 16
        $region128: #{tpu_custom_call.1} parent=99 // pred_fallthru
          _
        // Predicated region
        $region129: #{tpu_custom_call.1} parent=99 // pred_check
          %p791 = pneg %p213
        $region130: #{tpu_custom_call.1} parent=99 // pred_check_branch
          %793 = sbr.rel (%p791) target = $region132
        $region131: #{tpu_custom_call.1} parent=99 // pred_region
          %795 = dma.done [#allocation15], 32
        $region132: #{tpu_custom_call.1} parent=99 // pred_fallthru
          _
        // Predicated region
        $region133: #{tpu_custom_call.1} parent=99 // pred_check
          %p796 = pneg %p234
        $region134: #{tpu_custom_call.1} parent=99 // pred_check_branch
          %798 = sbr.rel (%p796) target = $region136
        $region135: #{tpu_custom_call.1} parent=99 // pred_region
          %800 = dma.done [#allocation15], 16
        $region136: #{tpu_custom_call.1} parent=99 // pred_fallthru
          _
        // Predicated region
        $region137: #{tpu_custom_call.1} parent=99 // pred_check
          %p801 = pneg %p255
        $region138: #{tpu_custom_call.1} parent=99 // pred_check_branch
          %803 = sbr.rel (%p801) target = $region140
        $region139: #{tpu_custom_call.1} parent=99 // pred_region
          %805 = dma.done [#allocation18], 3072
        $region140: #{tpu_custom_call.1} parent=99 // pred_fallthru
          _
        // Predicated region
        $region141: #{tpu_custom_call.1} parent=99 // pred_check
          %p806 = pneg %p276
        $region142: #{tpu_custom_call.1} parent=99 // pred_check_branch
          %808 = sbr.rel (%p806) target = $region144
        $region143: #{tpu_custom_call.1} parent=99 // pred_region
          %810 = dma.done [#allocation18], 1024
        $region144: #{tpu_custom_call.1} parent=99 // pred_fallthru
          _
        // Predicated region
        $region145: #{tpu_custom_call.1} parent=99 // pred_check
          %p811 = pneg %p297
        $region146: #{tpu_custom_call.1} parent=99 // pred_check_branch
          %813 = sbr.rel (%p811) target = $region148
        $region147: #{tpu_custom_call.1} parent=99 // pred_region
          %815 = dma.done [#allocation21], 48
        $region148: #{tpu_custom_call.1} parent=99 // pred_fallthru
          _
        // Predicated region
        $region149: #{tpu_custom_call.1} parent=99 // pred_check
          %p816 = pneg %p339
        $region150: #{tpu_custom_call.1} parent=99 // pred_check_branch
          %818 = sbr.rel (%p816) target = $region152
        $region151: #{tpu_custom_call.1} parent=99 // pred_region
          %820 = dma.done [#allocation21], 1024
        $region152: #{tpu_custom_call.1} parent=99 // pred_fallthru
          _
        // Predicated region
        $region153: #{tpu_custom_call.1} parent=99 // pred_check
          %p821 = pneg %p360
        $region154: #{tpu_custom_call.1} parent=99 // pred_check_branch
          %823 = sbr.rel (%p821) target = $region156
        $region155: #{tpu_custom_call.1} parent=99 // pred_region
          %825 = dma.done [#allocation24], 1024
        $region156: #{tpu_custom_call.1} parent=99 // pred_fallthru
          _
        // Predicated region
        $region157: #{tpu_custom_call.1} parent=99 // pred_check
          %p826 = pneg %p402
        $region158: #{tpu_custom_call.1} parent=99 // pred_check_branch
          %828 = sbr.rel (%p826) target = $region160
        $region159: #{tpu_custom_call.1} parent=99 // pred_region
          %830 = dma.done [#allocation24], 512
        $region160: #{tpu_custom_call.1} parent=99 // pred_fallthru
          _
        // Predicated region
        $region161: #{tpu_custom_call.1} parent=99 // pred_check
          %p831 = pneg %p465
        $region162: #{tpu_custom_call.1} parent=99 // pred_check_branch
          %833 = sbr.rel (%p831) target = $region164
        $region163: #{tpu_custom_call.1} parent=99 // pred_region
          %835 = dma.done [#allocation27], 1024
        $region164: #{tpu_custom_call.1} parent=99 // pred_fallthru
          _
        %s836 = sand.u32 %s53, 1
        %s837 = scalar_lea.sflag [#allocation3], %s836
        %s838 = sand.u32 %s53, 1
        %s839 = smul.addr %s838, 128
        %s840 = scalar_lea.vmem [#allocation2], %s839
        %p841 = pneg %p66
        %p842 = pneg %p63
        %p843 = pneg %p87
        %p844 = pneg %p84
        %p845 = pneg %p108
        %p846 = pneg %p105
        %p847 = pneg %p129
        %p848 = pneg %p126
        %p849 = pneg %p150
        %p850 = pneg %p147
        %p851 = pneg %p171
        %p852 = pneg %p168
        %p853 = pneg %p192
        %p854 = pneg %p189
        %p855 = pneg %p213
        %p856 = pneg %p210
        %p857 = pneg %p234
        %p858 = pneg %p231
        %p859 = pneg %p255
        %p860 = pneg %p252
        %p861 = pneg %p276
        %p862 = pneg %p273
        %p863 = pneg %p297
        %p864 = pneg %p294
        %p865 = pneg %p318
        %p866 = pneg %p315
        %p867 = pneg %p339
        %p868 = pneg %p336
        %p869 = pneg %p360
        %p870 = pneg %p357
        %p871 = pneg %p381
        %p872 = pneg %p378
        %p873 = pneg %p402
        %p874 = pneg %p399
        %p875 = pneg %p423
        %p876 = pneg %p420
        %p877 = pneg %p444
        %p878 = pneg %p441
        %p879 = pneg %p465
        %p880 = pneg %p462
        %p881 = pneg %p491
        %p882 = pneg %p488
        %s883 = sand.u32 %s478, 1
        %s884 = scalar_lea.sflag [#allocation4], %s883
        %s885 = sand.u32 %s478, 1
        %s886 = smul.addr %s885, 128
        %s887 = scalar_lea.vmem [#allocation28], %s886
        %s888 = smul.u32 16, %s45
        %s889 = smul.u32 16, %s45
        %v890 = vld [vmem:[%s755] sm:$0xff]
        %v891 = vld [vmem:[%s755 + $0x8] sm:$0xff]
        %v892 = vld [vmem:[%s755 + $0x10] sm:$0xff]
        %v893 = vld [vmem:[%s755 + $0x18] sm:$0xff]
        %v894 = vld [vmem:[%s755 + $0x20] sm:$0xff]
        %v895 = vld [vmem:[%s755 + $0x28] sm:$0xff]
        %v896 = vld [vmem:[%s755 + $0x30] sm:$0xff]
        %v897 = vld [vmem:[%s755 + $0x38] sm:$0xff]
        %v898 = vld [vmem:[%s755 + $0x40] sm:$0xff]
        %v899 = vld [vmem:[%s755 + $0x48] sm:$0xff]
        %v900 = vld [vmem:[%s755 + $0x50] sm:$0xff]
        %v901 = vld [vmem:[%s755 + $0x58] sm:$0xff]
        %v902 = vld [vmem:[%s755 + $0x60] sm:$0xff]
        %v903 = vld [vmem:[%s755 + $0x68] sm:$0xff]
        %v904 = vld [vmem:[%s755 + $0x70] sm:$0xff]
        %v905 = vld [vmem:[%s755 + $0x78] sm:$0xff]
        %v906 = vld [vmem:[%s17] sm:$0x7]
        %v907 = vld [vmem:[%s18] sm:$0x7]
        %v908 = vld [vmem:[#allocation5] sm:$0xf]
        %v909 = vld [vmem:[#allocation5 + $0x4] sm:$0xf]
        %v910 = vld [vmem:[#allocation5 + $0x8] sm:$0xf]
        %v911 = vld [vmem:[#allocation5 + $0xc] sm:$0xf]
        %v912 = vld [vmem:[#allocation5 + $0x10] sm:$0xf]
        %v913 = vld [vmem:[#allocation5 + $0x14] sm:$0xf]
        %v914 = vld [vmem:[#allocation5 + $0x18] sm:$0xf]
        %v915 = vld [vmem:[#allocation5 + $0x1c] sm:$0xf]
        %v916 = vld [vmem:[#allocation5 + $0x20] sm:$0xf]
        %v917 = vld [vmem:[#allocation5 + $0x24] sm:$0xf]
        %v918 = vld [vmem:[#allocation5 + $0x28] sm:$0xf]
        %v919 = vld [vmem:[#allocation5 + $0x2c] sm:$0xf]
        %v920 = vld [vmem:[#allocation5 + $0x30] sm:$0xf]
        %v921 = vld [vmem:[#allocation5 + $0x34] sm:$0xf]
        %v922 = vld [vmem:[#allocation5 + $0x38] sm:$0xf]
        %v923 = vld [vmem:[#allocation5 + $0x3c] sm:$0xf]
        %v924 = vld [vmem:[#allocation5 + $0x40] sm:$0xf]
        %v925 = vld [vmem:[#allocation5 + $0x44] sm:$0xf]
        %v926 = vld [vmem:[#allocation5 + $0x48] sm:$0xf]
        %v927 = vld [vmem:[#allocation5 + $0x4c] sm:$0xf]
        %v928 = vld [vmem:[#allocation5 + $0x50] sm:$0xf]
        %v929 = vld [vmem:[#allocation5 + $0x54] sm:$0xf]
        %v930 = vld [vmem:[#allocation5 + $0x58] sm:$0xf]
        %v931 = vld [vmem:[#allocation5 + $0x5c] sm:$0xf]
        %v932 = vld [vmem:[#allocation5 + $0x60] sm:$0xf]
        %v933 = vld [vmem:[#allocation5 + $0x64] sm:$0xf]
        %v934 = vld [vmem:[#allocation5 + $0x68] sm:$0xf]
        %v935 = vld [vmem:[#allocation5 + $0x6c] sm:$0xf]
        %v936 = vld [vmem:[#allocation5 + $0x70] sm:$0xf]
        %v937 = vld [vmem:[#allocation5 + $0x74] sm:$0xf]
        %v938 = vld [vmem:[#allocation5 + $0x78] sm:$0xf]
        %v939 = vld [vmem:[#allocation5 + $0x7c] sm:$0xf]
        %v940 = vld [vmem:[#allocation7] sm:$0x3]
        %v941 = vpack.c.bf16 %v891, %v890
        %v942 = vpack.c.bf16 %v893, %v892
        %v943 = vpack.c.bf16 %v895, %v894
        %v944 = vpack.c.bf16 %v897, %v896
        %v945 = vpack.c.bf16 %v899, %v898
        %v946 = vpack.c.bf16 %v901, %v900
        %v947 = vpack.c.bf16 %v903, %v902
        %v948 = vpack.c.bf16 %v905, %v904
        %v949 = vperm.slane %v940, 0
        %v966 = vunpack.c.l.b16 %v908
        %v967 = vunpack.c.l.b16 %v909
        %v968 = vunpack.c.l.b16 %v910
        %v969 = vunpack.c.l.b16 %v911
        %v970 = vunpack.c.l.b16 %v912
        %v971 = vunpack.c.l.b16 %v913
        %v972 = vunpack.c.l.b16 %v914
        %v973 = vunpack.c.l.b16 %v915
        %v974 = vunpack.c.l.b16 %v916
        %v975 = vunpack.c.l.b16 %v917
        %v976 = vunpack.c.l.b16 %v918
        %v977 = vunpack.c.l.b16 %v919
        %v978 = vunpack.c.l.b16 %v920
        %v979 = vunpack.c.l.b16 %v921
        %v980 = vunpack.c.l.b16 %v922
        %v981 = vunpack.c.l.b16 %v923
        %v982 = vpack.c.b16 %v967, %v966
        %v983 = vpack.c.b16 %v969, %v968
        %v984 = vpack.c.b16 %v971, %v970
        %v985 = vpack.c.b16 %v973, %v972
        %v986 = vpack.c.b16 %v975, %v974
        %v987 = vpack.c.b16 %v977, %v976
        %v988 = vpack.c.b16 %v979, %v978
        %v989 = vpack.c.b16 %v981, %v980
        %998 = vmatpush.bf16.msra.mxu0 %v989
        %999 = vmatpush.bf16.msra.mxu0 %v988
        %1000 = vmatpush.bf16.msra.mxu0 %v987
        %1001 = vmatpush.bf16.msra.mxu0 %v986
        %1002 = vmatpush.bf16.msra.mxu0 %v985
        %1003 = vmatpush.bf16.msra.mxu0 %v984
        %1004 = vmatpush.bf16.msra.mxu0 %v983
        %1005 = vmatpush.bf16.msra.mxu0 %v982
        %1006 = vmatmul.bf16.gmra.mxu0 %v941
        %v1007 = vpop.f32.mrf.mxu0
        %v1008 = vadd.f32 %v949, %v1007
        %v1009 = vpop.f32.mrf.mxu0
        %v1010 = vadd.f32 %v949, %v1009
        %1011 = vmatmul.bf16.gmra.mxu0 %v942
        %v1012 = vpop.f32.mrf.mxu0
        %v1013 = vadd.f32 %v949, %v1012
        %v1014 = vpop.f32.mrf.mxu0
        %v1015 = vadd.f32 %v949, %v1014
        %1016 = vmatmul.bf16.gmra.mxu0 %v943
        %v1017 = vpop.f32.mrf.mxu0
        %v1018 = vadd.f32 %v949, %v1017
        %v1019 = vpop.f32.mrf.mxu0
        %v1020 = vadd.f32 %v949, %v1019
        %1021 = vmatmul.bf16.gmra.mxu0 %v944
        %v1022 = vpop.f32.mrf.mxu0
        %v1023 = vadd.f32 %v949, %v1022
        %v1024 = vpop.f32.mrf.mxu0
        %v1025 = vadd.f32 %v949, %v1024
        %1026 = vmatmul.bf16.gmra.mxu0 %v945
        %v1027 = vpop.f32.mrf.mxu0
        %v1028 = vadd.f32 %v949, %v1027
        %v1029 = vpop.f32.mrf.mxu0
        %v1030 = vadd.f32 %v949, %v1029
        %1031 = vmatmul.bf16.gmra.mxu0 %v946
        %v1032 = vpop.f32.mrf.mxu0
        %v1033 = vadd.f32 %v949, %v1032
        %v1034 = vpop.f32.mrf.mxu0
        %v1035 = vadd.f32 %v949, %v1034
        %1036 = vmatmul.bf16.gmra.mxu0 %v947
        %v1037 = vpop.f32.mrf.mxu0
        %v1038 = vadd.f32 %v949, %v1037
        %v1039 = vpop.f32.mrf.mxu0
        %v1040 = vadd.f32 %v949, %v1039
        %1041 = vmatmul.bf16.gmra.mxu0 %v948
        %v1042 = vpop.f32.mrf.mxu0
        %v1043 = vadd.f32 %v949, %v1042
        %v1044 = vpop.f32.mrf.mxu0
        %v1045 = vadd.f32 %v949, %v1044
        %1046 = vdwg.mxu0
        %v1047 = vpack.c.bf16 %v1010, %v1008
        %v1048 = vpack.c.bf16 %v1015, %v1013
        %v1049 = vpack.c.bf16 %v1020, %v1018
        %v1050 = vpack.c.bf16 %v1025, %v1023
        %v1051 = vpack.c.bf16 %v1030, %v1028
        %v1052 = vpack.c.bf16 %v1035, %v1033
        %v1053 = vpack.c.bf16 %v1040, %v1038
        %v1054 = vpack.c.bf16 %v1045, %v1043
        %v1055 = vperm.slane %v940, 1
        %v1072 = vunpack.c.l.b16 %v924
        %v1073 = vunpack.c.l.b16 %v925
        %v1074 = vunpack.c.l.b16 %v926
        %v1075 = vunpack.c.l.b16 %v927
        %v1076 = vunpack.c.l.b16 %v928
        %v1077 = vunpack.c.l.b16 %v929
        %v1078 = vunpack.c.l.b16 %v930
        %v1079 = vunpack.c.l.b16 %v931
        %v1080 = vunpack.c.l.b16 %v932
        %v1081 = vunpack.c.l.b16 %v933
        %v1082 = vunpack.c.l.b16 %v934
        %v1083 = vunpack.c.l.b16 %v935
        %v1084 = vunpack.c.l.b16 %v936
        %v1085 = vunpack.c.l.b16 %v937
        %v1086 = vunpack.c.l.b16 %v938
        %v1087 = vunpack.c.l.b16 %v939
        %v1088 = vpack.c.b16 %v1073, %v1072
        %v1089 = vpack.c.b16 %v1075, %v1074
        %v1090 = vpack.c.b16 %v1077, %v1076
        %v1091 = vpack.c.b16 %v1079, %v1078
        %v1092 = vpack.c.b16 %v1081, %v1080
        %v1093 = vpack.c.b16 %v1083, %v1082
        %v1094 = vpack.c.b16 %v1085, %v1084
        %v1095 = vpack.c.b16 %v1087, %v1086
        %1104 = vmatpush.bf16.msra.mxu0 %v1095
        %1105 = vmatpush.bf16.msra.mxu0 %v1094
        %1106 = vmatpush.bf16.msra.mxu0 %v1093
        %1107 = vmatpush.bf16.msra.mxu0 %v1092
        %1108 = vmatpush.bf16.msra.mxu0 %v1091
        %1109 = vmatpush.bf16.msra.mxu0 %v1090
        %1110 = vmatpush.bf16.msra.mxu0 %v1089
        %1111 = vmatpush.bf16.msra.mxu0 %v1088
        %1112 = vmatmul.bf16.gmra.mxu0 %v1047
        %v1113 = vpop.f32.mrf.mxu0
        %v1114 = vadd.f32 %v1055, %v1113
        %v1115 = vpop.f32.mrf.mxu0
        %v1116 = vadd.f32 %v1055, %v1115
        %1117 = vmatmul.bf16.gmra.mxu0 %v1048
        %v1118 = vpop.f32.mrf.mxu0
        %v1119 = vadd.f32 %v1055, %v1118
        %v1120 = vpop.f32.mrf.mxu0
        %v1121 = vadd.f32 %v1055, %v1120
        %1122 = vmatmul.bf16.gmra.mxu0 %v1049
        %v1123 = vpop.f32.mrf.mxu0
        %v1124 = vadd.f32 %v1055, %v1123
        %v1125 = vpop.f32.mrf.mxu0
        %v1126 = vadd.f32 %v1055, %v1125
        %1127 = vmatmul.bf16.gmra.mxu0 %v1050
        %v1128 = vpop.f32.mrf.mxu0
        %v1129 = vadd.f32 %v1055, %v1128
        %v1130 = vpop.f32.mrf.mxu0
        %v1131 = vadd.f32 %v1055, %v1130
        %1132 = vmatmul.bf16.gmra.mxu0 %v1051
        %v1133 = vpop.f32.mrf.mxu0
        %v1134 = vadd.f32 %v1055, %v1133
        %v1135 = vpop.f32.mrf.mxu0
        %v1136 = vadd.f32 %v1055, %v1135
        %1137 = vmatmul.bf16.gmra.mxu0 %v1052
        %v1138 = vpop.f32.mrf.mxu0
        %v1139 = vadd.f32 %v1055, %v1138
        %v1140 = vpop.f32.mrf.mxu0
        %v1141 = vadd.f32 %v1055, %v1140
        %1142 = vmatmul.bf16.gmra.mxu0 %v1053
        %v1143 = vpop.f32.mrf.mxu0
        %v1144 = vadd.f32 %v1055, %v1143
        %v1145 = vpop.f32.mrf.mxu0
        %v1146 = vadd.f32 %v1055, %v1145
        %1147 = vmatmul.bf16.gmra.mxu0 %v1054
        %v1148 = vpop.f32.mrf.mxu0
        %v1149 = vadd.f32 %v1055, %v1148
        %v1150 = vpop.f32.mrf.mxu0
        %v1151 = vadd.f32 %v1055, %v1150
        %1152 = vdwg.mxu0
        %v1153 = vadd.f32 %v890, %v1114
        %v1154 = vadd.f32 %v891, %v1116
        %v1155 = vadd.f32 %v892, %v1119
        %v1156 = vadd.f32 %v893, %v1121
        %v1157 = vadd.f32 %v894, %v1124
        %v1158 = vadd.f32 %v895, %v1126
        %v1159 = vadd.f32 %v896, %v1129
        %v1160 = vadd.f32 %v897, %v1131
        %v1161 = vadd.f32 %v898, %v1134
        %v1162 = vadd.f32 %v899, %v1136
        %v1163 = vadd.f32 %v900, %v1139
        %v1164 = vadd.f32 %v901, %v1141
        %v1165 = vadd.f32 %v902, %v1144
        %v1166 = vadd.f32 %v903, %v1146
        %v1167 = vadd.f32 %v904, %v1149
        %v1168 = vadd.f32 %v905, %v1151
        %1169 = vadd.xlane.f32.xlu0 %v1153
        %v1170 = vpop.xlane.xlu0 %1169
        %1171 = vadd.xlane.f32.xlu0 %v1154
        %v1172 = vpop.xlane.xlu0 %1171
        %1173 = vadd.xlane.f32.xlu0 %v1155
        %v1174 = vpop.xlane.xlu0 %1173
        %1175 = vadd.xlane.f32.xlu0 %v1156
        %v1176 = vpop.xlane.xlu0 %1175
        %1177 = vadd.xlane.f32.xlu0 %v1157
        %v1178 = vpop.xlane.xlu0 %1177
        %1179 = vadd.xlane.f32.xlu0 %v1158
        %v1180 = vpop.xlane.xlu0 %1179
        %1181 = vadd.xlane.f32.xlu0 %v1159
        %v1182 = vpop.xlane.xlu0 %1181
        %1183 = vadd.xlane.f32.xlu0 %v1160
        %v1184 = vpop.xlane.xlu0 %1183
        %1185 = vadd.xlane.f32.xlu0 %v1161
        %v1186 = vpop.xlane.xlu0 %1185
        %1187 = vadd.xlane.f32.xlu0 %v1162
        %v1188 = vpop.xlane.xlu0 %1187
        %1189 = vadd.xlane.f32.xlu0 %v1163
        %v1190 = vpop.xlane.xlu0 %1189
        %1191 = vadd.xlane.f32.xlu0 %v1164
        %v1192 = vpop.xlane.xlu0 %1191
        %1193 = vadd.xlane.f32.xlu0 %v1165
        %v1194 = vpop.xlane.xlu0 %1193
        %1195 = vadd.xlane.f32.xlu0 %v1166
        %v1196 = vpop.xlane.xlu0 %1195
        %1197 = vadd.xlane.f32.xlu0 %v1167
        %v1198 = vpop.xlane.xlu0 %1197
        %1199 = vadd.xlane.f32.xlu0 %v1168
        %v1200 = vpop.xlane.xlu0 %1199
        %v1201 = vrcp.pop 128.0
        %v1202 = vmul.f32 128.0, %v1201
        %v1203 = vsub.f32 1.0, %v1202
        %v1204 = vmul.f32 %v1201, %v1203
        %v1205 = vadd.f32 %v1201, %v1204
        %vm1206 = vweird.f32 %v1201
        %v1207 = vsel %vm1206, %v1201, %v1205
        %v1208 = vmul.f32 %v1170, %v1207
        %v1209 = vmul.f32 %v1172, %v1207
        %v1210 = vmul.f32 %v1174, %v1207
        %v1211 = vmul.f32 %v1176, %v1207
        %v1212 = vmul.f32 %v1178, %v1207
        %v1213 = vmul.f32 %v1180, %v1207
        %v1214 = vmul.f32 %v1182, %v1207
        %v1215 = vmul.f32 %v1184, %v1207
        %v1216 = vmul.f32 %v1186, %v1207
        %v1217 = vmul.f32 %v1188, %v1207
        %v1218 = vmul.f32 %v1190, %v1207
        %v1219 = vmul.f32 %v1192, %v1207
        %v1220 = vmul.f32 %v1194, %v1207
        %v1221 = vmul.f32 %v1196, %v1207
        %v1222 = vmul.f32 %v1198, %v1207
        %v1223 = vmul.f32 %v1200, %v1207
        %v1224 = vsub.f32 %v1153, %v1208
        %v1225 = vsub.f32 %v1154, %v1209
        %v1226 = vsub.f32 %v1155, %v1210
        %v1227 = vsub.f32 %v1156, %v1211
        %v1228 = vsub.f32 %v1157, %v1212
        %v1229 = vsub.f32 %v1158, %v1213
        %v1230 = vsub.f32 %v1159, %v1214
        %v1231 = vsub.f32 %v1160, %v1215
        %v1232 = vsub.f32 %v1161, %v1216
        %v1233 = vsub.f32 %v1162, %v1217
        %v1234 = vsub.f32 %v1163, %v1218
        %v1235 = vsub.f32 %v1164, %v1219
        %v1236 = vsub.f32 %v1165, %v1220
        %v1237 = vsub.f32 %v1166, %v1221
        %v1238 = vsub.f32 %v1167, %v1222
        %v1239 = vsub.f32 %v1168, %v1223
        %v1240 = vmul.f32 %v1224, %v1224
        %v1241 = vmul.f32 %v1225, %v1225
        %v1242 = vmul.f32 %v1226, %v1226
        %v1243 = vmul.f32 %v1227, %v1227
        %v1244 = vmul.f32 %v1228, %v1228
        %v1245 = vmul.f32 %v1229, %v1229
        %v1246 = vmul.f32 %v1230, %v1230
        %v1247 = vmul.f32 %v1231, %v1231
        %v1248 = vmul.f32 %v1232, %v1232
        %v1249 = vmul.f32 %v1233, %v1233
        %v1250 = vmul.f32 %v1234, %v1234
        %v1251 = vmul.f32 %v1235, %v1235
        %v1252 = vmul.f32 %v1236, %v1236
        %v1253 = vmul.f32 %v1237, %v1237
        %v1254 = vmul.f32 %v1238, %v1238
        %v1255 = vmul.f32 %v1239, %v1239
        %1256 = vadd.xlane.f32.xlu0 %v1240
        %v1257 = vpop.xlane.xlu0 %1256
        %1258 = vadd.xlane.f32.xlu0 %v1241
        %v1259 = vpop.xlane.xlu0 %1258
        %1260 = vadd.xlane.f32.xlu0 %v1242
        %v1261 = vpop.xlane.xlu0 %1260
        %1262 = vadd.xlane.f32.xlu0 %v1243
        %v1263 = vpop.xlane.xlu0 %1262
        %1264 = vadd.xlane.f32.xlu0 %v1244
        %v1265 = vpop.xlane.xlu0 %1264
        %1266 = vadd.xlane.f32.xlu0 %v1245
        %v1267 = vpop.xlane.xlu0 %1266
        %1268 = vadd.xlane.f32.xlu0 %v1246
        %v1269 = vpop.xlane.xlu0 %1268
        %1270 = vadd.xlane.f32.xlu0 %v1247
        %v1271 = vpop.xlane.xlu0 %1270
        %1272 = vadd.xlane.f32.xlu0 %v1248
        %v1273 = vpop.xlane.xlu0 %1272
        %1274 = vadd.xlane.f32.xlu0 %v1249
        %v1275 = vpop.xlane.xlu0 %1274
        %1276 = vadd.xlane.f32.xlu0 %v1250
        %v1277 = vpop.xlane.xlu0 %1276
        %1278 = vadd.xlane.f32.xlu0 %v1251
        %v1279 = vpop.xlane.xlu0 %1278
        %1280 = vadd.xlane.f32.xlu0 %v1252
        %v1281 = vpop.xlane.xlu0 %1280
        %1282 = vadd.xlane.f32.xlu0 %v1253
        %v1283 = vpop.xlane.xlu0 %1282
        %1284 = vadd.xlane.f32.xlu0 %v1254
        %v1285 = vpop.xlane.xlu0 %1284
        %1286 = vadd.xlane.f32.xlu0 %v1255
        %v1287 = vpop.xlane.xlu0 %1286
        %v1288 = vmul.f32 %v1257, %v1207
        %v1289 = vmul.f32 %v1259, %v1207
        %v1290 = vmul.f32 %v1261, %v1207
        %v1291 = vmul.f32 %v1263, %v1207
        %v1292 = vmul.f32 %v1265, %v1207
        %v1293 = vmul.f32 %v1267, %v1207
        %v1294 = vmul.f32 %v1269, %v1207
        %v1295 = vmul.f32 %v1271, %v1207
        %v1296 = vmul.f32 %v1273, %v1207
        %v1297 = vmul.f32 %v1275, %v1207
        %v1298 = vmul.f32 %v1277, %v1207
        %v1299 = vmul.f32 %v1279, %v1207
        %v1300 = vmul.f32 %v1281, %v1207
        %v1301 = vmul.f32 %v1283, %v1207
        %v1302 = vmul.f32 %v1285, %v1207
        %v1303 = vmul.f32 %v1287, %v1207
        %v1304 = vadd.f32 %v1288, 1e-05
        %v1305 = vadd.f32 %v1289, 1e-05
        %v1306 = vadd.f32 %v1290, 1e-05
        %v1307 = vadd.f32 %v1291, 1e-05
        %v1308 = vadd.f32 %v1292, 1e-05
        %v1309 = vadd.f32 %v1293, 1e-05
        %v1310 = vadd.f32 %v1294, 1e-05
        %v1311 = vadd.f32 %v1295, 1e-05
        %v1312 = vadd.f32 %v1296, 1e-05
        %v1313 = vadd.f32 %v1297, 1e-05
        %v1314 = vadd.f32 %v1298, 1e-05
        %v1315 = vadd.f32 %v1299, 1e-05
        %v1316 = vadd.f32 %v1300, 1e-05
        %v1317 = vadd.f32 %v1301, 1e-05
        %v1318 = vadd.f32 %v1302, 1e-05
        %v1319 = vadd.f32 %v1303, 1e-05
        %v1320 = vrsqrt.pop %v1304
        %v1321 = vmul.f32 %v1320, %v1304
        %v1322 = vmul.f32 %v1321, %v1320
        %v1323 = vmul.f32 0.5, %v1322
        %v1324 = vsub.f32 1.5, %v1323
        %v1325 = vmul.f32 %v1320, %v1324
        %vm1326 = vweird.f32 %v1304
        %vm1327 = vweird.f32 %v1320
        %vm1328 = vmor %vm1326, %vm1327
        %v1329 = vsel %vm1328, %v1320, %v1325
        %v1330 = vrsqrt.pop %v1305
        %v1331 = vmul.f32 %v1330, %v1305
        %v1332 = vmul.f32 %v1331, %v1330
        %v1333 = vmul.f32 0.5, %v1332
        %v1334 = vsub.f32 1.5, %v1333
        %v1335 = vmul.f32 %v1330, %v1334
        %vm1336 = vweird.f32 %v1305
        %vm1337 = vweird.f32 %v1330
        %vm1338 = vmor %vm1336, %vm1337
        %v1339 = vsel %vm1338, %v1330, %v1335
        %v1340 = vrsqrt.pop %v1306
        %v1341 = vmul.f32 %v1340, %v1306
        %v1342 = vmul.f32 %v1341, %v1340
        %v1343 = vmul.f32 0.5, %v1342
        %v1344 = vsub.f32 1.5, %v1343
        %v1345 = vmul.f32 %v1340, %v1344
        %vm1346 = vweird.f32 %v1306
        %vm1347 = vweird.f32 %v1340
        %vm1348 = vmor %vm1346, %vm1347
        %v1349 = vsel %vm1348, %v1340, %v1345
        %v1350 = vrsqrt.pop %v1307
        %v1351 = vmul.f32 %v1350, %v1307
        %v1352 = vmul.f32 %v1351, %v1350
        %v1353 = vmul.f32 0.5, %v1352
        %v1354 = vsub.f32 1.5, %v1353
        %v1355 = vmul.f32 %v1350, %v1354
        %vm1356 = vweird.f32 %v1307
        %vm1357 = vweird.f32 %v1350
        %vm1358 = vmor %vm1356, %vm1357
        %v1359 = vsel %vm1358, %v1350, %v1355
        %v1360 = vrsqrt.pop %v1308
        %v1361 = vmul.f32 %v1360, %v1308
        %v1362 = vmul.f32 %v1361, %v1360
        %v1363 = vmul.f32 0.5, %v1362
        %v1364 = vsub.f32 1.5, %v1363
        %v1365 = vmul.f32 %v1360, %v1364
        %vm1366 = vweird.f32 %v1308
        %vm1367 = vweird.f32 %v1360
        %vm1368 = vmor %vm1366, %vm1367
        %v1369 = vsel %vm1368, %v1360, %v1365
        %v1370 = vrsqrt.pop %v1309
        %v1371 = vmul.f32 %v1370, %v1309
        %v1372 = vmul.f32 %v1371, %v1370
        %v1373 = vmul.f32 0.5, %v1372
        %v1374 = vsub.f32 1.5, %v1373
        %v1375 = vmul.f32 %v1370, %v1374
        %vm1376 = vweird.f32 %v1309
        %vm1377 = vweird.f32 %v1370
        %vm1378 = vmor %vm1376, %vm1377
        %v1379 = vsel %vm1378, %v1370, %v1375
        %v1380 = vrsqrt.pop %v1310
        %v1381 = vmul.f32 %v1380, %v1310
        %v1382 = vmul.f32 %v1381, %v1380
        %v1383 = vmul.f32 0.5, %v1382
        %v1384 = vsub.f32 1.5, %v1383
        %v1385 = vmul.f32 %v1380, %v1384
        %vm1386 = vweird.f32 %v1310
        %vm1387 = vweird.f32 %v1380
        %vm1388 = vmor %vm1386, %vm1387
        %v1389 = vsel %vm1388, %v1380, %v1385
        %v1390 = vrsqrt.pop %v1311
        %v1391 = vmul.f32 %v1390, %v1311
        %v1392 = vmul.f32 %v1391, %v1390
        %v1393 = vmul.f32 0.5, %v1392
        %v1394 = vsub.f32 1.5, %v1393
        %v1395 = vmul.f32 %v1390, %v1394
        %vm1396 = vweird.f32 %v1311
        %vm1397 = vweird.f32 %v1390
        %vm1398 = vmor %vm1396, %vm1397
        %v1399 = vsel %vm1398, %v1390, %v1395
        %v1400 = vrsqrt.pop %v1312
        %v1401 = vmul.f32 %v1400, %v1312
        %v1402 = vmul.f32 %v1401, %v1400
        %v1403 = vmul.f32 0.5, %v1402
        %v1404 = vsub.f32 1.5, %v1403
        %v1405 = vmul.f32 %v1400, %v1404
        %vm1406 = vweird.f32 %v1312
        %vm1407 = vweird.f32 %v1400
        %vm1408 = vmor %vm1406, %vm1407
        %v1409 = vsel %vm1408, %v1400, %v1405
        %v1410 = vrsqrt.pop %v1313
        %v1411 = vmul.f32 %v1410, %v1313
        %v1412 = vmul.f32 %v1411, %v1410
        %v1413 = vmul.f32 0.5, %v1412
        %v1414 = vsub.f32 1.5, %v1413
        %v1415 = vmul.f32 %v1410, %v1414
        %vm1416 = vweird.f32 %v1313
        %vm1417 = vweird.f32 %v1410
        %vm1418 = vmor %vm1416, %vm1417
        %v1419 = vsel %vm1418, %v1410, %v1415
        %v1420 = vrsqrt.pop %v1314
        %v1421 = vmul.f32 %v1420, %v1314
        %v1422 = vmul.f32 %v1421, %v1420
        %v1423 = vmul.f32 0.5, %v1422
        %v1424 = vsub.f32 1.5, %v1423
        %v1425 = vmul.f32 %v1420, %v1424
        %vm1426 = vweird.f32 %v1314
        %vm1427 = vweird.f32 %v1420
        %vm1428 = vmor %vm1426, %vm1427
        %v1429 = vsel %vm1428, %v1420, %v1425
        %v1430 = vrsqrt.pop %v1315
        %v1431 = vmul.f32 %v1430, %v1315
        %v1432 = vmul.f32 %v1431, %v1430
        %v1433 = vmul.f32 0.5, %v1432
        %v1434 = vsub.f32 1.5, %v1433
        %v1435 = vmul.f32 %v1430, %v1434
        %vm1436 = vweird.f32 %v1315
        %vm1437 = vweird.f32 %v1430
        %vm1438 = vmor %vm1436, %vm1437
        %v1439 = vsel %vm1438, %v1430, %v1435
        %v1440 = vrsqrt.pop %v1316
        %v1441 = vmul.f32 %v1440, %v1316
        %v1442 = vmul.f32 %v1441, %v1440
        %v1443 = vmul.f32 0.5, %v1442
        %v1444 = vsub.f32 1.5, %v1443
        %v1445 = vmul.f32 %v1440, %v1444
        %vm1446 = vweird.f32 %v1316
        %vm1447 = vweird.f32 %v1440
        %vm1448 = vmor %vm1446, %vm1447
        %v1449 = vsel %vm1448, %v1440, %v1445
        %v1450 = vrsqrt.pop %v1317
        %v1451 = vmul.f32 %v1450, %v1317
        %v1452 = vmul.f32 %v1451, %v1450
        %v1453 = vmul.f32 0.5, %v1452
        %v1454 = vsub.f32 1.5, %v1453
        %v1455 = vmul.f32 %v1450, %v1454
        %vm1456 = vweird.f32 %v1317
        %vm1457 = vweird.f32 %v1450
        %vm1458 = vmor %vm1456, %vm1457
        %v1459 = vsel %vm1458, %v1450, %v1455
        %v1460 = vrsqrt.pop %v1318
        %v1461 = vmul.f32 %v1460, %v1318
        %v1462 = vmul.f32 %v1461, %v1460
        %v1463 = vmul.f32 0.5, %v1462
        %v1464 = vsub.f32 1.5, %v1463
        %v1465 = vmul.f32 %v1460, %v1464
        %vm1466 = vweird.f32 %v1318
        %vm1467 = vweird.f32 %v1460
        %vm1468 = vmor %vm1466, %vm1467
        %v1469 = vsel %vm1468, %v1460, %v1465
        %v1470 = vrsqrt.pop %v1319
        %v1471 = vmul.f32 %v1470, %v1319
        %v1472 = vmul.f32 %v1471, %v1470
        %v1473 = vmul.f32 0.5, %v1472
        %v1474 = vsub.f32 1.5, %v1473
        %v1475 = vmul.f32 %v1470, %v1474
        %vm1476 = vweird.f32 %v1319
        %vm1477 = vweird.f32 %v1470
        %vm1478 = vmor %vm1476, %vm1477
        %v1479 = vsel %vm1478, %v1470, %v1475
        %v1480 = vmul.f32 %v1224, %v1329
        %v1481 = vmul.f32 %v1225, %v1339
        %v1482 = vmul.f32 %v1226, %v1349
        %v1483 = vmul.f32 %v1227, %v1359
        %v1484 = vmul.f32 %v1228, %v1369
        %v1485 = vmul.f32 %v1229, %v1379
        %v1486 = vmul.f32 %v1230, %v1389
        %v1487 = vmul.f32 %v1231, %v1399
        %v1488 = vmul.f32 %v1232, %v1409
        %v1489 = vmul.f32 %v1233, %v1419
        %v1490 = vmul.f32 %v1234, %v1429
        %v1491 = vmul.f32 %v1235, %v1439
        %v1492 = vmul.f32 %v1236, %v1449
        %v1493 = vmul.f32 %v1237, %v1459
        %v1494 = vmul.f32 %v1238, %v1469
        %v1495 = vmul.f32 %v1239, %v1479
        %v1496 = vperm.slane %v906, 0
        %v1497 = vmul.f32 %v1480, %v1496
        %v1498 = vmul.f32 %v1481, %v1496
        %v1499 = vmul.f32 %v1482, %v1496
        %v1500 = vmul.f32 %v1483, %v1496
        %v1501 = vmul.f32 %v1484, %v1496
        %v1502 = vmul.f32 %v1485, %v1496
        %v1503 = vmul.f32 %v1486, %v1496
        %v1504 = vmul.f32 %v1487, %v1496
        %v1505 = vmul.f32 %v1488, %v1496
        %v1506 = vmul.f32 %v1489, %v1496
        %v1507 = vmul.f32 %v1490, %v1496
        %v1508 = vmul.f32 %v1491, %v1496
        %v1509 = vmul.f32 %v1492, %v1496
        %v1510 = vmul.f32 %v1493, %v1496
        %v1511 = vmul.f32 %v1494, %v1496
        %v1512 = vmul.f32 %v1495, %v1496
        %v1513 = vperm.slane %v907, 0
        %v1514 = vadd.f32 %v1497, %v1513
        %v1515 = vadd.f32 %v1498, %v1513
        %v1516 = vadd.f32 %v1499, %v1513
        %v1517 = vadd.f32 %v1500, %v1513
        %v1518 = vadd.f32 %v1501, %v1513
        %v1519 = vadd.f32 %v1502, %v1513
        %v1520 = vadd.f32 %v1503, %v1513
        %v1521 = vadd.f32 %v1504, %v1513
        %v1522 = vadd.f32 %v1505, %v1513
        %v1523 = vadd.f32 %v1506, %v1513
        %v1524 = vadd.f32 %v1507, %v1513
        %v1525 = vadd.f32 %v1508, %v1513
        %v1526 = vadd.f32 %v1509, %v1513
        %v1527 = vadd.f32 %v1510, %v1513
        %v1528 = vadd.f32 %v1511, %v1513
        %v1529 = vadd.f32 %v1512, %v1513
        %v1530 = vld [vmem:[#allocation22] sm:$0xff]
        %v1531 = vld [vmem:[#allocation22 + $0x8] sm:$0xff]
        %v1532 = vld [vmem:[#allocation22 + $0x10] sm:$0xff]
        %v1533 = vld [vmem:[#allocation22 + $0x18] sm:$0xff]
        %v1534 = vld [vmem:[#allocation22 + $0x20] sm:$0xff]
        %v1535 = vld [vmem:[#allocation22 + $0x28] sm:$0xff]
        %v1536 = vld [vmem:[#allocation22 + $0x30] sm:$0xff]
        %v1537 = vld [vmem:[#allocation22 + $0x38] sm:$0xff]
        %v1538 = vld [vmem:[#allocation23] sm:$0xf]
        %v1539 = vld [vmem:[#allocation23 + $0x4] sm:$0xf]
        %v1540 = vld [vmem:[#allocation23 + $0x8] sm:$0xf]
        %v1541 = vld [vmem:[#allocation23 + $0xc] sm:$0xf]
        %v1542 = vld [vmem:[#allocation23 + $0x10] sm:$0xf]
        %v1543 = vld [vmem:[#allocation23 + $0x14] sm:$0xf]
        %v1544 = vld [vmem:[#allocation23 + $0x18] sm:$0xf]
        %v1545 = vld [vmem:[#allocation23 + $0x1c] sm:$0xf]
        %v1546 = vld [vmem:[#allocation23 + $0x20] sm:$0xf]
        %v1547 = vld [vmem:[#allocation23 + $0x24] sm:$0xf]
        %v1548 = vld [vmem:[#allocation23 + $0x28] sm:$0xf]
        %v1549 = vld [vmem:[#allocation23 + $0x2c] sm:$0xf]
        %v1550 = vld [vmem:[#allocation23 + $0x30] sm:$0xf]
        %v1551 = vld [vmem:[#allocation23 + $0x34] sm:$0xf]
        %v1552 = vld [vmem:[#allocation23 + $0x38] sm:$0xf]
        %v1553 = vld [vmem:[#allocation23 + $0x3c] sm:$0xf]
        %v1554 = vpack.c.bf16 %v1515, %v1514
        %v1555 = vpack.c.bf16 %v1517, %v1516
        %v1556 = vpack.c.bf16 %v1519, %v1518
        %v1557 = vpack.c.bf16 %v1521, %v1520
        %v1558 = vpack.c.bf16 %v1523, %v1522
        %v1559 = vpack.c.bf16 %v1525, %v1524
        %v1560 = vpack.c.bf16 %v1527, %v1526
        %v1561 = vpack.c.bf16 %v1529, %v1528
        %v1562 = vld [vmem:[%s15] sm:$0x1]
        %v1564 = vperm.slane %v1562, 0
        %v1582 = vunpack.c.l.b16 %v1538
        %v1583 = vunpack.c.l.b16 %v1539
        %v1584 = vunpack.c.l.b16 %v1540
        %v1585 = vunpack.c.l.b16 %v1541
        %v1586 = vunpack.c.l.b16 %v1542
        %v1587 = vunpack.c.l.b16 %v1543
        %v1588 = vunpack.c.l.b16 %v1544
        %v1589 = vunpack.c.l.b16 %v1545
        %v1590 = vunpack.c.l.b16 %v1546
        %v1591 = vunpack.c.l.b16 %v1547
        %v1592 = vunpack.c.l.b16 %v1548
        %v1593 = vunpack.c.l.b16 %v1549
        %v1594 = vunpack.c.l.b16 %v1550
        %v1595 = vunpack.c.l.b16 %v1551
        %v1596 = vunpack.c.l.b16 %v1552
        %v1597 = vunpack.c.l.b16 %v1553
        %v1598 = vpack.c.b16 %v1583, %v1582
        %v1599 = vpack.c.b16 %v1585, %v1584
        %v1600 = vpack.c.b16 %v1587, %v1586
        %v1601 = vpack.c.b16 %v1589, %v1588
        %v1602 = vpack.c.b16 %v1591, %v1590
        %v1603 = vpack.c.b16 %v1593, %v1592
        %v1604 = vpack.c.b16 %v1595, %v1594
        %v1605 = vpack.c.b16 %v1597, %v1596
        %1614 = vmatpush.bf16.msra.mxu0 %v1605
        %1615 = vmatpush.bf16.msra.mxu0 %v1604
        %1616 = vmatpush.bf16.msra.mxu0 %v1603
        %1617 = vmatpush.bf16.msra.mxu0 %v1602
        %1618 = vmatpush.bf16.msra.mxu0 %v1601
        %1619 = vmatpush.bf16.msra.mxu0 %v1600
        %1620 = vmatpush.bf16.msra.mxu0 %v1599
        %1621 = vmatpush.bf16.msra.mxu0 %v1598
        %1622 = vmatmul.bf16.gmra.mxu0 %v1554
        %v1623 = vpop.f32.mrf.mxu0
        %v1624 = vadd.f32 %v1564, %v1623
        %v1625 = vpop.f32.mrf.mxu0
        %v1626 = vadd.f32 %v1564, %v1625
        %1627 = vmatmul.bf16.gmra.mxu0 %v1555
        %v1628 = vpop.f32.mrf.mxu0
        %v1629 = vadd.f32 %v1564, %v1628
        %v1630 = vpop.f32.mrf.mxu0
        %v1631 = vadd.f32 %v1564, %v1630
        %1632 = vmatmul.bf16.gmra.mxu0 %v1556
        %v1633 = vpop.f32.mrf.mxu0
        %v1634 = vadd.f32 %v1564, %v1633
        %v1635 = vpop.f32.mrf.mxu0
        %v1636 = vadd.f32 %v1564, %v1635
        %1637 = vmatmul.bf16.gmra.mxu0 %v1557
        %v1638 = vpop.f32.mrf.mxu0
        %v1639 = vadd.f32 %v1564, %v1638
        %v1640 = vpop.f32.mrf.mxu0
        %v1641 = vadd.f32 %v1564, %v1640
        %1642 = vmatmul.bf16.gmra.mxu0 %v1558
        %v1643 = vpop.f32.mrf.mxu0
        %v1644 = vadd.f32 %v1564, %v1643
        %v1645 = vpop.f32.mrf.mxu0
        %v1646 = vadd.f32 %v1564, %v1645
        %1647 = vmatmul.bf16.gmra.mxu0 %v1559
        %v1648 = vpop.f32.mrf.mxu0
        %v1649 = vadd.f32 %v1564, %v1648
        %v1650 = vpop.f32.mrf.mxu0
        %v1651 = vadd.f32 %v1564, %v1650
        %1652 = vmatmul.bf16.gmra.mxu0 %v1560
        %v1653 = vpop.f32.mrf.mxu0
        %v1654 = vadd.f32 %v1564, %v1653
        %v1655 = vpop.f32.mrf.mxu0
        %v1656 = vadd.f32 %v1564, %v1655
        %1657 = vmatmul.bf16.gmra.mxu0 %v1561
        %v1658 = vpop.f32.mrf.mxu0
        %v1659 = vadd.f32 %v1564, %v1658
        %v1660 = vpop.f32.mrf.mxu0
        %v1661 = vadd.f32 %v1564, %v1660
        %1662 = vdwg.mxu0
        %1663 = vmatpush.xpose.msra.mxu0 0.0
        %1664 = vmatpush.xpose.msra.mxu0 0.0
        %1665 = vmatpush.xpose.msra.mxu0 0.0
        %1666 = vmatpush.xpose.msra.mxu0 0.0
        %1667 = vmatpush.xpose.msra.mxu0 0.0
        %1668 = vmatpush.xpose.msra.mxu0 0.0
        %1669 = vmatpush.xpose.msra.mxu0 0.0
        %1670 = vmatpush.xpose.msra.mxu0 0.0
        %1671 = vmatpush.xpose.msra.mxu0 %v1537
        %1672 = vmatpush.xpose.msra.mxu0 %v1536
        %1673 = vmatpush.xpose.msra.mxu0 %v1535
        %1674 = vmatpush.xpose.msra.mxu0 %v1534
        %1675 = vmatpush.xpose.msra.mxu0 %v1533
        %1676 = vmatpush.xpose.msra.mxu0 %v1532
        %1677 = vmatpush.xpose.msra.mxu0 %v1531
        %1678 = vmatpush.xpose.msra.mxu0 %v1530
        %1679 = vmatmul.f32.gmra.mxu0 %v1624
        %v1680 = vpop.f32.mrf.mxu0
        %v1681 = vadd.f32 0.0, %v1680
        %1682 = vmatmul.f32.gmra.mxu0 %v1626
        %v1683 = vpop.f32.mrf.mxu0
        %v1684 = vadd.f32 0.0, %v1683
        %1685 = vmatmul.f32.gmra.mxu0 %v1629
        %v1686 = vpop.f32.mrf.mxu0
        %v1687 = vadd.f32 0.0, %v1686
        %1688 = vmatmul.f32.gmra.mxu0 %v1631
        %v1689 = vpop.f32.mrf.mxu0
        %v1690 = vadd.f32 0.0, %v1689
        %1691 = vmatmul.f32.gmra.mxu0 %v1634
        %v1692 = vpop.f32.mrf.mxu0
        %v1693 = vadd.f32 0.0, %v1692
        %1694 = vmatmul.f32.gmra.mxu0 %v1636
        %v1695 = vpop.f32.mrf.mxu0
        %v1696 = vadd.f32 0.0, %v1695
        %1697 = vmatmul.f32.gmra.mxu0 %v1639
        %v1698 = vpop.f32.mrf.mxu0
        %v1699 = vadd.f32 0.0, %v1698
        %1700 = vmatmul.f32.gmra.mxu0 %v1641
        %v1701 = vpop.f32.mrf.mxu0
        %v1702 = vadd.f32 0.0, %v1701
        %1703 = vmatmul.f32.gmra.mxu0 %v1644
        %v1704 = vpop.f32.mrf.mxu0
        %v1705 = vadd.f32 0.0, %v1704
        %1706 = vmatmul.f32.gmra.mxu0 %v1646
        %v1707 = vpop.f32.mrf.mxu0
        %v1708 = vadd.f32 0.0, %v1707
        %1709 = vmatmul.f32.gmra.mxu0 %v1649
        %v1710 = vpop.f32.mrf.mxu0
        %v1711 = vadd.f32 0.0, %v1710
        %1712 = vmatmul.f32.gmra.mxu0 %v1651
        %v1713 = vpop.f32.mrf.mxu0
        %v1714 = vadd.f32 0.0, %v1713
        %1715 = vmatmul.f32.gmra.mxu0 %v1654
        %v1716 = vpop.f32.mrf.mxu0
        %v1717 = vadd.f32 0.0, %v1716
        %1718 = vmatmul.f32.gmra.mxu0 %v1656
        %v1719 = vpop.f32.mrf.mxu0
        %v1720 = vadd.f32 0.0, %v1719
        %1721 = vmatmul.f32.gmra.mxu0 %v1659
        %v1722 = vpop.f32.mrf.mxu0
        %v1723 = vadd.f32 0.0, %v1722
        %1724 = vmatmul.f32.gmra.mxu0 %v1661
        %v1725 = vpop.f32.mrf.mxu0
        %v1726 = vadd.f32 0.0, %v1725
        %1727 = vdwg.mxu0
        %v1728 = vmul.f32 %v1681, 0.088388346
        %v1729 = vmul.f32 %v1684, 0.088388346
        %v1730 = vmul.f32 %v1687, 0.088388346
        %v1731 = vmul.f32 %v1690, 0.088388346
        %v1732 = vmul.f32 %v1693, 0.088388346
        %v1733 = vmul.f32 %v1696, 0.088388346
        %v1734 = vmul.f32 %v1699, 0.088388346
        %v1735 = vmul.f32 %v1702, 0.088388346
        %v1736 = vmul.f32 %v1705, 0.088388346
        %v1737 = vmul.f32 %v1708, 0.088388346
        %v1738 = vmul.f32 %v1711, 0.088388346
        %v1739 = vmul.f32 %v1714, 0.088388346
        %v1740 = vmul.f32 %v1717, 0.088388346
        %v1741 = vmul.f32 %v1720, 0.088388346
        %v1742 = vmul.f32 %v1723, 0.088388346
        %v1743 = vmul.f32 %v1726, 0.088388346
        %vm1744 = vcmask 523264
        %v1745 = vsel %vm1744, %v1728, -inf
        %1746 = vmax.xlane.f32.xlu0 %v1745
        %v1747 = vpop.xlane.xlu0 %1746
        %v1748 = vsel %vm1744, %v1729, -inf
        %1749 = vmax.xlane.f32.xlu0 %v1748
        %v1750 = vpop.xlane.xlu0 %1749
        %v1751 = vsel %vm1744, %v1730, -inf
        %1752 = vmax.xlane.f32.xlu0 %v1751
        %v1753 = vpop.xlane.xlu0 %1752
        %v1754 = vsel %vm1744, %v1731, -inf
        %1755 = vmax.xlane.f32.xlu0 %v1754
        %v1756 = vpop.xlane.xlu0 %1755
        %v1757 = vsel %vm1744, %v1732, -inf
        %1758 = vmax.xlane.f32.xlu0 %v1757
        %v1759 = vpop.xlane.xlu0 %1758
        %v1760 = vsel %vm1744, %v1733, -inf
        %1761 = vmax.xlane.f32.xlu0 %v1760
        %v1762 = vpop.xlane.xlu0 %1761
        %v1763 = vsel %vm1744, %v1734, -inf
        %1764 = vmax.xlane.f32.xlu0 %v1763
        %v1765 = vpop.xlane.xlu0 %1764
        %v1766 = vsel %vm1744, %v1735, -inf
        %1767 = vmax.xlane.f32.xlu0 %v1766
        %v1768 = vpop.xlane.xlu0 %1767
        %v1769 = vsel %vm1744, %v1736, -inf
        %1770 = vmax.xlane.f32.xlu0 %v1769
        %v1771 = vpop.xlane.xlu0 %1770
        %v1772 = vsel %vm1744, %v1737, -inf
        %1773 = vmax.xlane.f32.xlu0 %v1772
        %v1774 = vpop.xlane.xlu0 %1773
        %v1775 = vsel %vm1744, %v1738, -inf
        %1776 = vmax.xlane.f32.xlu0 %v1775
        %v1777 = vpop.xlane.xlu0 %1776
        %v1778 = vsel %vm1744, %v1739, -inf
        %1779 = vmax.xlane.f32.xlu0 %v1778
        %v1780 = vpop.xlane.xlu0 %1779
        %v1781 = vsel %vm1744, %v1740, -inf
        %1782 = vmax.xlane.f32.xlu0 %v1781
        %v1783 = vpop.xlane.xlu0 %1782
        %v1784 = vsel %vm1744, %v1741, -inf
        %1785 = vmax.xlane.f32.xlu0 %v1784
        %v1786 = vpop.xlane.xlu0 %1785
        %v1787 = vsel %vm1744, %v1742, -inf
        %1788 = vmax.xlane.f32.xlu0 %v1787
        %v1789 = vpop.xlane.xlu0 %1788
        %v1790 = vsel %vm1744, %v1743, -inf
        %1791 = vmax.xlane.f32.xlu0 %v1790
        %v1792 = vpop.xlane.xlu0 %1791
        %v1793 = vsub.f32 %v1728, %v1747
        %v1794 = vsub.f32 %v1729, %v1750
        %v1795 = vsub.f32 %v1730, %v1753
        %v1796 = vsub.f32 %v1731, %v1756
        %v1797 = vsub.f32 %v1732, %v1759
        %v1798 = vsub.f32 %v1733, %v1762
        %v1799 = vsub.f32 %v1734, %v1765
        %v1800 = vsub.f32 %v1735, %v1768
        %v1801 = vsub.f32 %v1736, %v1771
        %v1802 = vsub.f32 %v1737, %v1774
        %v1803 = vsub.f32 %v1738, %v1777
        %v1804 = vsub.f32 %v1739, %v1780
        %v1805 = vsub.f32 %v1740, %v1783
        %v1806 = vsub.f32 %v1741, %v1786
        %v1807 = vsub.f32 %v1742, %v1789
        %v1808 = vsub.f32 %v1743, %v1792
        %v1809 = vmul.f32 %v1793, 1.442695
        %v1810 = vpow.pop %v1809
        %v1811 = vmul.f32 %v1794, 1.442695
        %v1812 = vpow.pop %v1811
        %v1813 = vmul.f32 %v1795, 1.442695
        %v1814 = vpow.pop %v1813
        %v1815 = vmul.f32 %v1796, 1.442695
        %v1816 = vpow.pop %v1815
        %v1817 = vmul.f32 %v1797, 1.442695
        %v1818 = vpow.pop %v1817
        %v1819 = vmul.f32 %v1798, 1.442695
        %v1820 = vpow.pop %v1819
        %v1821 = vmul.f32 %v1799, 1.442695
        %v1822 = vpow.pop %v1821
        %v1823 = vmul.f32 %v1800, 1.442695
        %v1824 = vpow.pop %v1823
        %v1825 = vmul.f32 %v1801, 1.442695
        %v1826 = vpow.pop %v1825
        %v1827 = vmul.f32 %v1802, 1.442695
        %v1828 = vpow.pop %v1827
        %v1829 = vmul.f32 %v1803, 1.442695
        %v1830 = vpow.pop %v1829
        %v1831 = vmul.f32 %v1804, 1.442695
        %v1832 = vpow.pop %v1831
        %v1833 = vmul.f32 %v1805, 1.442695
        %v1834 = vpow.pop %v1833
        %v1835 = vmul.f32 %v1806, 1.442695
        %v1836 = vpow.pop %v1835
        %v1837 = vmul.f32 %v1807, 1.442695
        %v1838 = vpow.pop %v1837
        %v1839 = vmul.f32 %v1808, 1.442695
        %v1840 = vpow.pop %v1839
        %v1841 = vsel %vm1744, %v1810, 0.0
        %1842 = vadd.xlane.f32.xlu0 %v1841
        %v1843 = vpop.xlane.xlu0 %1842
        %v1844 = vsel %vm1744, %v1812, 0.0
        %1845 = vadd.xlane.f32.xlu0 %v1844
        %v1846 = vpop.xlane.xlu0 %1845
        %v1847 = vsel %vm1744, %v1814, 0.0
        %1848 = vadd.xlane.f32.xlu0 %v1847
        %v1849 = vpop.xlane.xlu0 %1848
        %v1850 = vsel %vm1744, %v1816, 0.0
        %1851 = vadd.xlane.f32.xlu0 %v1850
        %v1852 = vpop.xlane.xlu0 %1851
        %v1853 = vsel %vm1744, %v1818, 0.0
        %1854 = vadd.xlane.f32.xlu0 %v1853
        %v1855 = vpop.xlane.xlu0 %1854
        %v1856 = vsel %vm1744, %v1820, 0.0
        %1857 = vadd.xlane.f32.xlu0 %v1856
        %v1858 = vpop.xlane.xlu0 %1857
        %v1859 = vsel %vm1744, %v1822, 0.0
        %1860 = vadd.xlane.f32.xlu0 %v1859
        %v1861 = vpop.xlane.xlu0 %1860
        %v1862 = vsel %vm1744, %v1824, 0.0
        %1863 = vadd.xlane.f32.xlu0 %v1862
        %v1864 = vpop.xlane.xlu0 %1863
        %v1865 = vsel %vm1744, %v1826, 0.0
        %1866 = vadd.xlane.f32.xlu0 %v1865
        %v1867 = vpop.xlane.xlu0 %1866
        %v1868 = vsel %vm1744, %v1828, 0.0
        %1869 = vadd.xlane.f32.xlu0 %v1868
        %v1870 = vpop.xlane.xlu0 %1869
        %v1871 = vsel %vm1744, %v1830, 0.0
        %1872 = vadd.xlane.f32.xlu0 %v1871
        %v1873 = vpop.xlane.xlu0 %1872
        %v1874 = vsel %vm1744, %v1832, 0.0
        %1875 = vadd.xlane.f32.xlu0 %v1874
        %v1876 = vpop.xlane.xlu0 %1875
        %v1877 = vsel %vm1744, %v1834, 0.0
        %1878 = vadd.xlane.f32.xlu0 %v1877
        %v1879 = vpop.xlane.xlu0 %1878
        %v1880 = vsel %vm1744, %v1836, 0.0
        %1881 = vadd.xlane.f32.xlu0 %v1880
        %v1882 = vpop.xlane.xlu0 %1881
        %v1883 = vsel %vm1744, %v1838, 0.0
        %1884 = vadd.xlane.f32.xlu0 %v1883
        %v1885 = vpop.xlane.xlu0 %1884
        %v1886 = vsel %vm1744, %v1840, 0.0
        %1887 = vadd.xlane.f32.xlu0 %v1886
        %v1888 = vpop.xlane.xlu0 %1887
        %v1889 = vrcp.pop %v1843
        %v1890 = vrcp.pop %v1846
        %v1891 = vrcp.pop %v1849
        %v1892 = vrcp.pop %v1852
        %v1893 = vrcp.pop %v1855
        %v1894 = vrcp.pop %v1858
        %v1895 = vrcp.pop %v1861
        %v1896 = vrcp.pop %v1864
        %v1897 = vrcp.pop %v1867
        %v1898 = vrcp.pop %v1870
        %v1899 = vrcp.pop %v1873
        %v1900 = vrcp.pop %v1876
        %v1901 = vrcp.pop %v1879
        %v1902 = vrcp.pop %v1882
        %v1903 = vrcp.pop %v1885
        %v1904 = vrcp.pop %v1888
        %v1905 = vmul.f32 %v1810, %v1889
        %v1906 = vmul.f32 %v1812, %v1890
        %v1907 = vmul.f32 %v1814, %v1891
        %v1908 = vmul.f32 %v1816, %v1892
        %v1909 = vmul.f32 %v1818, %v1893
        %v1910 = vmul.f32 %v1820, %v1894
        %v1911 = vmul.f32 %v1822, %v1895
        %v1912 = vmul.f32 %v1824, %v1896
        %v1913 = vmul.f32 %v1826, %v1897
        %v1914 = vmul.f32 %v1828, %v1898
        %v1915 = vmul.f32 %v1830, %v1899
        %v1916 = vmul.f32 %v1832, %v1900
        %v1917 = vmul.f32 %v1834, %v1901
        %v1918 = vmul.f32 %v1836, %v1902
        %v1919 = vmul.f32 %v1838, %v1903
        %v1920 = vmul.f32 %v1840, %v1904
        %v1922 = vsel %vm1744, %v1905, 0
        %v1925 = vsel %vm1744, %v1906, 0
        %v1928 = vsel %vm1744, %v1907, 0
        %v1931 = vsel %vm1744, %v1908, 0
        %v1934 = vsel %vm1744, %v1909, 0
        %v1937 = vsel %vm1744, %v1910, 0
        %v1940 = vsel %vm1744, %v1911, 0
        %v1943 = vsel %vm1744, %v1912, 0
        %v1946 = vsel %vm1744, %v1913, 0
        %v1949 = vsel %vm1744, %v1914, 0
        %v1952 = vsel %vm1744, %v1915, 0
        %v1955 = vsel %vm1744, %v1916, 0
        %v1958 = vsel %vm1744, %v1917, 0
        %v1961 = vsel %vm1744, %v1918, 0
        %v1964 = vsel %vm1744, %v1919, 0
        %v1967 = vsel %vm1744, %v1920, 0
        %1969 = vmatpush.msra.mxu0 0.0
        %1970 = vmatpush.msra.mxu0 0.0
        %1971 = vmatpush.msra.mxu0 0.0
        %1972 = vmatpush.msra.mxu0 0.0
        %1973 = vmatpush.msra.mxu0 0.0
        %1974 = vmatpush.msra.mxu0 0.0
        %1975 = vmatpush.msra.mxu0 0.0
        %1976 = vmatpush.msra.mxu0 0.0
        %1977 = vmatpush.msra.mxu0 %v1537
        %1978 = vmatpush.msra.mxu0 %v1536
        %1979 = vmatpush.msra.mxu0 %v1535
        %1980 = vmatpush.msra.mxu0 %v1534
        %1981 = vmatpush.msra.mxu0 %v1533
        %1982 = vmatpush.msra.mxu0 %v1532
        %1983 = vmatpush.msra.mxu0 %v1531
        %1984 = vmatpush.msra.mxu0 %v1530
        %1985 = vmatmul.f32.gmra.mxu0 %v1922
        %v1986 = vpop.f32.mrf.mxu0
        %v1987 = vadd.f32 0.0, %v1986
        %1988 = vmatmul.f32.gmra.mxu0 %v1925
        %v1989 = vpop.f32.mrf.mxu0
        %v1990 = vadd.f32 0.0, %v1989
        %1991 = vmatmul.f32.gmra.mxu0 %v1928
        %v1992 = vpop.f32.mrf.mxu0
        %v1993 = vadd.f32 0.0, %v1992
        %1994 = vmatmul.f32.gmra.mxu0 %v1931
        %v1995 = vpop.f32.mrf.mxu0
        %v1996 = vadd.f32 0.0, %v1995
        %1997 = vmatmul.f32.gmra.mxu0 %v1934
        %v1998 = vpop.f32.mrf.mxu0
        %v1999 = vadd.f32 0.0, %v1998
        %2000 = vmatmul.f32.gmra.mxu0 %v1937
        %v2001 = vpop.f32.mrf.mxu0
        %v2002 = vadd.f32 0.0, %v2001
        %2003 = vmatmul.f32.gmra.mxu0 %v1940
        %v2004 = vpop.f32.mrf.mxu0
        %v2005 = vadd.f32 0.0, %v2004
        %2006 = vmatmul.f32.gmra.mxu0 %v1943
        %v2007 = vpop.f32.mrf.mxu0
        %v2008 = vadd.f32 0.0, %v2007
        %2009 = vmatmul.f32.gmra.mxu0 %v1946
        %v2010 = vpop.f32.mrf.mxu0
        %v2011 = vadd.f32 0.0, %v2010
        %2012 = vmatmul.f32.gmra.mxu0 %v1949
        %v2013 = vpop.f32.mrf.mxu0
        %v2014 = vadd.f32 0.0, %v2013
        %2015 = vmatmul.f32.gmra.mxu0 %v1952
        %v2016 = vpop.f32.mrf.mxu0
        %v2017 = vadd.f32 0.0, %v2016
        %2018 = vmatmul.f32.gmra.mxu0 %v1955
        %v2019 = vpop.f32.mrf.mxu0
        %v2020 = vadd.f32 0.0, %v2019
        %2021 = vmatmul.f32.gmra.mxu0 %v1958
        %v2022 = vpop.f32.mrf.mxu0
        %v2023 = vadd.f32 0.0, %v2022
        %2024 = vmatmul.f32.gmra.mxu0 %v1961
        %v2025 = vpop.f32.mrf.mxu0
        %v2026 = vadd.f32 0.0, %v2025
        %2027 = vmatmul.f32.gmra.mxu0 %v1964
        %v2028 = vpop.f32.mrf.mxu0
        %v2029 = vadd.f32 0.0, %v2028
        %2030 = vmatmul.f32.gmra.mxu0 %v1967
        %v2031 = vpop.f32.mrf.mxu0
        %v2032 = vadd.f32 0.0, %v2031
        %2033 = vdwg.mxu0
        %v2034 = vld [vmem:[#allocation25] sm:$0xff]
        %v2035 = vld [vmem:[#allocation25 + $0x8] sm:$0xff]
        %v2036 = vld [vmem:[#allocation25 + $0x10] sm:$0xff]
        %v2037 = vld [vmem:[#allocation25 + $0x18] sm:$0xff]
        %2038 = vmatpush.xpose.msra.mxu0 0.0
        %2039 = vmatpush.xpose.msra.mxu0 0.0
        %2040 = vmatpush.xpose.msra.mxu0 0.0
        %2041 = vmatpush.xpose.msra.mxu0 0.0
        %2042 = vmatpush.xpose.msra.mxu0 0.0
        %2043 = vmatpush.xpose.msra.mxu0 0.0
        %2044 = vmatpush.xpose.msra.mxu0 0.0
        %2045 = vmatpush.xpose.msra.mxu0 0.0
        %2046 = vmatpush.xpose.msra.mxu0 0.0
        %2047 = vmatpush.xpose.msra.mxu0 0.0
        %2048 = vmatpush.xpose.msra.mxu0 0.0
        %2049 = vmatpush.xpose.msra.mxu0 0.0
        %2050 = vmatpush.xpose.msra.mxu0 %v2037
        %2051 = vmatpush.xpose.msra.mxu0 %v2036
        %2052 = vmatpush.xpose.msra.mxu0 %v2035
        %2053 = vmatpush.xpose.msra.mxu0 %v2034
        %2054 = vmatmul.f32.gmra.mxu0 %v1514
        %v2055 = vpop.f32.mrf.mxu0
        %v2056 = vadd.f32 0.0, %v2055
        %2057 = vmatmul.f32.gmra.mxu0 %v1515
        %v2058 = vpop.f32.mrf.mxu0
        %v2059 = vadd.f32 0.0, %v2058
        %2060 = vmatmul.f32.gmra.mxu0 %v1516
        %v2061 = vpop.f32.mrf.mxu0
        %v2062 = vadd.f32 0.0, %v2061
        %2063 = vmatmul.f32.gmra.mxu0 %v1517
        %v2064 = vpop.f32.mrf.mxu0
        %v2065 = vadd.f32 0.0, %v2064
        %2066 = vmatmul.f32.gmra.mxu0 %v1518
        %v2067 = vpop.f32.mrf.mxu0
        %v2068 = vadd.f32 0.0, %v2067
        %2069 = vmatmul.f32.gmra.mxu0 %v1519
        %v2070 = vpop.f32.mrf.mxu0
        %v2071 = vadd.f32 0.0, %v2070
        %2072 = vmatmul.f32.gmra.mxu0 %v1520
        %v2073 = vpop.f32.mrf.mxu0
        %v2074 = vadd.f32 0.0, %v2073
        %2075 = vmatmul.f32.gmra.mxu0 %v1521
        %v2076 = vpop.f32.mrf.mxu0
        %v2077 = vadd.f32 0.0, %v2076
        %2078 = vmatmul.f32.gmra.mxu0 %v1522
        %v2079 = vpop.f32.mrf.mxu0
        %v2080 = vadd.f32 0.0, %v2079
        %2081 = vmatmul.f32.gmra.mxu0 %v1523
        %v2082 = vpop.f32.mrf.mxu0
        %v2083 = vadd.f32 0.0, %v2082
        %2084 = vmatmul.f32.gmra.mxu0 %v1524
        %v2085 = vpop.f32.mrf.mxu0
        %v2086 = vadd.f32 0.0, %v2085
        %2087 = vmatmul.f32.gmra.mxu0 %v1525
        %v2088 = vpop.f32.mrf.mxu0
        %v2089 = vadd.f32 0.0, %v2088
        %2090 = vmatmul.f32.gmra.mxu0 %v1526
        %v2091 = vpop.f32.mrf.mxu0
        %v2092 = vadd.f32 0.0, %v2091
        %2093 = vmatmul.f32.gmra.mxu0 %v1527
        %v2094 = vpop.f32.mrf.mxu0
        %v2095 = vadd.f32 0.0, %v2094
        %2096 = vmatmul.f32.gmra.mxu0 %v1528
        %v2097 = vpop.f32.mrf.mxu0
        %v2098 = vadd.f32 0.0, %v2097
        %2099 = vmatmul.f32.gmra.mxu0 %v1529
        %v2100 = vpop.f32.mrf.mxu0
        %v2101 = vadd.f32 0.0, %v2100
        %2102 = vdwg.mxu0
        %v2103 = vmul.f32 %v2056, 0.088388346
        %v2104 = vmul.f32 %v2059, 0.088388346
        %v2105 = vmul.f32 %v2062, 0.088388346
        %v2106 = vmul.f32 %v2065, 0.088388346
        %v2107 = vmul.f32 %v2068, 0.088388346
        %v2108 = vmul.f32 %v2071, 0.088388346
        %v2109 = vmul.f32 %v2074, 0.088388346
        %v2110 = vmul.f32 %v2077, 0.088388346
        %v2111 = vmul.f32 %v2080, 0.088388346
        %v2112 = vmul.f32 %v2083, 0.088388346
        %v2113 = vmul.f32 %v2086, 0.088388346
        %v2114 = vmul.f32 %v2089, 0.088388346
        %v2115 = vmul.f32 %v2092, 0.088388346
        %v2116 = vmul.f32 %v2095, 0.088388346
        %v2117 = vmul.f32 %v2098, 0.088388346
        %v2118 = vmul.f32 %v2101, 0.088388346
        %v2119 = vmul.f32 %v1514, %v1514
        %v2120 = vmul.f32 %v1515, %v1515
        %v2121 = vmul.f32 %v1516, %v1516
        %v2122 = vmul.f32 %v1517, %v1517
        %v2123 = vmul.f32 %v1518, %v1518
        %v2124 = vmul.f32 %v1519, %v1519
        %v2125 = vmul.f32 %v1520, %v1520
        %v2126 = vmul.f32 %v1521, %v1521
        %v2127 = vmul.f32 %v1522, %v1522
        %v2128 = vmul.f32 %v1523, %v1523
        %v2129 = vmul.f32 %v1524, %v1524
        %v2130 = vmul.f32 %v1525, %v1525
        %v2131 = vmul.f32 %v1526, %v1526
        %v2132 = vmul.f32 %v1527, %v1527
        %v2133 = vmul.f32 %v1528, %v1528
        %v2134 = vmul.f32 %v1529, %v1529
        %2135 = vadd.xlane.f32.xlu0 %v2119
        %v2136 = vpop.xlane.xlu0 %2135
        %2137 = vadd.xlane.f32.xlu0 %v2120
        %v2138 = vpop.xlane.xlu0 %2137
        %2139 = vadd.xlane.f32.xlu0 %v2121
        %v2140 = vpop.xlane.xlu0 %2139
        %2141 = vadd.xlane.f32.xlu0 %v2122
        %v2142 = vpop.xlane.xlu0 %2141
        %2143 = vadd.xlane.f32.xlu0 %v2123
        %v2144 = vpop.xlane.xlu0 %2143
        %2145 = vadd.xlane.f32.xlu0 %v2124
        %v2146 = vpop.xlane.xlu0 %2145
        %2147 = vadd.xlane.f32.xlu0 %v2125
        %v2148 = vpop.xlane.xlu0 %2147
        %2149 = vadd.xlane.f32.xlu0 %v2126
        %v2150 = vpop.xlane.xlu0 %2149
        %2151 = vadd.xlane.f32.xlu0 %v2127
        %v2152 = vpop.xlane.xlu0 %2151
        %2153 = vadd.xlane.f32.xlu0 %v2128
        %v2154 = vpop.xlane.xlu0 %2153
        %2155 = vadd.xlane.f32.xlu0 %v2129
        %v2156 = vpop.xlane.xlu0 %2155
        %2157 = vadd.xlane.f32.xlu0 %v2130
        %v2158 = vpop.xlane.xlu0 %2157
        %2159 = vadd.xlane.f32.xlu0 %v2131
        %v2160 = vpop.xlane.xlu0 %2159
        %2161 = vadd.xlane.f32.xlu0 %v2132
        %v2162 = vpop.xlane.xlu0 %2161
        %2163 = vadd.xlane.f32.xlu0 %v2133
        %v2164 = vpop.xlane.xlu0 %2163
        %2165 = vadd.xlane.f32.xlu0 %v2134
        %v2166 = vpop.xlane.xlu0 %2165
        %v2167 = vmul.f32 %v2136, 0.088388346
        %v2168 = vmul.f32 %v2138, 0.088388346
        %v2169 = vmul.f32 %v2140, 0.088388346
        %v2170 = vmul.f32 %v2142, 0.088388346
        %v2171 = vmul.f32 %v2144, 0.088388346
        %v2172 = vmul.f32 %v2146, 0.088388346
        %v2173 = vmul.f32 %v2148, 0.088388346
        %v2174 = vmul.f32 %v2150, 0.088388346
        %v2175 = vmul.f32 %v2152, 0.088388346
        %v2176 = vmul.f32 %v2154, 0.088388346
        %v2177 = vmul.f32 %v2156, 0.088388346
        %v2178 = vmul.f32 %v2158, 0.088388346
        %v2179 = vmul.f32 %v2160, 0.088388346
        %v2180 = vmul.f32 %v2162, 0.088388346
        %v2181 = vmul.f32 %v2164, 0.088388346
        %v2182 = vmul.f32 %v2166, 0.088388346
        %v2183 = vlaneseq
        %v2184 = vand.u32 %v2183, 127
        %vm2185 = vcmp.eq.s32.totalorder %v2184, 0
        %v2186 = vsel %vm2185, %v2167, %v2103
        %v2187 = vsel %vm2185, %v2168, %v2104
        %v2188 = vsel %vm2185, %v2169, %v2105
        %v2189 = vsel %vm2185, %v2170, %v2106
        %v2190 = vsel %vm2185, %v2171, %v2107
        %v2191 = vsel %vm2185, %v2172, %v2108
        %v2192 = vsel %vm2185, %v2173, %v2109
        %v2193 = vsel %vm2185, %v2174, %v2110
        %v2194 = vsel %vm2185, %v2175, %v2111
        %v2195 = vsel %vm2185, %v2176, %v2112
        %v2196 = vsel %vm2185, %v2177, %v2113
        %v2197 = vsel %vm2185, %v2178, %v2114
        %v2198 = vsel %vm2185, %v2179, %v2115
        %v2199 = vsel %vm2185, %v2180, %v2116
        %v2200 = vsel %vm2185, %v2181, %v2117
        %v2201 = vsel %vm2185, %v2182, %v2118
        %vm2202 = vcmask 261120
        %v2203 = vsel %vm2202, %v2186, -inf
        %2204 = vmax.xlane.f32.xlu0 %v2203
        %v2205 = vpop.xlane.xlu0 %2204
        %v2206 = vsel %vm2202, %v2187, -inf
        %2207 = vmax.xlane.f32.xlu0 %v2206
        %v2208 = vpop.xlane.xlu0 %2207
        %v2209 = vsel %vm2202, %v2188, -inf
        %2210 = vmax.xlane.f32.xlu0 %v2209
        %v2211 = vpop.xlane.xlu0 %2210
        %v2212 = vsel %vm2202, %v2189, -inf
        %2213 = vmax.xlane.f32.xlu0 %v2212
        %v2214 = vpop.xlane.xlu0 %2213
        %v2215 = vsel %vm2202, %v2190, -inf
        %2216 = vmax.xlane.f32.xlu0 %v2215
        %v2217 = vpop.xlane.xlu0 %2216
        %v2218 = vsel %vm2202, %v2191, -inf
        %2219 = vmax.xlane.f32.xlu0 %v2218
        %v2220 = vpop.xlane.xlu0 %2219
        %v2221 = vsel %vm2202, %v2192, -inf
        %2222 = vmax.xlane.f32.xlu0 %v2221
        %v2223 = vpop.xlane.xlu0 %2222
        %v2224 = vsel %vm2202, %v2193, -inf
        %2225 = vmax.xlane.f32.xlu0 %v2224
        %v2226 = vpop.xlane.xlu0 %2225
        %v2227 = vsel %vm2202, %v2194, -inf
        %2228 = vmax.xlane.f32.xlu0 %v2227
        %v2229 = vpop.xlane.xlu0 %2228
        %v2230 = vsel %vm2202, %v2195, -inf
        %2231 = vmax.xlane.f32.xlu0 %v2230
        %v2232 = vpop.xlane.xlu0 %2231
        %v2233 = vsel %vm2202, %v2196, -inf
        %2234 = vmax.xlane.f32.xlu0 %v2233
        %v2235 = vpop.xlane.xlu0 %2234
        %v2236 = vsel %vm2202, %v2197, -inf
        %2237 = vmax.xlane.f32.xlu0 %v2236
        %v2238 = vpop.xlane.xlu0 %2237
        %v2239 = vsel %vm2202, %v2198, -inf
        %2240 = vmax.xlane.f32.xlu0 %v2239
        %v2241 = vpop.xlane.xlu0 %2240
        %v2242 = vsel %vm2202, %v2199, -inf
        %2243 = vmax.xlane.f32.xlu0 %v2242
        %v2244 = vpop.xlane.xlu0 %2243
        %v2245 = vsel %vm2202, %v2200, -inf
        %2246 = vmax.xlane.f32.xlu0 %v2245
        %v2247 = vpop.xlane.xlu0 %2246
        %v2248 = vsel %vm2202, %v2201, -inf
        %2249 = vmax.xlane.f32.xlu0 %v2248
        %v2250 = vpop.xlane.xlu0 %2249
        %v2251 = vsub.f32 %v2186, %v2205
        %v2252 = vsub.f32 %v2187, %v2208
        %v2253 = vsub.f32 %v2188, %v2211
        %v2254 = vsub.f32 %v2189, %v2214
        %v2255 = vsub.f32 %v2190, %v2217
        %v2256 = vsub.f32 %v2191, %v2220
        %v2257 = vsub.f32 %v2192, %v2223
        %v2258 = vsub.f32 %v2193, %v2226
        %v2259 = vsub.f32 %v2194, %v2229
        %v2260 = vsub.f32 %v2195, %v2232
        %v2261 = vsub.f32 %v2196, %v2235
        %v2262 = vsub.f32 %v2197, %v2238
        %v2263 = vsub.f32 %v2198, %v2241
        %v2264 = vsub.f32 %v2199, %v2244
        %v2265 = vsub.f32 %v2200, %v2247
        %v2266 = vsub.f32 %v2201, %v2250
        %v2267 = vmul.f32 %v2251, 1.442695
        %v2268 = vpow.pop %v2267
        %v2269 = vmul.f32 %v2252, 1.442695
        %v2270 = vpow.pop %v2269
        %v2271 = vmul.f32 %v2253, 1.442695
        %v2272 = vpow.pop %v2271
        %v2273 = vmul.f32 %v2254, 1.442695
        %v2274 = vpow.pop %v2273
        %v2275 = vmul.f32 %v2255, 1.442695
        %v2276 = vpow.pop %v2275
        %v2277 = vmul.f32 %v2256, 1.442695
        %v2278 = vpow.pop %v2277
        %v2279 = vmul.f32 %v2257, 1.442695
        %v2280 = vpow.pop %v2279
        %v2281 = vmul.f32 %v2258, 1.442695
        %v2282 = vpow.pop %v2281
        %v2283 = vmul.f32 %v2259, 1.442695
        %v2284 = vpow.pop %v2283
        %v2285 = vmul.f32 %v2260, 1.442695
        %v2286 = vpow.pop %v2285
        %v2287 = vmul.f32 %v2261, 1.442695
        %v2288 = vpow.pop %v2287
        %v2289 = vmul.f32 %v2262, 1.442695
        %v2290 = vpow.pop %v2289
        %v2291 = vmul.f32 %v2263, 1.442695
        %v2292 = vpow.pop %v2291
        %v2293 = vmul.f32 %v2264, 1.442695
        %v2294 = vpow.pop %v2293
        %v2295 = vmul.f32 %v2265, 1.442695
        %v2296 = vpow.pop %v2295
        %v2297 = vmul.f32 %v2266, 1.442695
        %v2298 = vpow.pop %v2297
        %v2299 = vsel %vm2202, %v2268, 0.0
        %2300 = vadd.xlane.f32.xlu0 %v2299
        %v2301 = vpop.xlane.xlu0 %2300
        %v2302 = vsel %vm2202, %v2270, 0.0
        %2303 = vadd.xlane.f32.xlu0 %v2302
        %v2304 = vpop.xlane.xlu0 %2303
        %v2305 = vsel %vm2202, %v2272, 0.0
        %2306 = vadd.xlane.f32.xlu0 %v2305
        %v2307 = vpop.xlane.xlu0 %2306
        %v2308 = vsel %vm2202, %v2274, 0.0
        %2309 = vadd.xlane.f32.xlu0 %v2308
        %v2310 = vpop.xlane.xlu0 %2309
        %v2311 = vsel %vm2202, %v2276, 0.0
        %2312 = vadd.xlane.f32.xlu0 %v2311
        %v2313 = vpop.xlane.xlu0 %2312
        %v2314 = vsel %vm2202, %v2278, 0.0
        %2315 = vadd.xlane.f32.xlu0 %v2314
        %v2316 = vpop.xlane.xlu0 %2315
        %v2317 = vsel %vm2202, %v2280, 0.0
        %2318 = vadd.xlane.f32.xlu0 %v2317
        %v2319 = vpop.xlane.xlu0 %2318
        %v2320 = vsel %vm2202, %v2282, 0.0
        %2321 = vadd.xlane.f32.xlu0 %v2320
        %v2322 = vpop.xlane.xlu0 %2321
        %v2323 = vsel %vm2202, %v2284, 0.0
        %2324 = vadd.xlane.f32.xlu0 %v2323
        %v2325 = vpop.xlane.xlu0 %2324
        %v2326 = vsel %vm2202, %v2286, 0.0
        %2327 = vadd.xlane.f32.xlu0 %v2326
        %v2328 = vpop.xlane.xlu0 %2327
        %v2329 = vsel %vm2202, %v2288, 0.0
        %2330 = vadd.xlane.f32.xlu0 %v2329
        %v2331 = vpop.xlane.xlu0 %2330
        %v2332 = vsel %vm2202, %v2290, 0.0
        %2333 = vadd.xlane.f32.xlu0 %v2332
        %v2334 = vpop.xlane.xlu0 %2333
        %v2335 = vsel %vm2202, %v2292, 0.0
        %2336 = vadd.xlane.f32.xlu0 %v2335
        %v2337 = vpop.xlane.xlu0 %2336
        %v2338 = vsel %vm2202, %v2294, 0.0
        %2339 = vadd.xlane.f32.xlu0 %v2338
        %v2340 = vpop.xlane.xlu0 %2339
        %v2341 = vsel %vm2202, %v2296, 0.0
        %2342 = vadd.xlane.f32.xlu0 %v2341
        %v2343 = vpop.xlane.xlu0 %2342
        %v2344 = vsel %vm2202, %v2298, 0.0
        %2345 = vadd.xlane.f32.xlu0 %v2344
        %v2346 = vpop.xlane.xlu0 %2345
        %v2347 = vrcp.pop %v2301
        %v2348 = vrcp.pop %v2304
        %v2349 = vrcp.pop %v2307
        %v2350 = vrcp.pop %v2310
        %v2351 = vrcp.pop %v2313
        %v2352 = vrcp.pop %v2316
        %v2353 = vrcp.pop %v2319
        %v2354 = vrcp.pop %v2322
        %v2355 = vrcp.pop %v2325
        %v2356 = vrcp.pop %v2328
        %v2357 = vrcp.pop %v2331
        %v2358 = vrcp.pop %v2334
        %v2359 = vrcp.pop %v2337
        %v2360 = vrcp.pop %v2340
        %v2361 = vrcp.pop %v2343
        %v2362 = vrcp.pop %v2346
        %v2363 = vmul.f32 %v2268, %v2347
        %v2364 = vmul.f32 %v2270, %v2348
        %v2365 = vmul.f32 %v2272, %v2349
        %v2366 = vmul.f32 %v2274, %v2350
        %v2367 = vmul.f32 %v2276, %v2351
        %v2368 = vmul.f32 %v2278, %v2352
        %v2369 = vmul.f32 %v2280, %v2353
        %v2370 = vmul.f32 %v2282, %v2354
        %v2371 = vmul.f32 %v2284, %v2355
        %v2372 = vmul.f32 %v2286, %v2356
        %v2373 = vmul.f32 %v2288, %v2357
        %v2374 = vmul.f32 %v2290, %v2358
        %v2375 = vmul.f32 %v2292, %v2359
        %v2376 = vmul.f32 %v2294, %v2360
        %v2377 = vmul.f32 %v2296, %v2361
        %v2378 = vmul.f32 %v2298, %v2362
        %v2379 = vsel %vm2185, 0.0, %v2363
        %v2380 = vsel %vm2185, 0.0, %v2364
        %v2381 = vsel %vm2185, 0.0, %v2365
        %v2382 = vsel %vm2185, 0.0, %v2366
        %v2383 = vsel %vm2185, 0.0, %v2367
        %v2384 = vsel %vm2185, 0.0, %v2368
        %v2385 = vsel %vm2185, 0.0, %v2369
        %v2386 = vsel %vm2185, 0.0, %v2370
        %v2387 = vsel %vm2185, 0.0, %v2371
        %v2388 = vsel %vm2185, 0.0, %v2372
        %v2389 = vsel %vm2185, 0.0, %v2373
        %v2390 = vsel %vm2185, 0.0, %v2374
        %v2391 = vsel %vm2185, 0.0, %v2375
        %v2392 = vsel %vm2185, 0.0, %v2376
        %v2393 = vsel %vm2185, 0.0, %v2377
        %v2394 = vsel %vm2185, 0.0, %v2378
        %2396 = vset.pattern.permute.xlu0 0
        %2397 = vperm.xlu0 %2396, %v2363
        %v2398 = vpop.permute.xlu0 %2397
        %2401 = vset.pattern.permute.xlu0 0
        %2402 = vperm.xlu0 %2401, %v2364
        %v2403 = vpop.permute.xlu0 %2402
        %2406 = vset.pattern.permute.xlu0 0
        %2407 = vperm.xlu0 %2406, %v2365
        %v2408 = vpop.permute.xlu0 %2407
        %2411 = vset.pattern.permute.xlu0 0
        %2412 = vperm.xlu0 %2411, %v2366
        %v2413 = vpop.permute.xlu0 %2412
        %2416 = vset.pattern.permute.xlu0 0
        %2417 = vperm.xlu0 %2416, %v2367
        %v2418 = vpop.permute.xlu0 %2417
        %2421 = vset.pattern.permute.xlu0 0
        %2422 = vperm.xlu0 %2421, %v2368
        %v2423 = vpop.permute.xlu0 %2422
        %2426 = vset.pattern.permute.xlu0 0
        %2427 = vperm.xlu0 %2426, %v2369
        %v2428 = vpop.permute.xlu0 %2427
        %2431 = vset.pattern.permute.xlu0 0
        %2432 = vperm.xlu0 %2431, %v2370
        %v2433 = vpop.permute.xlu0 %2432
        %2436 = vset.pattern.permute.xlu0 0
        %2437 = vperm.xlu0 %2436, %v2371
        %v2438 = vpop.permute.xlu0 %2437
        %2441 = vset.pattern.permute.xlu0 0
        %2442 = vperm.xlu0 %2441, %v2372
        %v2443 = vpop.permute.xlu0 %2442
        %2446 = vset.pattern.permute.xlu0 0
        %2447 = vperm.xlu0 %2446, %v2373
        %v2448 = vpop.permute.xlu0 %2447
        %2451 = vset.pattern.permute.xlu0 0
        %2452 = vperm.xlu0 %2451, %v2374
        %v2453 = vpop.permute.xlu0 %2452
        %2456 = vset.pattern.permute.xlu0 0
        %2457 = vperm.xlu0 %2456, %v2375
        %v2458 = vpop.permute.xlu0 %2457
        %2461 = vset.pattern.permute.xlu0 0
        %2462 = vperm.xlu0 %2461, %v2376
        %v2463 = vpop.permute.xlu0 %2462
        %2466 = vset.pattern.permute.xlu0 0
        %2467 = vperm.xlu0 %2466, %v2377
        %v2468 = vpop.permute.xlu0 %2467
        %2471 = vset.pattern.permute.xlu0 0
        %2472 = vperm.xlu0 %2471, %v2378
        %v2473 = vpop.permute.xlu0 %2472
        %v2475 = vmul.f32 %v2398, %v1514
        %v2476 = vmul.f32 %v2403, %v1515
        %v2477 = vmul.f32 %v2408, %v1516
        %v2478 = vmul.f32 %v2413, %v1517
        %v2479 = vmul.f32 %v2418, %v1518
        %v2480 = vmul.f32 %v2423, %v1519
        %v2481 = vmul.f32 %v2428, %v1520
        %v2482 = vmul.f32 %v2433, %v1521
        %v2483 = vmul.f32 %v2438, %v1522
        %v2484 = vmul.f32 %v2443, %v1523
        %v2485 = vmul.f32 %v2448, %v1524
        %v2486 = vmul.f32 %v2453, %v1525
        %v2487 = vmul.f32 %v2458, %v1526
        %v2488 = vmul.f32 %v2463, %v1527
        %v2489 = vmul.f32 %v2468, %v1528
        %v2490 = vmul.f32 %v2473, %v1529
        %v2492 = vsel %vm2202, %v2379, 0
        %v2495 = vsel %vm2202, %v2380, 0
        %v2498 = vsel %vm2202, %v2381, 0
        %v2501 = vsel %vm2202, %v2382, 0
        %v2504 = vsel %vm2202, %v2383, 0
        %v2507 = vsel %vm2202, %v2384, 0
        %v2510 = vsel %vm2202, %v2385, 0
        %v2513 = vsel %vm2202, %v2386, 0
        %v2516 = vsel %vm2202, %v2387, 0
        %v2519 = vsel %vm2202, %v2388, 0
        %v2522 = vsel %vm2202, %v2389, 0
        %v2525 = vsel %vm2202, %v2390, 0
        %v2528 = vsel %vm2202, %v2391, 0
        %v2531 = vsel %vm2202, %v2392, 0
        %v2534 = vsel %vm2202, %v2393, 0
        %v2537 = vsel %vm2202, %v2394, 0
        %2539 = vmatpush.msra.mxu0 0.0
        %2540 = vmatpush.msra.mxu0 0.0
        %2541 = vmatpush.msra.mxu0 0.0
        %2542 = vmatpush.msra.mxu0 0.0
        %2543 = vmatpush.msra.mxu0 0.0
        %2544 = vmatpush.msra.mxu0 0.0
        %2545 = vmatpush.msra.mxu0 0.0
        %2546 = vmatpush.msra.mxu0 0.0
        %2547 = vmatpush.msra.mxu0 0.0
        %2548 = vmatpush.msra.mxu0 0.0
        %2549 = vmatpush.msra.mxu0 0.0
        %2550 = vmatpush.msra.mxu0 0.0
        %2551 = vmatpush.msra.mxu0 %v2037
        %2552 = vmatpush.msra.mxu0 %v2036
        %2553 = vmatpush.msra.mxu0 %v2035
        %2554 = vmatpush.msra.mxu0 %v2034
        %2555 = vmatmul.f32.gmra.mxu0 %v2492
        %v2556 = vpop.f32.mrf.mxu0
        %v2557 = vadd.f32 0.0, %v2556
        %2558 = vmatmul.f32.gmra.mxu0 %v2495
        %v2559 = vpop.f32.mrf.mxu0
        %v2560 = vadd.f32 0.0, %v2559
        %2561 = vmatmul.f32.gmra.mxu0 %v2498
        %v2562 = vpop.f32.mrf.mxu0
        %v2563 = vadd.f32 0.0, %v2562
        %2564 = vmatmul.f32.gmra.mxu0 %v2501
        %v2565 = vpop.f32.mrf.mxu0
        %v2566 = vadd.f32 0.0, %v2565
        %2567 = vmatmul.f32.gmra.mxu0 %v2504
        %v2568 = vpop.f32.mrf.mxu0
        %v2569 = vadd.f32 0.0, %v2568
        %2570 = vmatmul.f32.gmra.mxu0 %v2507
        %v2571 = vpop.f32.mrf.mxu0
        %v2572 = vadd.f32 0.0, %v2571
        %2573 = vmatmul.f32.gmra.mxu0 %v2510
        %v2574 = vpop.f32.mrf.mxu0
        %v2575 = vadd.f32 0.0, %v2574
        %2576 = vmatmul.f32.gmra.mxu0 %v2513
        %v2577 = vpop.f32.mrf.mxu0
        %v2578 = vadd.f32 0.0, %v2577
        %2579 = vmatmul.f32.gmra.mxu0 %v2516
        %v2580 = vpop.f32.mrf.mxu0
        %v2581 = vadd.f32 0.0, %v2580
        %2582 = vmatmul.f32.gmra.mxu0 %v2519
        %v2583 = vpop.f32.mrf.mxu0
        %v2584 = vadd.f32 0.0, %v2583
        %2585 = vmatmul.f32.gmra.mxu0 %v2522
        %v2586 = vpop.f32.mrf.mxu0
        %v2587 = vadd.f32 0.0, %v2586
        %2588 = vmatmul.f32.gmra.mxu0 %v2525
        %v2589 = vpop.f32.mrf.mxu0
        %v2590 = vadd.f32 0.0, %v2589
        %2591 = vmatmul.f32.gmra.mxu0 %v2528
        %v2592 = vpop.f32.mrf.mxu0
        %v2593 = vadd.f32 0.0, %v2592
        %2594 = vmatmul.f32.gmra.mxu0 %v2531
        %v2595 = vpop.f32.mrf.mxu0
        %v2596 = vadd.f32 0.0, %v2595
        %2597 = vmatmul.f32.gmra.mxu0 %v2534
        %v2598 = vpop.f32.mrf.mxu0
        %v2599 = vadd.f32 0.0, %v2598
        %2600 = vmatmul.f32.gmra.mxu0 %v2537
        %v2601 = vpop.f32.mrf.mxu0
        %v2602 = vadd.f32 0.0, %v2601
        %2603 = vdwg.mxu0
        %v2604 = vadd.f32 %v2475, %v2557
        %v2605 = vadd.f32 %v2476, %v2560
        %v2606 = vadd.f32 %v2477, %v2563
        %v2607 = vadd.f32 %v2478, %v2566
        %v2608 = vadd.f32 %v2479, %v2569
        %v2609 = vadd.f32 %v2480, %v2572
        %v2610 = vadd.f32 %v2481, %v2575
        %v2611 = vadd.f32 %v2482, %v2578
        %v2612 = vadd.f32 %v2483, %v2581
        %v2613 = vadd.f32 %v2484, %v2584
        %v2614 = vadd.f32 %v2485, %v2587
        %v2615 = vadd.f32 %v2486, %v2590
        %v2616 = vadd.f32 %v2487, %v2593
        %v2617 = vadd.f32 %v2488, %v2596
        %v2618 = vadd.f32 %v2489, %v2599
        %v2619 = vadd.f32 %v2490, %v2602
        %v2620 = vld [vmem:[#allocation8] sm:$0xf]
        %v2621 = vld [vmem:[#allocation8 + $0x4] sm:$0xf]
        %v2622 = vld [vmem:[#allocation8 + $0x8] sm:$0xf]
        %v2623 = vld [vmem:[#allocation8 + $0xc] sm:$0xf]
        %v2624 = vld [vmem:[#allocation8 + $0x10] sm:$0xf]
        %v2625 = vld [vmem:[#allocation8 + $0x14] sm:$0xf]
        %v2626 = vld [vmem:[#allocation8 + $0x18] sm:$0xf]
        %v2627 = vld [vmem:[#allocation8 + $0x1c] sm:$0xf]
        %v2628 = vld [vmem:[#allocation8 + $0x20] sm:$0xf]
        %v2629 = vld [vmem:[#allocation8 + $0x24] sm:$0xf]
        %v2630 = vld [vmem:[#allocation8 + $0x28] sm:$0xf]
        %v2631 = vld [vmem:[#allocation8 + $0x2c] sm:$0xf]
        %v2632 = vld [vmem:[#allocation8 + $0x30] sm:$0xf]
        %v2633 = vld [vmem:[#allocation8 + $0x34] sm:$0xf]
        %v2634 = vld [vmem:[#allocation8 + $0x38] sm:$0xf]
        %v2635 = vld [vmem:[#allocation8 + $0x3c] sm:$0xf]
        %v2636 = vld [vmem:[#allocation13] sm:$0x1]
        %v2638 = vperm.slane %v2636, 0
        %v2656 = vunpack.c.l.b16 %v2620
        %v2657 = vunpack.c.l.b16 %v2621
        %v2658 = vunpack.c.l.b16 %v2622
        %v2659 = vunpack.c.l.b16 %v2623
        %v2660 = vunpack.c.l.b16 %v2624
        %v2661 = vunpack.c.l.b16 %v2625
        %v2662 = vunpack.c.l.b16 %v2626
        %v2663 = vunpack.c.l.b16 %v2627
        %v2664 = vunpack.c.l.b16 %v2628
        %v2665 = vunpack.c.l.b16 %v2629
        %v2666 = vunpack.c.l.b16 %v2630
        %v2667 = vunpack.c.l.b16 %v2631
        %v2668 = vunpack.c.l.b16 %v2632
        %v2669 = vunpack.c.l.b16 %v2633
        %v2670 = vunpack.c.l.b16 %v2634
        %v2671 = vunpack.c.l.b16 %v2635
        %v2672 = vpack.c.b16 %v2657, %v2656
        %v2673 = vpack.c.b16 %v2659, %v2658
        %v2674 = vpack.c.b16 %v2661, %v2660
        %v2675 = vpack.c.b16 %v2663, %v2662
        %v2676 = vpack.c.b16 %v2665, %v2664
        %v2677 = vpack.c.b16 %v2667, %v2666
        %v2678 = vpack.c.b16 %v2669, %v2668
        %v2679 = vpack.c.b16 %v2671, %v2670
        %2688 = vmatpush.bf16.msra.mxu0 %v2679
        %2689 = vmatpush.bf16.msra.mxu0 %v2678
        %2690 = vmatpush.bf16.msra.mxu0 %v2677
        %2691 = vmatpush.bf16.msra.mxu0 %v2676
        %2692 = vmatpush.bf16.msra.mxu0 %v2675
        %2693 = vmatpush.bf16.msra.mxu0 %v2674
        %2694 = vmatpush.bf16.msra.mxu0 %v2673
        %2695 = vmatpush.bf16.msra.mxu0 %v2672
        %2696 = vmatmul.bf16.gmra.mxu0 %v1554
        %v2697 = vpop.f32.mrf.mxu0
        %v2698 = vadd.f32 %v2638, %v2697
        %v2699 = vpop.f32.mrf.mxu0
        %v2700 = vadd.f32 %v2638, %v2699
        %2701 = vmatmul.bf16.gmra.mxu0 %v1555
        %v2702 = vpop.f32.mrf.mxu0
        %v2703 = vadd.f32 %v2638, %v2702
        %v2704 = vpop.f32.mrf.mxu0
        %v2705 = vadd.f32 %v2638, %v2704
        %2706 = vmatmul.bf16.gmra.mxu0 %v1556
        %v2707 = vpop.f32.mrf.mxu0
        %v2708 = vadd.f32 %v2638, %v2707
        %v2709 = vpop.f32.mrf.mxu0
        %v2710 = vadd.f32 %v2638, %v2709
        %2711 = vmatmul.bf16.gmra.mxu0 %v1557
        %v2712 = vpop.f32.mrf.mxu0
        %v2713 = vadd.f32 %v2638, %v2712
        %v2714 = vpop.f32.mrf.mxu0
        %v2715 = vadd.f32 %v2638, %v2714
        %2716 = vmatmul.bf16.gmra.mxu0 %v1558
        %v2717 = vpop.f32.mrf.mxu0
        %v2718 = vadd.f32 %v2638, %v2717
        %v2719 = vpop.f32.mrf.mxu0
        %v2720 = vadd.f32 %v2638, %v2719
        %2721 = vmatmul.bf16.gmra.mxu0 %v1559
        %v2722 = vpop.f32.mrf.mxu0
        %v2723 = vadd.f32 %v2638, %v2722
        %v2724 = vpop.f32.mrf.mxu0
        %v2725 = vadd.f32 %v2638, %v2724
        %2726 = vmatmul.bf16.gmra.mxu0 %v1560
        %v2727 = vpop.f32.mrf.mxu0
        %v2728 = vadd.f32 %v2638, %v2727
        %v2729 = vpop.f32.mrf.mxu0
        %v2730 = vadd.f32 %v2638, %v2729
        %2731 = vmatmul.bf16.gmra.mxu0 %v1561
        %v2732 = vpop.f32.mrf.mxu0
        %v2733 = vadd.f32 %v2638, %v2732
        %v2734 = vpop.f32.mrf.mxu0
        %v2735 = vadd.f32 %v2638, %v2734
        %2736 = vdwg.mxu0
        %v2737 = vld [vmem:[#allocation10] sm:$0xff]
        %v2738 = vld [vmem:[#allocation10 + $0x8] sm:$0xff]
        %v2739 = vld [vmem:[#allocation10 + $0x10] sm:$0xff]
        %v2740 = vld [vmem:[#allocation10 + $0x18] sm:$0xff]
        %v2741 = vld [vmem:[#allocation10 + $0x20] sm:$0xff]
        %v2742 = vld [vmem:[#allocation10 + $0x28] sm:$0xff]
        %v2743 = vld [vmem:[#allocation10 + $0x30] sm:$0xff]
        %v2744 = vld [vmem:[#allocation10 + $0x38] sm:$0xff]
        %v2745 = vld [vmem:[#allocation10 + $0x40] sm:$0xff]
        %v2746 = vld [vmem:[#allocation10 + $0x48] sm:$0xff]
        %v2747 = vld [vmem:[#allocation10 + $0x50] sm:$0xff]
        %v2748 = vld [vmem:[#allocation10 + $0x58] sm:$0xff]
        %v2749 = vld [vmem:[#allocation10 + $0x60] sm:$0xff]
        %v2750 = vld [vmem:[#allocation10 + $0x68] sm:$0xff]
        %v2751 = vld [vmem:[#allocation10 + $0x70] sm:$0xff]
        %v2752 = vld [vmem:[#allocation10 + $0x78] sm:$0xff]
        %v2753 = vpack.c.bf16 %v1990, %v1987
        %v2754 = vpack.c.bf16 %v1996, %v1993
        %v2755 = vpack.c.bf16 %v2002, %v1999
        %v2756 = vpack.c.bf16 %v2008, %v2005
        %v2757 = vpack.c.bf16 %v2014, %v2011
        %v2758 = vpack.c.bf16 %v2020, %v2017
        %v2759 = vpack.c.bf16 %v2026, %v2023
        %v2760 = vpack.c.bf16 %v2032, %v2029
        %v2761 = vpack.c.bf16 %v2605, %v2604
        %v2762 = vpack.c.bf16 %v2607, %v2606
        %v2763 = vpack.c.bf16 %v2609, %v2608
        %v2764 = vpack.c.bf16 %v2611, %v2610
        %v2765 = vpack.c.bf16 %v2613, %v2612
        %v2766 = vpack.c.bf16 %v2615, %v2614
        %v2767 = vpack.c.bf16 %v2617, %v2616
        %v2768 = vpack.c.bf16 %v2619, %v2618
        %v2769 = vld [vmem:[#allocation14] sm:$0x3]
        %v2771 = vperm.slane %v2769, 0
        %v2772 = vperm.slane %v2769, 1
        %v2791 = vunpack.c.l.b16 %v2737
        %v2792 = vunpack.c.h.b16 %v2737
        %v2793 = vunpack.c.l.b16 %v2738
        %v2794 = vunpack.c.h.b16 %v2738
        %v2795 = vunpack.c.l.b16 %v2739
        %v2796 = vunpack.c.h.b16 %v2739
        %v2797 = vunpack.c.l.b16 %v2740
        %v2798 = vunpack.c.h.b16 %v2740
        %v2799 = vunpack.c.l.b16 %v2741
        %v2800 = vunpack.c.h.b16 %v2741
        %v2801 = vunpack.c.l.b16 %v2742
        %v2802 = vunpack.c.h.b16 %v2742
        %v2803 = vunpack.c.l.b16 %v2743
        %v2804 = vunpack.c.h.b16 %v2743
        %v2805 = vunpack.c.l.b16 %v2744
        %v2806 = vunpack.c.h.b16 %v2744
        %v2807 = vunpack.c.l.b16 %v2745
        %v2808 = vunpack.c.h.b16 %v2745
        %v2809 = vunpack.c.l.b16 %v2746
        %v2810 = vunpack.c.h.b16 %v2746
        %v2811 = vunpack.c.l.b16 %v2747
        %v2812 = vunpack.c.h.b16 %v2747
        %v2813 = vunpack.c.l.b16 %v2748
        %v2814 = vunpack.c.h.b16 %v2748
        %v2815 = vunpack.c.l.b16 %v2749
        %v2816 = vunpack.c.h.b16 %v2749
        %v2817 = vunpack.c.l.b16 %v2750
        %v2818 = vunpack.c.h.b16 %v2750
        %v2819 = vunpack.c.l.b16 %v2751
        %v2820 = vunpack.c.h.b16 %v2751
        %v2821 = vunpack.c.l.b16 %v2752
        %v2822 = vunpack.c.h.b16 %v2752
        %v2823 = vpack.c.b16 %v2793, %v2791
        %v2824 = vpack.c.b16 %v2794, %v2792
        %v2825 = vpack.c.b16 %v2797, %v2795
        %v2826 = vpack.c.b16 %v2798, %v2796
        %v2827 = vpack.c.b16 %v2801, %v2799
        %v2828 = vpack.c.b16 %v2802, %v2800
        %v2829 = vpack.c.b16 %v2805, %v2803
        %v2830 = vpack.c.b16 %v2806, %v2804
        %v2831 = vpack.c.b16 %v2809, %v2807
        %v2832 = vpack.c.b16 %v2810, %v2808
        %v2833 = vpack.c.b16 %v2813, %v2811
        %v2834 = vpack.c.b16 %v2814, %v2812
        %v2835 = vpack.c.b16 %v2817, %v2815
        %v2836 = vpack.c.b16 %v2818, %v2816
        %v2837 = vpack.c.b16 %v2821, %v2819
        %v2838 = vpack.c.b16 %v2822, %v2820
        %2855 = vmatpush.bf16.msra.mxu0 %v2837
        %2856 = vmatpush.bf16.msra.mxu0 %v2835
        %2857 = vmatpush.bf16.msra.mxu0 %v2833
        %2858 = vmatpush.bf16.msra.mxu0 %v2831
        %2859 = vmatpush.bf16.msra.mxu0 %v2829
        %2860 = vmatpush.bf16.msra.mxu0 %v2827
        %2861 = vmatpush.bf16.msra.mxu0 %v2825
        %2862 = vmatpush.bf16.msra.mxu0 %v2823
        %2863 = vmatmul.bf16.gmra.mxu0 %v2753
        %v2864 = vpop.f32.mrf.mxu0
        %v2865 = vadd.f32 %v2771, %v2864
        %v2866 = vpop.f32.mrf.mxu0
        %v2867 = vadd.f32 %v2771, %v2866
        %2868 = vmatmul.bf16.gmra.mxu0 %v2754
        %v2869 = vpop.f32.mrf.mxu0
        %v2870 = vadd.f32 %v2771, %v2869
        %v2871 = vpop.f32.mrf.mxu0
        %v2872 = vadd.f32 %v2771, %v2871
        %2873 = vmatmul.bf16.gmra.mxu0 %v2755
        %v2874 = vpop.f32.mrf.mxu0
        %v2875 = vadd.f32 %v2771, %v2874
        %v2876 = vpop.f32.mrf.mxu0
        %v2877 = vadd.f32 %v2771, %v2876
        %2878 = vmatmul.bf16.gmra.mxu0 %v2756
        %v2879 = vpop.f32.mrf.mxu0
        %v2880 = vadd.f32 %v2771, %v2879
        %v2881 = vpop.f32.mrf.mxu0
        %v2882 = vadd.f32 %v2771, %v2881
        %2883 = vmatmul.bf16.gmra.mxu0 %v2757
        %v2884 = vpop.f32.mrf.mxu0
        %v2885 = vadd.f32 %v2771, %v2884
        %v2886 = vpop.f32.mrf.mxu0
        %v2887 = vadd.f32 %v2771, %v2886
        %2888 = vmatmul.bf16.gmra.mxu0 %v2758
        %v2889 = vpop.f32.mrf.mxu0
        %v2890 = vadd.f32 %v2771, %v2889
        %v2891 = vpop.f32.mrf.mxu0
        %v2892 = vadd.f32 %v2771, %v2891
        %2893 = vmatmul.bf16.gmra.mxu0 %v2759
        %v2894 = vpop.f32.mrf.mxu0
        %v2895 = vadd.f32 %v2771, %v2894
        %v2896 = vpop.f32.mrf.mxu0
        %v2897 = vadd.f32 %v2771, %v2896
        %2898 = vmatmul.bf16.gmra.mxu0 %v2760
        %v2899 = vpop.f32.mrf.mxu0
        %v2900 = vadd.f32 %v2771, %v2899
        %v2901 = vpop.f32.mrf.mxu0
        %v2902 = vadd.f32 %v2771, %v2901
        %2903 = vmatmul.bf16.gmra.mxu0 %v2761
        %v2904 = vpop.f32.mrf.mxu0
        %v2905 = vadd.f32 %v2771, %v2904
        %v2906 = vpop.f32.mrf.mxu0
        %v2907 = vadd.f32 %v2771, %v2906
        %2908 = vmatmul.bf16.gmra.mxu0 %v2762
        %v2909 = vpop.f32.mrf.mxu0
        %v2910 = vadd.f32 %v2771, %v2909
        %v2911 = vpop.f32.mrf.mxu0
        %v2912 = vadd.f32 %v2771, %v2911
        %2913 = vmatmul.bf16.gmra.mxu0 %v2763
        %v2914 = vpop.f32.mrf.mxu0
        %v2915 = vadd.f32 %v2771, %v2914
        %v2916 = vpop.f32.mrf.mxu0
        %v2917 = vadd.f32 %v2771, %v2916
        %2918 = vmatmul.bf16.gmra.mxu0 %v2764
        %v2919 = vpop.f32.mrf.mxu0
        %v2920 = vadd.f32 %v2771, %v2919
        %v2921 = vpop.f32.mrf.mxu0
        %v2922 = vadd.f32 %v2771, %v2921
        %2923 = vmatmul.bf16.gmra.mxu0 %v2765
        %v2924 = vpop.f32.mrf.mxu0
        %v2925 = vadd.f32 %v2771, %v2924
        %v2926 = vpop.f32.mrf.mxu0
        %v2927 = vadd.f32 %v2771, %v2926
        %2928 = vmatmul.bf16.gmra.mxu0 %v2766
        %v2929 = vpop.f32.mrf.mxu0
        %v2930 = vadd.f32 %v2771, %v2929
        %v2931 = vpop.f32.mrf.mxu0
        %v2932 = vadd.f32 %v2771, %v2931
        %2933 = vmatmul.bf16.gmra.mxu0 %v2767
        %v2934 = vpop.f32.mrf.mxu0
        %v2935 = vadd.f32 %v2771, %v2934
        %v2936 = vpop.f32.mrf.mxu0
        %v2937 = vadd.f32 %v2771, %v2936
        %2938 = vmatmul.bf16.gmra.mxu0 %v2768
        %v2939 = vpop.f32.mrf.mxu0
        %v2940 = vadd.f32 %v2771, %v2939
        %v2941 = vpop.f32.mrf.mxu0
        %v2942 = vadd.f32 %v2771, %v2941
        %2943 = vdwg.mxu0
        %2944 = vmatpush.bf16.msra.mxu0 %v2838
        %2945 = vmatpush.bf16.msra.mxu0 %v2836
        %2946 = vmatpush.bf16.msra.mxu0 %v2834
        %2947 = vmatpush.bf16.msra.mxu0 %v2832
        %2948 = vmatpush.bf16.msra.mxu0 %v2830
        %2949 = vmatpush.bf16.msra.mxu0 %v2828
        %2950 = vmatpush.bf16.msra.mxu0 %v2826
        %2951 = vmatpush.bf16.msra.mxu0 %v2824
        %2952 = vmatmul.bf16.gmra.mxu0 %v2753
        %v2953 = vpop.f32.mrf.mxu0
        %v2954 = vadd.f32 %v2772, %v2953
        %v2955 = vpop.f32.mrf.mxu0
        %v2956 = vadd.f32 %v2772, %v2955
        %2957 = vmatmul.bf16.gmra.mxu0 %v2754
        %v2958 = vpop.f32.mrf.mxu0
        %v2959 = vadd.f32 %v2772, %v2958
        %v2960 = vpop.f32.mrf.mxu0
        %v2961 = vadd.f32 %v2772, %v2960
        %2962 = vmatmul.bf16.gmra.mxu0 %v2755
        %v2963 = vpop.f32.mrf.mxu0
        %v2964 = vadd.f32 %v2772, %v2963
        %v2965 = vpop.f32.mrf.mxu0
        %v2966 = vadd.f32 %v2772, %v2965
        %2967 = vmatmul.bf16.gmra.mxu0 %v2756
        %v2968 = vpop.f32.mrf.mxu0
        %v2969 = vadd.f32 %v2772, %v2968
        %v2970 = vpop.f32.mrf.mxu0
        %v2971 = vadd.f32 %v2772, %v2970
        %2972 = vmatmul.bf16.gmra.mxu0 %v2757
        %v2973 = vpop.f32.mrf.mxu0
        %v2974 = vadd.f32 %v2772, %v2973
        %v2975 = vpop.f32.mrf.mxu0
        %v2976 = vadd.f32 %v2772, %v2975
        %2977 = vmatmul.bf16.gmra.mxu0 %v2758
        %v2978 = vpop.f32.mrf.mxu0
        %v2979 = vadd.f32 %v2772, %v2978
        %v2980 = vpop.f32.mrf.mxu0
        %v2981 = vadd.f32 %v2772, %v2980
        %2982 = vmatmul.bf16.gmra.mxu0 %v2759
        %v2983 = vpop.f32.mrf.mxu0
        %v2984 = vadd.f32 %v2772, %v2983
        %v2985 = vpop.f32.mrf.mxu0
        %v2986 = vadd.f32 %v2772, %v2985
        %2987 = vmatmul.bf16.gmra.mxu0 %v2760
        %v2988 = vpop.f32.mrf.mxu0
        %v2989 = vadd.f32 %v2772, %v2988
        %v2990 = vpop.f32.mrf.mxu0
        %v2991 = vadd.f32 %v2772, %v2990
        %2992 = vmatmul.bf16.gmra.mxu0 %v2761
        %v2993 = vpop.f32.mrf.mxu0
        %v2994 = vadd.f32 %v2772, %v2993
        %v2995 = vpop.f32.mrf.mxu0
        %v2996 = vadd.f32 %v2772, %v2995
        %2997 = vmatmul.bf16.gmra.mxu0 %v2762
        %v2998 = vpop.f32.mrf.mxu0
        %v2999 = vadd.f32 %v2772, %v2998
        %v3000 = vpop.f32.mrf.mxu0
        %v3001 = vadd.f32 %v2772, %v3000
        %3002 = vmatmul.bf16.gmra.mxu0 %v2763
        %v3003 = vpop.f32.mrf.mxu0
        %v3004 = vadd.f32 %v2772, %v3003
        %v3005 = vpop.f32.mrf.mxu0
        %v3006 = vadd.f32 %v2772, %v3005
        %3007 = vmatmul.bf16.gmra.mxu0 %v2764
        %v3008 = vpop.f32.mrf.mxu0
        %v3009 = vadd.f32 %v2772, %v3008
        %v3010 = vpop.f32.mrf.mxu0
        %v3011 = vadd.f32 %v2772, %v3010
        %3012 = vmatmul.bf16.gmra.mxu0 %v2765
        %v3013 = vpop.f32.mrf.mxu0
        %v3014 = vadd.f32 %v2772, %v3013
        %v3015 = vpop.f32.mrf.mxu0
        %v3016 = vadd.f32 %v2772, %v3015
        %3017 = vmatmul.bf16.gmra.mxu0 %v2766
        %v3018 = vpop.f32.mrf.mxu0
        %v3019 = vadd.f32 %v2772, %v3018
        %v3020 = vpop.f32.mrf.mxu0
        %v3021 = vadd.f32 %v2772, %v3020
        %3022 = vmatmul.bf16.gmra.mxu0 %v2767
        %v3023 = vpop.f32.mrf.mxu0
        %v3024 = vadd.f32 %v2772, %v3023
        %v3025 = vpop.f32.mrf.mxu0
        %v3026 = vadd.f32 %v2772, %v3025
        %3027 = vmatmul.bf16.gmra.mxu0 %v2768
        %v3028 = vpop.f32.mrf.mxu0
        %v3029 = vadd.f32 %v2772, %v3028
        %v3030 = vpop.f32.mrf.mxu0
        %v3031 = vadd.f32 %v2772, %v3030
        %3032 = vdwg.mxu0
        %v3033 = vsub.f32 %v2865, %v2905
        %v3034 = vsub.f32 %v2867, %v2907
        %v3035 = vsub.f32 %v2870, %v2910
        %v3036 = vsub.f32 %v2872, %v2912
        %v3037 = vsub.f32 %v2875, %v2915
        %v3038 = vsub.f32 %v2877, %v2917
        %v3039 = vsub.f32 %v2880, %v2920
        %v3040 = vsub.f32 %v2882, %v2922
        %v3041 = vsub.f32 %v2885, %v2925
        %v3042 = vsub.f32 %v2887, %v2927
        %v3043 = vsub.f32 %v2890, %v2930
        %v3044 = vsub.f32 %v2892, %v2932
        %v3045 = vsub.f32 %v2895, %v2935
        %v3046 = vsub.f32 %v2897, %v2937
        %v3047 = vsub.f32 %v2900, %v2940
        %v3048 = vsub.f32 %v2902, %v2942
        %v3049 = vmul.f32 %v2698, %v3033
        %v3050 = vmul.f32 %v2700, %v3034
        %v3051 = vmul.f32 %v2703, %v3035
        %v3052 = vmul.f32 %v2705, %v3036
        %v3053 = vmul.f32 %v2708, %v3037
        %v3054 = vmul.f32 %v2710, %v3038
        %v3055 = vmul.f32 %v2713, %v3039
        %v3056 = vmul.f32 %v2715, %v3040
        %v3057 = vmul.f32 %v2718, %v3041
        %v3058 = vmul.f32 %v2720, %v3042
        %v3059 = vmul.f32 %v2723, %v3043
        %v3060 = vmul.f32 %v2725, %v3044
        %v3061 = vmul.f32 %v2728, %v3045
        %v3062 = vmul.f32 %v2730, %v3046
        %v3063 = vmul.f32 %v2733, %v3047
        %v3064 = vmul.f32 %v2735, %v3048
        %v3065 = vld [vmem:[#allocation26] sm:$0xf]
        %v3066 = vld [vmem:[#allocation26 + $0x4] sm:$0xf]
        %v3067 = vld [vmem:[#allocation26 + $0x8] sm:$0xf]
        %v3068 = vld [vmem:[#allocation26 + $0xc] sm:$0xf]
        %v3069 = vld [vmem:[#allocation26 + $0x10] sm:$0xf]
        %v3070 = vld [vmem:[#allocation26 + $0x14] sm:$0xf]
        %v3071 = vld [vmem:[#allocation26 + $0x18] sm:$0xf]
        %v3072 = vld [vmem:[#allocation26 + $0x1c] sm:$0xf]
        %v3073 = vld [vmem:[#allocation26 + $0x20] sm:$0xf]
        %v3074 = vld [vmem:[#allocation26 + $0x24] sm:$0xf]
        %v3075 = vld [vmem:[#allocation26 + $0x28] sm:$0xf]
        %v3076 = vld [vmem:[#allocation26 + $0x2c] sm:$0xf]
        %v3077 = vld [vmem:[#allocation26 + $0x30] sm:$0xf]
        %v3078 = vld [vmem:[#allocation26 + $0x34] sm:$0xf]
        %v3079 = vld [vmem:[#allocation26 + $0x38] sm:$0xf]
        %v3080 = vld [vmem:[#allocation26 + $0x3c] sm:$0xf]
        %v3081 = vpack.c.bf16 %v3050, %v3049
        %v3082 = vpack.c.bf16 %v3052, %v3051
        %v3083 = vpack.c.bf16 %v3054, %v3053
        %v3084 = vpack.c.bf16 %v3056, %v3055
        %v3085 = vpack.c.bf16 %v3058, %v3057
        %v3086 = vpack.c.bf16 %v3060, %v3059
        %v3087 = vpack.c.bf16 %v3062, %v3061
        %v3088 = vpack.c.bf16 %v3064, %v3063
        %v3105 = vunpack.c.l.b16 %v3065
        %v3106 = vunpack.c.l.b16 %v3066
        %v3107 = vunpack.c.l.b16 %v3067
        %v3108 = vunpack.c.l.b16 %v3068
        %v3109 = vunpack.c.l.b16 %v3069
        %v3110 = vunpack.c.l.b16 %v3070
        %v3111 = vunpack.c.l.b16 %v3071
        %v3112 = vunpack.c.l.b16 %v3072
        %v3113 = vunpack.c.l.b16 %v3073
        %v3114 = vunpack.c.l.b16 %v3074
        %v3115 = vunpack.c.l.b16 %v3075
        %v3116 = vunpack.c.l.b16 %v3076
        %v3117 = vunpack.c.l.b16 %v3077
        %v3118 = vunpack.c.l.b16 %v3078
        %v3119 = vunpack.c.l.b16 %v3079
        %v3120 = vunpack.c.l.b16 %v3080
        %v3121 = vpack.c.b16 %v3106, %v3105
        %v3122 = vpack.c.b16 %v3108, %v3107
        %v3123 = vpack.c.b16 %v3110, %v3109
        %v3124 = vpack.c.b16 %v3112, %v3111
        %v3125 = vpack.c.b16 %v3114, %v3113
        %v3126 = vpack.c.b16 %v3116, %v3115
        %v3127 = vpack.c.b16 %v3118, %v3117
        %v3128 = vpack.c.b16 %v3120, %v3119
        %3137 = vmatpush.bf16.msra.mxu0 %v3128
        %3138 = vmatpush.bf16.msra.mxu0 %v3127
        %3139 = vmatpush.bf16.msra.mxu0 %v3126
        %3140 = vmatpush.bf16.msra.mxu0 %v3125
        %3141 = vmatpush.bf16.msra.mxu0 %v3124
        %3142 = vmatpush.bf16.msra.mxu0 %v3123
        %3143 = vmatpush.bf16.msra.mxu0 %v3122
        %3144 = vmatpush.bf16.msra.mxu0 %v3121
        %3145 = vmatmul.bf16.gmra.mxu0 %v3081
        %v3146 = vpop.f32.mrf.mxu0
        %v3147 = vadd.f32 0.0, %v3146
        %v3148 = vpop.f32.mrf.mxu0
        %v3149 = vadd.f32 0.0, %v3148
        %3150 = vmatmul.bf16.gmra.mxu0 %v3082
        %v3151 = vpop.f32.mrf.mxu0
        %v3152 = vadd.f32 0.0, %v3151
        %v3153 = vpop.f32.mrf.mxu0
        %v3154 = vadd.f32 0.0, %v3153
        %3155 = vmatmul.bf16.gmra.mxu0 %v3083
        %v3156 = vpop.f32.mrf.mxu0
        %v3157 = vadd.f32 0.0, %v3156
        %v3158 = vpop.f32.mrf.mxu0
        %v3159 = vadd.f32 0.0, %v3158
        %3160 = vmatmul.bf16.gmra.mxu0 %v3084
        %v3161 = vpop.f32.mrf.mxu0
        %v3162 = vadd.f32 0.0, %v3161
        %v3163 = vpop.f32.mrf.mxu0
        %v3164 = vadd.f32 0.0, %v3163
        %3165 = vmatmul.bf16.gmra.mxu0 %v3085
        %v3166 = vpop.f32.mrf.mxu0
        %v3167 = vadd.f32 0.0, %v3166
        %v3168 = vpop.f32.mrf.mxu0
        %v3169 = vadd.f32 0.0, %v3168
        %3170 = vmatmul.bf16.gmra.mxu0 %v3086
        %v3171 = vpop.f32.mrf.mxu0
        %v3172 = vadd.f32 0.0, %v3171
        %v3173 = vpop.f32.mrf.mxu0
        %v3174 = vadd.f32 0.0, %v3173
        %3175 = vmatmul.bf16.gmra.mxu0 %v3087
        %v3176 = vpop.f32.mrf.mxu0
        %v3177 = vadd.f32 0.0, %v3176
        %v3178 = vpop.f32.mrf.mxu0
        %v3179 = vadd.f32 0.0, %v3178
        %3180 = vmatmul.bf16.gmra.mxu0 %v3088
        %v3181 = vpop.f32.mrf.mxu0
        %v3182 = vadd.f32 0.0, %v3181
        %v3183 = vpop.f32.mrf.mxu0
        %v3184 = vadd.f32 0.0, %v3183
        %3185 = vdwg.mxu0
        %v3186 = vmul.f32 %v3147, 0.25
        %v3187 = vmul.f32 %v3149, 0.25
        %v3188 = vmul.f32 %v3152, 0.25
        %v3189 = vmul.f32 %v3154, 0.25
        %v3190 = vmul.f32 %v3157, 0.25
        %v3191 = vmul.f32 %v3159, 0.25
        %v3192 = vmul.f32 %v3162, 0.25
        %v3193 = vmul.f32 %v3164, 0.25
        %v3194 = vmul.f32 %v3167, 0.25
        %v3195 = vmul.f32 %v3169, 0.25
        %v3196 = vmul.f32 %v3172, 0.25
        %v3197 = vmul.f32 %v3174, 0.25
        %v3198 = vmul.f32 %v3177, 0.25
        %v3199 = vmul.f32 %v3179, 0.25
        %v3200 = vmul.f32 %v3182, 0.25
        %v3201 = vmul.f32 %v3184, 0.25
        %v3202 = vsub.f32 0.0, %v3186
        %v3203 = vsub.f32 0.0, %v3187
        %v3204 = vsub.f32 0.0, %v3188
        %v3205 = vsub.f32 0.0, %v3189
        %v3206 = vsub.f32 0.0, %v3190
        %v3207 = vsub.f32 0.0, %v3191
        %v3208 = vsub.f32 0.0, %v3192
        %v3209 = vsub.f32 0.0, %v3193
        %v3210 = vsub.f32 0.0, %v3194
        %v3211 = vsub.f32 0.0, %v3195
        %v3212 = vsub.f32 0.0, %v3196
        %v3213 = vsub.f32 0.0, %v3197
        %v3214 = vsub.f32 0.0, %v3198
        %v3215 = vsub.f32 0.0, %v3199
        %v3216 = vsub.f32 0.0, %v3200
        %v3217 = vsub.f32 0.0, %v3201
        %v3218 = vmul.f32 %v3202, 1.442695
        %v3219 = vpow.pop %v3218
        %v3220 = vmul.f32 %v3203, 1.442695
        %v3221 = vpow.pop %v3220
        %v3222 = vmul.f32 %v3204, 1.442695
        %v3223 = vpow.pop %v3222
        %v3224 = vmul.f32 %v3205, 1.442695
        %v3225 = vpow.pop %v3224
        %v3226 = vmul.f32 %v3206, 1.442695
        %v3227 = vpow.pop %v3226
        %v3228 = vmul.f32 %v3207, 1.442695
        %v3229 = vpow.pop %v3228
        %v3230 = vmul.f32 %v3208, 1.442695
        %v3231 = vpow.pop %v3230
        %v3232 = vmul.f32 %v3209, 1.442695
        %v3233 = vpow.pop %v3232
        %v3234 = vmul.f32 %v3210, 1.442695
        %v3235 = vpow.pop %v3234
        %v3236 = vmul.f32 %v3211, 1.442695
        %v3237 = vpow.pop %v3236
        %v3238 = vmul.f32 %v3212, 1.442695
        %v3239 = vpow.pop %v3238
        %v3240 = vmul.f32 %v3213, 1.442695
        %v3241 = vpow.pop %v3240
        %v3242 = vmul.f32 %v3214, 1.442695
        %v3243 = vpow.pop %v3242
        %v3244 = vmul.f32 %v3215, 1.442695
        %v3245 = vpow.pop %v3244
        %v3246 = vmul.f32 %v3216, 1.442695
        %v3247 = vpow.pop %v3246
        %v3248 = vmul.f32 %v3217, 1.442695
        %v3249 = vpow.pop %v3248
        %v3250 = vadd.f32 %v3219, 1.0
        %v3251 = vadd.f32 %v3221, 1.0
        %v3252 = vadd.f32 %v3223, 1.0
        %v3253 = vadd.f32 %v3225, 1.0
        %v3254 = vadd.f32 %v3227, 1.0
        %v3255 = vadd.f32 %v3229, 1.0
        %v3256 = vadd.f32 %v3231, 1.0
        %v3257 = vadd.f32 %v3233, 1.0
        %v3258 = vadd.f32 %v3235, 1.0
        %v3259 = vadd.f32 %v3237, 1.0
        %v3260 = vadd.f32 %v3239, 1.0
        %v3261 = vadd.f32 %v3241, 1.0
        %v3262 = vadd.f32 %v3243, 1.0
        %v3263 = vadd.f32 %v3245, 1.0
        %v3264 = vadd.f32 %v3247, 1.0
        %v3265 = vadd.f32 %v3249, 1.0
        %v3266 = vrcp.pop %v3250
        %v3267 = vrcp.pop %v3251
        %v3268 = vrcp.pop %v3252
        %v3269 = vrcp.pop %v3253
        %v3270 = vrcp.pop %v3254
        %v3271 = vrcp.pop %v3255
        %v3272 = vrcp.pop %v3256
        %v3273 = vrcp.pop %v3257
        %v3274 = vrcp.pop %v3258
        %v3275 = vrcp.pop %v3259
        %v3276 = vrcp.pop %v3260
        %v3277 = vrcp.pop %v3261
        %v3278 = vrcp.pop %v3262
        %v3279 = vrcp.pop %v3263
        %v3280 = vrcp.pop %v3264
        %v3281 = vrcp.pop %v3265
        %v3282 = vsub.f32 %v2954, %v2994
        %v3283 = vsub.f32 %v2956, %v2996
        %v3284 = vsub.f32 %v2959, %v2999
        %v3285 = vsub.f32 %v2961, %v3001
        %v3286 = vsub.f32 %v2964, %v3004
        %v3287 = vsub.f32 %v2966, %v3006
        %v3288 = vsub.f32 %v2969, %v3009
        %v3289 = vsub.f32 %v2971, %v3011
        %v3290 = vsub.f32 %v2974, %v3014
        %v3291 = vsub.f32 %v2976, %v3016
        %v3292 = vsub.f32 %v2979, %v3019
        %v3293 = vsub.f32 %v2981, %v3021
        %v3294 = vsub.f32 %v2984, %v3024
        %v3295 = vsub.f32 %v2986, %v3026
        %v3296 = vsub.f32 %v2989, %v3029
        %v3297 = vsub.f32 %v2991, %v3031
        %v3298 = vmul.f32 %v3266, %v3282
        %v3299 = vmul.f32 %v3267, %v3283
        %v3300 = vmul.f32 %v3268, %v3284
        %v3301 = vmul.f32 %v3269, %v3285
        %v3302 = vmul.f32 %v3270, %v3286
        %v3303 = vmul.f32 %v3271, %v3287
        %v3304 = vmul.f32 %v3272, %v3288
        %v3305 = vmul.f32 %v3273, %v3289
        %v3306 = vmul.f32 %v3274, %v3290
        %v3307 = vmul.f32 %v3275, %v3291
        %v3308 = vmul.f32 %v3276, %v3292
        %v3309 = vmul.f32 %v3277, %v3293
        %v3310 = vmul.f32 %v3278, %v3294
        %v3311 = vmul.f32 %v3279, %v3295
        %v3312 = vmul.f32 %v3280, %v3296
        %v3313 = vmul.f32 %v3281, %v3297
        %v3314 = vadd.f32 %v2994, %v3298
        %v3315 = vadd.f32 %v2996, %v3299
        %v3316 = vadd.f32 %v2999, %v3300
        %v3317 = vadd.f32 %v3001, %v3301
        %v3318 = vadd.f32 %v3004, %v3302
        %v3319 = vadd.f32 %v3006, %v3303
        %v3320 = vadd.f32 %v3009, %v3304
        %v3321 = vadd.f32 %v3011, %v3305
        %v3322 = vadd.f32 %v3014, %v3306
        %v3323 = vadd.f32 %v3016, %v3307
        %v3324 = vadd.f32 %v3019, %v3308
        %v3325 = vadd.f32 %v3021, %v3309
        %v3326 = vadd.f32 %v3024, %v3310
        %v3327 = vadd.f32 %v3026, %v3311
        %v3328 = vadd.f32 %v3029, %v3312
        %v3329 = vadd.f32 %v3031, %v3313
        %v3330 = vld [vmem:[#allocation11] sm:$0xf]
        %v3331 = vld [vmem:[#allocation11 + $0x4] sm:$0xf]
        %v3332 = vld [vmem:[#allocation11 + $0x8] sm:$0xf]
        %v3333 = vld [vmem:[#allocation11 + $0xc] sm:$0xf]
        %v3334 = vld [vmem:[#allocation11 + $0x10] sm:$0xf]
        %v3335 = vld [vmem:[#allocation11 + $0x14] sm:$0xf]
        %v3336 = vld [vmem:[#allocation11 + $0x18] sm:$0xf]
        %v3337 = vld [vmem:[#allocation11 + $0x1c] sm:$0xf]
        %v3338 = vld [vmem:[#allocation11 + $0x20] sm:$0xf]
        %v3339 = vld [vmem:[#allocation11 + $0x24] sm:$0xf]
        %v3340 = vld [vmem:[#allocation11 + $0x28] sm:$0xf]
        %v3341 = vld [vmem:[#allocation11 + $0x2c] sm:$0xf]
        %v3342 = vld [vmem:[#allocation11 + $0x30] sm:$0xf]
        %v3343 = vld [vmem:[#allocation11 + $0x34] sm:$0xf]
        %v3344 = vld [vmem:[#allocation11 + $0x38] sm:$0xf]
        %v3345 = vld [vmem:[#allocation11 + $0x3c] sm:$0xf]
        %v3346 = vpack.c.bf16 %v3315, %v3314
        %v3347 = vpack.c.bf16 %v3317, %v3316
        %v3348 = vpack.c.bf16 %v3319, %v3318
        %v3349 = vpack.c.bf16 %v3321, %v3320
        %v3350 = vpack.c.bf16 %v3323, %v3322
        %v3351 = vpack.c.bf16 %v3325, %v3324
        %v3352 = vpack.c.bf16 %v3327, %v3326
        %v3353 = vpack.c.bf16 %v3329, %v3328
        %v3354 = vld [vmem:[#allocation16] sm:$0x1]
        %v3356 = vperm.slane %v3354, 0
        %v3374 = vunpack.c.l.b16 %v3330
        %v3375 = vunpack.c.l.b16 %v3331
        %v3376 = vunpack.c.l.b16 %v3332
        %v3377 = vunpack.c.l.b16 %v3333
        %v3378 = vunpack.c.l.b16 %v3334
        %v3379 = vunpack.c.l.b16 %v3335
        %v3380 = vunpack.c.l.b16 %v3336
        %v3381 = vunpack.c.l.b16 %v3337
        %v3382 = vunpack.c.l.b16 %v3338
        %v3383 = vunpack.c.l.b16 %v3339
        %v3384 = vunpack.c.l.b16 %v3340
        %v3385 = vunpack.c.l.b16 %v3341
        %v3386 = vunpack.c.l.b16 %v3342
        %v3387 = vunpack.c.l.b16 %v3343
        %v3388 = vunpack.c.l.b16 %v3344
        %v3389 = vunpack.c.l.b16 %v3345
        %v3390 = vpack.c.b16 %v3375, %v3374
        %v3391 = vpack.c.b16 %v3377, %v3376
        %v3392 = vpack.c.b16 %v3379, %v3378
        %v3393 = vpack.c.b16 %v3381, %v3380
        %v3394 = vpack.c.b16 %v3383, %v3382
        %v3395 = vpack.c.b16 %v3385, %v3384
        %v3396 = vpack.c.b16 %v3387, %v3386
        %v3397 = vpack.c.b16 %v3389, %v3388
        %3406 = vmatpush.bf16.msra.mxu0 %v3397
        %3407 = vmatpush.bf16.msra.mxu0 %v3396
        %3408 = vmatpush.bf16.msra.mxu0 %v3395
        %3409 = vmatpush.bf16.msra.mxu0 %v3394
        %3410 = vmatpush.bf16.msra.mxu0 %v3393
        %3411 = vmatpush.bf16.msra.mxu0 %v3392
        %3412 = vmatpush.bf16.msra.mxu0 %v3391
        %3413 = vmatpush.bf16.msra.mxu0 %v3390
        %3414 = vmatmul.bf16.gmra.mxu0 %v3346
        %v3415 = vpop.f32.mrf.mxu0
        %v3416 = vadd.f32 %v3356, %v3415
        %v3417 = vpop.f32.mrf.mxu0
        %v3418 = vadd.f32 %v3356, %v3417
        %3419 = vmatmul.bf16.gmra.mxu0 %v3347
        %v3420 = vpop.f32.mrf.mxu0
        %v3421 = vadd.f32 %v3356, %v3420
        %v3422 = vpop.f32.mrf.mxu0
        %v3423 = vadd.f32 %v3356, %v3422
        %3424 = vmatmul.bf16.gmra.mxu0 %v3348
        %v3425 = vpop.f32.mrf.mxu0
        %v3426 = vadd.f32 %v3356, %v3425
        %v3427 = vpop.f32.mrf.mxu0
        %v3428 = vadd.f32 %v3356, %v3427
        %3429 = vmatmul.bf16.gmra.mxu0 %v3349
        %v3430 = vpop.f32.mrf.mxu0
        %v3431 = vadd.f32 %v3356, %v3430
        %v3432 = vpop.f32.mrf.mxu0
        %v3433 = vadd.f32 %v3356, %v3432
        %3434 = vmatmul.bf16.gmra.mxu0 %v3350
        %v3435 = vpop.f32.mrf.mxu0
        %v3436 = vadd.f32 %v3356, %v3435
        %v3437 = vpop.f32.mrf.mxu0
        %v3438 = vadd.f32 %v3356, %v3437
        %3439 = vmatmul.bf16.gmra.mxu0 %v3351
        %v3440 = vpop.f32.mrf.mxu0
        %v3441 = vadd.f32 %v3356, %v3440
        %v3442 = vpop.f32.mrf.mxu0
        %v3443 = vadd.f32 %v3356, %v3442
        %3444 = vmatmul.bf16.gmra.mxu0 %v3352
        %v3445 = vpop.f32.mrf.mxu0
        %v3446 = vadd.f32 %v3356, %v3445
        %v3447 = vpop.f32.mrf.mxu0
        %v3448 = vadd.f32 %v3356, %v3447
        %3449 = vmatmul.bf16.gmra.mxu0 %v3353
        %v3450 = vpop.f32.mrf.mxu0
        %v3451 = vadd.f32 %v3356, %v3450
        %v3452 = vpop.f32.mrf.mxu0
        %v3453 = vadd.f32 %v3356, %v3452
        %3454 = vdwg.mxu0
        %v3455 = vadd.f32 %v1514, %v3416
        %v3456 = vadd.f32 %v1515, %v3418
        %v3457 = vadd.f32 %v1516, %v3421
        %v3458 = vadd.f32 %v1517, %v3423
        %v3459 = vadd.f32 %v1518, %v3426
        %v3460 = vadd.f32 %v1519, %v3428
        %v3461 = vadd.f32 %v1520, %v3431
        %v3462 = vadd.f32 %v1521, %v3433
        %v3463 = vadd.f32 %v1522, %v3436
        %v3464 = vadd.f32 %v1523, %v3438
        %v3465 = vadd.f32 %v1524, %v3441
        %v3466 = vadd.f32 %v1525, %v3443
        %v3467 = vadd.f32 %v1526, %v3446
        %v3468 = vadd.f32 %v1527, %v3448
        %v3469 = vadd.f32 %v1528, %v3451
        %v3470 = vadd.f32 %v1529, %v3453
        %3471 = vadd.xlane.f32.xlu0 %v3455
        %v3472 = vpop.xlane.xlu0 %3471
        %3473 = vadd.xlane.f32.xlu0 %v3456
        %v3474 = vpop.xlane.xlu0 %3473
        %3475 = vadd.xlane.f32.xlu0 %v3457
        %v3476 = vpop.xlane.xlu0 %3475
        %3477 = vadd.xlane.f32.xlu0 %v3458
        %v3478 = vpop.xlane.xlu0 %3477
        %3479 = vadd.xlane.f32.xlu0 %v3459
        %v3480 = vpop.xlane.xlu0 %3479
        %3481 = vadd.xlane.f32.xlu0 %v3460
        %v3482 = vpop.xlane.xlu0 %3481
        %3483 = vadd.xlane.f32.xlu0 %v3461
        %v3484 = vpop.xlane.xlu0 %3483
        %3485 = vadd.xlane.f32.xlu0 %v3462
        %v3486 = vpop.xlane.xlu0 %3485
        %3487 = vadd.xlane.f32.xlu0 %v3463
        %v3488 = vpop.xlane.xlu0 %3487
        %3489 = vadd.xlane.f32.xlu0 %v3464
        %v3490 = vpop.xlane.xlu0 %3489
        %3491 = vadd.xlane.f32.xlu0 %v3465
        %v3492 = vpop.xlane.xlu0 %3491
        %3493 = vadd.xlane.f32.xlu0 %v3466
        %v3494 = vpop.xlane.xlu0 %3493
        %3495 = vadd.xlane.f32.xlu0 %v3467
        %v3496 = vpop.xlane.xlu0 %3495
        %3497 = vadd.xlane.f32.xlu0 %v3468
        %v3498 = vpop.xlane.xlu0 %3497
        %3499 = vadd.xlane.f32.xlu0 %v3469
        %v3500 = vpop.xlane.xlu0 %3499
        %3501 = vadd.xlane.f32.xlu0 %v3470
        %v3502 = vpop.xlane.xlu0 %3501
        %v3503 = vmul.f32 %v3472, %v1207
        %v3504 = vmul.f32 %v3474, %v1207
        %v3505 = vmul.f32 %v3476, %v1207
        %v3506 = vmul.f32 %v3478, %v1207
        %v3507 = vmul.f32 %v3480, %v1207
        %v3508 = vmul.f32 %v3482, %v1207
        %v3509 = vmul.f32 %v3484, %v1207
        %v3510 = vmul.f32 %v3486, %v1207
        %v3511 = vmul.f32 %v3488, %v1207
        %v3512 = vmul.f32 %v3490, %v1207
        %v3513 = vmul.f32 %v3492, %v1207
        %v3514 = vmul.f32 %v3494, %v1207
        %v3515 = vmul.f32 %v3496, %v1207
        %v3516 = vmul.f32 %v3498, %v1207
        %v3517 = vmul.f32 %v3500, %v1207
        %v3518 = vmul.f32 %v3502, %v1207
        %v3519 = vsub.f32 %v3455, %v3503
        %v3520 = vsub.f32 %v3456, %v3504
        %v3521 = vsub.f32 %v3457, %v3505
        %v3522 = vsub.f32 %v3458, %v3506
        %v3523 = vsub.f32 %v3459, %v3507
        %v3524 = vsub.f32 %v3460, %v3508
        %v3525 = vsub.f32 %v3461, %v3509
        %v3526 = vsub.f32 %v3462, %v3510
        %v3527 = vsub.f32 %v3463, %v3511
        %v3528 = vsub.f32 %v3464, %v3512
        %v3529 = vsub.f32 %v3465, %v3513
        %v3530 = vsub.f32 %v3466, %v3514
        %v3531 = vsub.f32 %v3467, %v3515
        %v3532 = vsub.f32 %v3468, %v3516
        %v3533 = vsub.f32 %v3469, %v3517
        %v3534 = vsub.f32 %v3470, %v3518
        %v3535 = vmul.f32 %v3519, %v3519
        %v3536 = vmul.f32 %v3520, %v3520
        %v3537 = vmul.f32 %v3521, %v3521
        %v3538 = vmul.f32 %v3522, %v3522
        %v3539 = vmul.f32 %v3523, %v3523
        %v3540 = vmul.f32 %v3524, %v3524
        %v3541 = vmul.f32 %v3525, %v3525
        %v3542 = vmul.f32 %v3526, %v3526
        %v3543 = vmul.f32 %v3527, %v3527
        %v3544 = vmul.f32 %v3528, %v3528
        %v3545 = vmul.f32 %v3529, %v3529
        %v3546 = vmul.f32 %v3530, %v3530
        %v3547 = vmul.f32 %v3531, %v3531
        %v3548 = vmul.f32 %v3532, %v3532
        %v3549 = vmul.f32 %v3533, %v3533
        %v3550 = vmul.f32 %v3534, %v3534
        %3551 = vadd.xlane.f32.xlu0 %v3535
        %v3552 = vpop.xlane.xlu0 %3551
        %3553 = vadd.xlane.f32.xlu0 %v3536
        %v3554 = vpop.xlane.xlu0 %3553
        %3555 = vadd.xlane.f32.xlu0 %v3537
        %v3556 = vpop.xlane.xlu0 %3555
        %3557 = vadd.xlane.f32.xlu0 %v3538
        %v3558 = vpop.xlane.xlu0 %3557
        %3559 = vadd.xlane.f32.xlu0 %v3539
        %v3560 = vpop.xlane.xlu0 %3559
        %3561 = vadd.xlane.f32.xlu0 %v3540
        %v3562 = vpop.xlane.xlu0 %3561
        %3563 = vadd.xlane.f32.xlu0 %v3541
        %v3564 = vpop.xlane.xlu0 %3563
        %3565 = vadd.xlane.f32.xlu0 %v3542
        %v3566 = vpop.xlane.xlu0 %3565
        %3567 = vadd.xlane.f32.xlu0 %v3543
        %v3568 = vpop.xlane.xlu0 %3567
        %3569 = vadd.xlane.f32.xlu0 %v3544
        %v3570 = vpop.xlane.xlu0 %3569
        %3571 = vadd.xlane.f32.xlu0 %v3545
        %v3572 = vpop.xlane.xlu0 %3571
        %3573 = vadd.xlane.f32.xlu0 %v3546
        %v3574 = vpop.xlane.xlu0 %3573
        %3575 = vadd.xlane.f32.xlu0 %v3547
        %v3576 = vpop.xlane.xlu0 %3575
        %3577 = vadd.xlane.f32.xlu0 %v3548
        %v3578 = vpop.xlane.xlu0 %3577
        %3579 = vadd.xlane.f32.xlu0 %v3549
        %v3580 = vpop.xlane.xlu0 %3579
        %3581 = vadd.xlane.f32.xlu0 %v3550
        %v3582 = vpop.xlane.xlu0 %3581
        %v3583 = vmul.f32 %v3552, %v1207
        %v3584 = vmul.f32 %v3554, %v1207
        %v3585 = vmul.f32 %v3556, %v1207
        %v3586 = vmul.f32 %v3558, %v1207
        %v3587 = vmul.f32 %v3560, %v1207
        %v3588 = vmul.f32 %v3562, %v1207
        %v3589 = vmul.f32 %v3564, %v1207
        %v3590 = vmul.f32 %v3566, %v1207
        %v3591 = vmul.f32 %v3568, %v1207
        %v3592 = vmul.f32 %v3570, %v1207
        %v3593 = vmul.f32 %v3572, %v1207
        %v3594 = vmul.f32 %v3574, %v1207
        %v3595 = vmul.f32 %v3576, %v1207
        %v3596 = vmul.f32 %v3578, %v1207
        %v3597 = vmul.f32 %v3580, %v1207
        %v3598 = vmul.f32 %v3582, %v1207
        %v3599 = vadd.f32 %v3583, 1e-05
        %v3600 = vadd.f32 %v3584, 1e-05
        %v3601 = vadd.f32 %v3585, 1e-05
        %v3602 = vadd.f32 %v3586, 1e-05
        %v3603 = vadd.f32 %v3587, 1e-05
        %v3604 = vadd.f32 %v3588, 1e-05
        %v3605 = vadd.f32 %v3589, 1e-05
        %v3606 = vadd.f32 %v3590, 1e-05
        %v3607 = vadd.f32 %v3591, 1e-05
        %v3608 = vadd.f32 %v3592, 1e-05
        %v3609 = vadd.f32 %v3593, 1e-05
        %v3610 = vadd.f32 %v3594, 1e-05
        %v3611 = vadd.f32 %v3595, 1e-05
        %v3612 = vadd.f32 %v3596, 1e-05
        %v3613 = vadd.f32 %v3597, 1e-05
        %v3614 = vadd.f32 %v3598, 1e-05
        %v3615 = vrsqrt.pop %v3599
        %v3616 = vmul.f32 %v3615, %v3599
        %v3617 = vmul.f32 %v3616, %v3615
        %v3618 = vmul.f32 0.5, %v3617
        %v3619 = vsub.f32 1.5, %v3618
        %v3620 = vmul.f32 %v3615, %v3619
        %vm3621 = vweird.f32 %v3599
        %vm3622 = vweird.f32 %v3615
        %vm3623 = vmor %vm3621, %vm3622
        %v3624 = vsel %vm3623, %v3615, %v3620
        %v3625 = vrsqrt.pop %v3600
        %v3626 = vmul.f32 %v3625, %v3600
        %v3627 = vmul.f32 %v3626, %v3625
        %v3628 = vmul.f32 0.5, %v3627
        %v3629 = vsub.f32 1.5, %v3628
        %v3630 = vmul.f32 %v3625, %v3629
        %vm3631 = vweird.f32 %v3600
        %vm3632 = vweird.f32 %v3625
        %vm3633 = vmor %vm3631, %vm3632
        %v3634 = vsel %vm3633, %v3625, %v3630
        %v3635 = vrsqrt.pop %v3601
        %v3636 = vmul.f32 %v3635, %v3601
        %v3637 = vmul.f32 %v3636, %v3635
        %v3638 = vmul.f32 0.5, %v3637
        %v3639 = vsub.f32 1.5, %v3638
        %v3640 = vmul.f32 %v3635, %v3639
        %vm3641 = vweird.f32 %v3601
        %vm3642 = vweird.f32 %v3635
        %vm3643 = vmor %vm3641, %vm3642
        %v3644 = vsel %vm3643, %v3635, %v3640
        %v3645 = vrsqrt.pop %v3602
        %v3646 = vmul.f32 %v3645, %v3602
        %v3647 = vmul.f32 %v3646, %v3645
        %v3648 = vmul.f32 0.5, %v3647
        %v3649 = vsub.f32 1.5, %v3648
        %v3650 = vmul.f32 %v3645, %v3649
        %vm3651 = vweird.f32 %v3602
        %vm3652 = vweird.f32 %v3645
        %vm3653 = vmor %vm3651, %vm3652
        %v3654 = vsel %vm3653, %v3645, %v3650
        %v3655 = vrsqrt.pop %v3603
        %v3656 = vmul.f32 %v3655, %v3603
        %v3657 = vmul.f32 %v3656, %v3655
        %v3658 = vmul.f32 0.5, %v3657
        %v3659 = vsub.f32 1.5, %v3658
        %v3660 = vmul.f32 %v3655, %v3659
        %vm3661 = vweird.f32 %v3603
        %vm3662 = vweird.f32 %v3655
        %vm3663 = vmor %vm3661, %vm3662
        %v3664 = vsel %vm3663, %v3655, %v3660
        %v3665 = vrsqrt.pop %v3604
        %v3666 = vmul.f32 %v3665, %v3604
        %v3667 = vmul.f32 %v3666, %v3665
        %v3668 = vmul.f32 0.5, %v3667
        %v3669 = vsub.f32 1.5, %v3668
        %v3670 = vmul.f32 %v3665, %v3669
        %vm3671 = vweird.f32 %v3604
        %vm3672 = vweird.f32 %v3665
        %vm3673 = vmor %vm3671, %vm3672
        %v3674 = vsel %vm3673, %v3665, %v3670
        %v3675 = vrsqrt.pop %v3605
        %v3676 = vmul.f32 %v3675, %v3605
        %v3677 = vmul.f32 %v3676, %v3675
        %v3678 = vmul.f32 0.5, %v3677
        %v3679 = vsub.f32 1.5, %v3678
        %v3680 = vmul.f32 %v3675, %v3679
        %vm3681 = vweird.f32 %v3605
        %vm3682 = vweird.f32 %v3675
        %vm3683 = vmor %vm3681, %vm3682
        %v3684 = vsel %vm3683, %v3675, %v3680
        %v3685 = vrsqrt.pop %v3606
        %v3686 = vmul.f32 %v3685, %v3606
        %v3687 = vmul.f32 %v3686, %v3685
        %v3688 = vmul.f32 0.5, %v3687
        %v3689 = vsub.f32 1.5, %v3688
        %v3690 = vmul.f32 %v3685, %v3689
        %vm3691 = vweird.f32 %v3606
        %vm3692 = vweird.f32 %v3685
        %vm3693 = vmor %vm3691, %vm3692
        %v3694 = vsel %vm3693, %v3685, %v3690
        %v3695 = vrsqrt.pop %v3607
        %v3696 = vmul.f32 %v3695, %v3607
        %v3697 = vmul.f32 %v3696, %v3695
        %v3698 = vmul.f32 0.5, %v3697
        %v3699 = vsub.f32 1.5, %v3698
        %v3700 = vmul.f32 %v3695, %v3699
        %vm3701 = vweird.f32 %v3607
        %vm3702 = vweird.f32 %v3695
        %vm3703 = vmor %vm3701, %vm3702
        %v3704 = vsel %vm3703, %v3695, %v3700
        %v3705 = vrsqrt.pop %v3608
        %v3706 = vmul.f32 %v3705, %v3608
        %v3707 = vmul.f32 %v3706, %v3705
        %v3708 = vmul.f32 0.5, %v3707
        %v3709 = vsub.f32 1.5, %v3708
        %v3710 = vmul.f32 %v3705, %v3709
        %vm3711 = vweird.f32 %v3608
        %vm3712 = vweird.f32 %v3705
        %vm3713 = vmor %vm3711, %vm3712
        %v3714 = vsel %vm3713, %v3705, %v3710
        %v3715 = vrsqrt.pop %v3609
        %v3716 = vmul.f32 %v3715, %v3609
        %v3717 = vmul.f32 %v3716, %v3715
        %v3718 = vmul.f32 0.5, %v3717
        %v3719 = vsub.f32 1.5, %v3718
        %v3720 = vmul.f32 %v3715, %v3719
        %vm3721 = vweird.f32 %v3609
        %vm3722 = vweird.f32 %v3715
        %vm3723 = vmor %vm3721, %vm3722
        %v3724 = vsel %vm3723, %v3715, %v3720
        %v3725 = vrsqrt.pop %v3610
        %v3726 = vmul.f32 %v3725, %v3610
        %v3727 = vmul.f32 %v3726, %v3725
        %v3728 = vmul.f32 0.5, %v3727
        %v3729 = vsub.f32 1.5, %v3728
        %v3730 = vmul.f32 %v3725, %v3729
        %vm3731 = vweird.f32 %v3610
        %vm3732 = vweird.f32 %v3725
        %vm3733 = vmor %vm3731, %vm3732
        %v3734 = vsel %vm3733, %v3725, %v3730
        %v3735 = vrsqrt.pop %v3611
        %v3736 = vmul.f32 %v3735, %v3611
        %v3737 = vmul.f32 %v3736, %v3735
        %v3738 = vmul.f32 0.5, %v3737
        %v3739 = vsub.f32 1.5, %v3738
        %v3740 = vmul.f32 %v3735, %v3739
        %vm3741 = vweird.f32 %v3611
        %vm3742 = vweird.f32 %v3735
        %vm3743 = vmor %vm3741, %vm3742
        %v3744 = vsel %vm3743, %v3735, %v3740
        %v3745 = vrsqrt.pop %v3612
        %v3746 = vmul.f32 %v3745, %v3612
        %v3747 = vmul.f32 %v3746, %v3745
        %v3748 = vmul.f32 0.5, %v3747
        %v3749 = vsub.f32 1.5, %v3748
        %v3750 = vmul.f32 %v3745, %v3749
        %vm3751 = vweird.f32 %v3612
        %vm3752 = vweird.f32 %v3745
        %vm3753 = vmor %vm3751, %vm3752
        %v3754 = vsel %vm3753, %v3745, %v3750
        %v3755 = vrsqrt.pop %v3613
        %v3756 = vmul.f32 %v3755, %v3613
        %v3757 = vmul.f32 %v3756, %v3755
        %v3758 = vmul.f32 0.5, %v3757
        %v3759 = vsub.f32 1.5, %v3758
        %v3760 = vmul.f32 %v3755, %v3759
        %vm3761 = vweird.f32 %v3613
        %vm3762 = vweird.f32 %v3755
        %vm3763 = vmor %vm3761, %vm3762
        %v3764 = vsel %vm3763, %v3755, %v3760
        %v3765 = vrsqrt.pop %v3614
        %v3766 = vmul.f32 %v3765, %v3614
        %v3767 = vmul.f32 %v3766, %v3765
        %v3768 = vmul.f32 0.5, %v3767
        %v3769 = vsub.f32 1.5, %v3768
        %v3770 = vmul.f32 %v3765, %v3769
        %vm3771 = vweird.f32 %v3614
        %vm3772 = vweird.f32 %v3765
        %vm3773 = vmor %vm3771, %vm3772
        %v3774 = vsel %vm3773, %v3765, %v3770
        %v3775 = vmul.f32 %v3519, %v3624
        %v3776 = vmul.f32 %v3520, %v3634
        %v3777 = vmul.f32 %v3521, %v3644
        %v3778 = vmul.f32 %v3522, %v3654
        %v3779 = vmul.f32 %v3523, %v3664
        %v3780 = vmul.f32 %v3524, %v3674
        %v3781 = vmul.f32 %v3525, %v3684
        %v3782 = vmul.f32 %v3526, %v3694
        %v3783 = vmul.f32 %v3527, %v3704
        %v3784 = vmul.f32 %v3528, %v3714
        %v3785 = vmul.f32 %v3529, %v3724
        %v3786 = vmul.f32 %v3530, %v3734
        %v3787 = vmul.f32 %v3531, %v3744
        %v3788 = vmul.f32 %v3532, %v3754
        %v3789 = vmul.f32 %v3533, %v3764
        %v3790 = vmul.f32 %v3534, %v3774
        %v3791 = vperm.slane %v906, 1
        %v3792 = vmul.f32 %v3775, %v3791
        %v3793 = vmul.f32 %v3776, %v3791
        %v3794 = vmul.f32 %v3777, %v3791
        %v3795 = vmul.f32 %v3778, %v3791
        %v3796 = vmul.f32 %v3779, %v3791
        %v3797 = vmul.f32 %v3780, %v3791
        %v3798 = vmul.f32 %v3781, %v3791
        %v3799 = vmul.f32 %v3782, %v3791
        %v3800 = vmul.f32 %v3783, %v3791
        %v3801 = vmul.f32 %v3784, %v3791
        %v3802 = vmul.f32 %v3785, %v3791
        %v3803 = vmul.f32 %v3786, %v3791
        %v3804 = vmul.f32 %v3787, %v3791
        %v3805 = vmul.f32 %v3788, %v3791
        %v3806 = vmul.f32 %v3789, %v3791
        %v3807 = vmul.f32 %v3790, %v3791
        %v3808 = vperm.slane %v907, 1
        %v3809 = vadd.f32 %v3792, %v3808
        %v3810 = vadd.f32 %v3793, %v3808
        %v3811 = vadd.f32 %v3794, %v3808
        %v3812 = vadd.f32 %v3795, %v3808
        %v3813 = vadd.f32 %v3796, %v3808
        %v3814 = vadd.f32 %v3797, %v3808
        %v3815 = vadd.f32 %v3798, %v3808
        %v3816 = vadd.f32 %v3799, %v3808
        %v3817 = vadd.f32 %v3800, %v3808
        %v3818 = vadd.f32 %v3801, %v3808
        %v3819 = vadd.f32 %v3802, %v3808
        %v3820 = vadd.f32 %v3803, %v3808
        %v3821 = vadd.f32 %v3804, %v3808
        %v3822 = vadd.f32 %v3805, %v3808
        %v3823 = vadd.f32 %v3806, %v3808
        %v3824 = vadd.f32 %v3807, %v3808
        %v3825 = vld [vmem:[#allocation17] sm:$0xff]
        %v3826 = vld [vmem:[#allocation17 + $0x8] sm:$0xf]
        %v3827 = vld [vmem:[#allocation17 + $0xc] sm:$0xff]
        %v3828 = vld [vmem:[#allocation17 + $0x14] sm:$0xf]
        %v3829 = vld [vmem:[#allocation17 + $0x18] sm:$0xff]
        %v3830 = vld [vmem:[#allocation17 + $0x20] sm:$0xf]
        %v3831 = vld [vmem:[#allocation17 + $0x24] sm:$0xff]
        %v3832 = vld [vmem:[#allocation17 + $0x2c] sm:$0xf]
        %v3833 = vld [vmem:[#allocation17 + $0x30] sm:$0xff]
        %v3834 = vld [vmem:[#allocation17 + $0x38] sm:$0xf]
        %v3835 = vld [vmem:[#allocation17 + $0x3c] sm:$0xff]
        %v3836 = vld [vmem:[#allocation17 + $0x44] sm:$0xf]
        %v3837 = vld [vmem:[#allocation17 + $0x48] sm:$0xff]
        %v3838 = vld [vmem:[#allocation17 + $0x50] sm:$0xf]
        %v3839 = vld [vmem:[#allocation17 + $0x54] sm:$0xff]
        %v3840 = vld [vmem:[#allocation17 + $0x5c] sm:$0xf]
        %v3841 = vld [vmem:[#allocation17 + $0x60] sm:$0xff]
        %v3842 = vld [vmem:[#allocation17 + $0x68] sm:$0xf]
        %v3843 = vld [vmem:[#allocation17 + $0x6c] sm:$0xff]
        %v3844 = vld [vmem:[#allocation17 + $0x74] sm:$0xf]
        %v3845 = vld [vmem:[#allocation17 + $0x78] sm:$0xff]
        %v3846 = vld [vmem:[#allocation17 + $0x80] sm:$0xf]
        %v3847 = vld [vmem:[#allocation17 + $0x84] sm:$0xff]
        %v3848 = vld [vmem:[#allocation17 + $0x8c] sm:$0xf]
        %v3849 = vld [vmem:[#allocation17 + $0x90] sm:$0xff]
        %v3850 = vld [vmem:[#allocation17 + $0x98] sm:$0xf]
        %v3851 = vld [vmem:[#allocation17 + $0x9c] sm:$0xff]
        %v3852 = vld [vmem:[#allocation17 + $0xa4] sm:$0xf]
        %v3853 = vld [vmem:[#allocation17 + $0xa8] sm:$0xff]
        %v3854 = vld [vmem:[#allocation17 + $0xb0] sm:$0xf]
        %v3855 = vld [vmem:[#allocation17 + $0xb4] sm:$0xff]
        %v3856 = vld [vmem:[#allocation17 + $0xbc] sm:$0xf]
        %v3857 = vpack.c.bf16 %v3810, %v3809
        %v3858 = vpack.c.bf16 %v3812, %v3811
        %v3859 = vpack.c.bf16 %v3814, %v3813
        %v3860 = vpack.c.bf16 %v3816, %v3815
        %v3861 = vpack.c.bf16 %v3818, %v3817
        %v3862 = vpack.c.bf16 %v3820, %v3819
        %v3863 = vpack.c.bf16 %v3822, %v3821
        %v3864 = vpack.c.bf16 %v3824, %v3823
        %v3865 = vld [vmem:[#allocation20] sm:$0x7]
        %v3867 = vperm.slane %v3865, 0
        %v3868 = vperm.slane %v3865, 1
        %v3869 = vperm.slane %v3865, 2
        %v3905 = vunpack.c.l.b16 %v3825
        %v3906 = vunpack.c.h.b16 %v3825
        %v3907 = vunpack.c.l.b16 %v3826
        %v3908 = vunpack.c.l.b16 %v3827
        %v3909 = vunpack.c.h.b16 %v3827
        %v3910 = vunpack.c.l.b16 %v3828
        %v3911 = vunpack.c.l.b16 %v3829
        %v3912 = vunpack.c.h.b16 %v3829
        %v3913 = vunpack.c.l.b16 %v3830
        %v3914 = vunpack.c.l.b16 %v3831
        %v3915 = vunpack.c.h.b16 %v3831
        %v3916 = vunpack.c.l.b16 %v3832
        %v3917 = vunpack.c.l.b16 %v3833
        %v3918 = vunpack.c.h.b16 %v3833
        %v3919 = vunpack.c.l.b16 %v3834
        %v3920 = vunpack.c.l.b16 %v3835
        %v3921 = vunpack.c.h.b16 %v3835
        %v3922 = vunpack.c.l.b16 %v3836
        %v3923 = vunpack.c.l.b16 %v3837
        %v3924 = vunpack.c.h.b16 %v3837
        %v3925 = vunpack.c.l.b16 %v3838
        %v3926 = vunpack.c.l.b16 %v3839
        %v3927 = vunpack.c.h.b16 %v3839
        %v3928 = vunpack.c.l.b16 %v3840
        %v3929 = vunpack.c.l.b16 %v3841
        %v3930 = vunpack.c.h.b16 %v3841
        %v3931 = vunpack.c.l.b16 %v3842
        %v3932 = vunpack.c.l.b16 %v3843
        %v3933 = vunpack.c.h.b16 %v3843
        %v3934 = vunpack.c.l.b16 %v3844
        %v3935 = vunpack.c.l.b16 %v3845
        %v3936 = vunpack.c.h.b16 %v3845
        %v3937 = vunpack.c.l.b16 %v3846
        %v3938 = vunpack.c.l.b16 %v3847
        %v3939 = vunpack.c.h.b16 %v3847
        %v3940 = vunpack.c.l.b16 %v3848
        %v3941 = vunpack.c.l.b16 %v3849
        %v3942 = vunpack.c.h.b16 %v3849
        %v3943 = vunpack.c.l.b16 %v3850
        %v3944 = vunpack.c.l.b16 %v3851
        %v3945 = vunpack.c.h.b16 %v3851
        %v3946 = vunpack.c.l.b16 %v3852
        %v3947 = vunpack.c.l.b16 %v3853
        %v3948 = vunpack.c.h.b16 %v3853
        %v3949 = vunpack.c.l.b16 %v3854
        %v3950 = vunpack.c.l.b16 %v3855
        %v3951 = vunpack.c.h.b16 %v3855
        %v3952 = vunpack.c.l.b16 %v3856
        %v3953 = vpack.c.b16 %v3908, %v3905
        %v3954 = vpack.c.b16 %v3909, %v3906
        %v3955 = vpack.c.b16 %v3910, %v3907
        %v3956 = vpack.c.b16 %v3914, %v3911
        %v3957 = vpack.c.b16 %v3915, %v3912
        %v3958 = vpack.c.b16 %v3916, %v3913
        %v3959 = vpack.c.b16 %v3920, %v3917
        %v3960 = vpack.c.b16 %v3921, %v3918
        %v3961 = vpack.c.b16 %v3922, %v3919
        %v3962 = vpack.c.b16 %v3926, %v3923
        %v3963 = vpack.c.b16 %v3927, %v3924
        %v3964 = vpack.c.b16 %v3928, %v3925
        %v3965 = vpack.c.b16 %v3932, %v3929
        %v3966 = vpack.c.b16 %v3933, %v3930
        %v3967 = vpack.c.b16 %v3934, %v3931
        %v3968 = vpack.c.b16 %v3938, %v3935
        %v3969 = vpack.c.b16 %v3939, %v3936
        %v3970 = vpack.c.b16 %v3940, %v3937
        %v3971 = vpack.c.b16 %v3944, %v3941
        %v3972 = vpack.c.b16 %v3945, %v3942
        %v3973 = vpack.c.b16 %v3946, %v3943
        %v3974 = vpack.c.b16 %v3950, %v3947
        %v3975 = vpack.c.b16 %v3951, %v3948
        %v3976 = vpack.c.b16 %v3952, %v3949
        %4001 = vmatpush.bf16.msra.mxu0 %v3974
        %4002 = vmatpush.bf16.msra.mxu0 %v3971
        %4003 = vmatpush.bf16.msra.mxu0 %v3968
        %4004 = vmatpush.bf16.msra.mxu0 %v3965
        %4005 = vmatpush.bf16.msra.mxu0 %v3962
        %4006 = vmatpush.bf16.msra.mxu0 %v3959
        %4007 = vmatpush.bf16.msra.mxu0 %v3956
        %4008 = vmatpush.bf16.msra.mxu0 %v3953
        %4009 = vmatmul.bf16.gmra.mxu0 %v3857
        %v4010 = vpop.f32.mrf.mxu0
        %v4011 = vadd.f32 %v3867, %v4010
        %v4012 = vpop.f32.mrf.mxu0
        %v4013 = vadd.f32 %v3867, %v4012
        %4014 = vmatmul.bf16.gmra.mxu0 %v3858
        %v4015 = vpop.f32.mrf.mxu0
        %v4016 = vadd.f32 %v3867, %v4015
        %v4017 = vpop.f32.mrf.mxu0
        %v4018 = vadd.f32 %v3867, %v4017
        %4019 = vmatmul.bf16.gmra.mxu0 %v3859
        %v4020 = vpop.f32.mrf.mxu0
        %v4021 = vadd.f32 %v3867, %v4020
        %v4022 = vpop.f32.mrf.mxu0
        %v4023 = vadd.f32 %v3867, %v4022
        %4024 = vmatmul.bf16.gmra.mxu0 %v3860
        %v4025 = vpop.f32.mrf.mxu0
        %v4026 = vadd.f32 %v3867, %v4025
        %v4027 = vpop.f32.mrf.mxu0
        %v4028 = vadd.f32 %v3867, %v4027
        %4029 = vmatmul.bf16.gmra.mxu0 %v3861
        %v4030 = vpop.f32.mrf.mxu0
        %v4031 = vadd.f32 %v3867, %v4030
        %v4032 = vpop.f32.mrf.mxu0
        %v4033 = vadd.f32 %v3867, %v4032
        %4034 = vmatmul.bf16.gmra.mxu0 %v3862
        %v4035 = vpop.f32.mrf.mxu0
        %v4036 = vadd.f32 %v3867, %v4035
        %v4037 = vpop.f32.mrf.mxu0
        %v4038 = vadd.f32 %v3867, %v4037
        %4039 = vmatmul.bf16.gmra.mxu0 %v3863
        %v4040 = vpop.f32.mrf.mxu0
        %v4041 = vadd.f32 %v3867, %v4040
        %v4042 = vpop.f32.mrf.mxu0
        %v4043 = vadd.f32 %v3867, %v4042
        %4044 = vmatmul.bf16.gmra.mxu0 %v3864
        %v4045 = vpop.f32.mrf.mxu0
        %v4046 = vadd.f32 %v3867, %v4045
        %v4047 = vpop.f32.mrf.mxu0
        %v4048 = vadd.f32 %v3867, %v4047
        %4049 = vdwg.mxu0
        %4050 = vmatpush.bf16.msra.mxu0 %v3975
        %4051 = vmatpush.bf16.msra.mxu0 %v3972
        %4052 = vmatpush.bf16.msra.mxu0 %v3969
        %4053 = vmatpush.bf16.msra.mxu0 %v3966
        %4054 = vmatpush.bf16.msra.mxu0 %v3963
        %4055 = vmatpush.bf16.msra.mxu0 %v3960
        %4056 = vmatpush.bf16.msra.mxu0 %v3957
        %4057 = vmatpush.bf16.msra.mxu0 %v3954
        %4058 = vmatmul.bf16.gmra.mxu0 %v3857
        %v4059 = vpop.f32.mrf.mxu0
        %v4060 = vadd.f32 %v3868, %v4059
        %v4061 = vpop.f32.mrf.mxu0
        %v4062 = vadd.f32 %v3868, %v4061
        %4063 = vmatmul.bf16.gmra.mxu0 %v3858
        %v4064 = vpop.f32.mrf.mxu0
        %v4065 = vadd.f32 %v3868, %v4064
        %v4066 = vpop.f32.mrf.mxu0
        %v4067 = vadd.f32 %v3868, %v4066
        %4068 = vmatmul.bf16.gmra.mxu0 %v3859
        %v4069 = vpop.f32.mrf.mxu0
        %v4070 = vadd.f32 %v3868, %v4069
        %v4071 = vpop.f32.mrf.mxu0
        %v4072 = vadd.f32 %v3868, %v4071
        %4073 = vmatmul.bf16.gmra.mxu0 %v3860
        %v4074 = vpop.f32.mrf.mxu0
        %v4075 = vadd.f32 %v3868, %v4074
        %v4076 = vpop.f32.mrf.mxu0
        %v4077 = vadd.f32 %v3868, %v4076
        %4078 = vmatmul.bf16.gmra.mxu0 %v3861
        %v4079 = vpop.f32.mrf.mxu0
        %v4080 = vadd.f32 %v3868, %v4079
        %v4081 = vpop.f32.mrf.mxu0
        %v4082 = vadd.f32 %v3868, %v4081
        %4083 = vmatmul.bf16.gmra.mxu0 %v3862
        %v4084 = vpop.f32.mrf.mxu0
        %v4085 = vadd.f32 %v3868, %v4084
        %v4086 = vpop.f32.mrf.mxu0
        %v4087 = vadd.f32 %v3868, %v4086
        %4088 = vmatmul.bf16.gmra.mxu0 %v3863
        %v4089 = vpop.f32.mrf.mxu0
        %v4090 = vadd.f32 %v3868, %v4089
        %v4091 = vpop.f32.mrf.mxu0
        %v4092 = vadd.f32 %v3868, %v4091
        %4093 = vmatmul.bf16.gmra.mxu0 %v3864
        %v4094 = vpop.f32.mrf.mxu0
        %v4095 = vadd.f32 %v3868, %v4094
        %v4096 = vpop.f32.mrf.mxu0
        %v4097 = vadd.f32 %v3868, %v4096
        %4098 = vdwg.mxu0
        %4099 = vmatpush.bf16.msra.mxu0 %v3976
        %4100 = vmatpush.bf16.msra.mxu0 %v3973
        %4101 = vmatpush.bf16.msra.mxu0 %v3970
        %4102 = vmatpush.bf16.msra.mxu0 %v3967
        %4103 = vmatpush.bf16.msra.mxu0 %v3964
        %4104 = vmatpush.bf16.msra.mxu0 %v3961
        %4105 = vmatpush.bf16.msra.mxu0 %v3958
        %4106 = vmatpush.bf16.msra.mxu0 %v3955
        %4107 = vmatmul.bf16.gmra.mxu0 %v3857
        %v4108 = vpop.f32.mrf.mxu0
        %v4109 = vadd.f32 %v3869, %v4108
        %v4110 = vpop.f32.mrf.mxu0
        %v4111 = vadd.f32 %v3869, %v4110
        %4112 = vmatmul.bf16.gmra.mxu0 %v3858
        %v4113 = vpop.f32.mrf.mxu0
        %v4114 = vadd.f32 %v3869, %v4113
        %v4115 = vpop.f32.mrf.mxu0
        %v4116 = vadd.f32 %v3869, %v4115
        %4117 = vmatmul.bf16.gmra.mxu0 %v3859
        %v4118 = vpop.f32.mrf.mxu0
        %v4119 = vadd.f32 %v3869, %v4118
        %v4120 = vpop.f32.mrf.mxu0
        %v4121 = vadd.f32 %v3869, %v4120
        %4122 = vmatmul.bf16.gmra.mxu0 %v3860
        %v4123 = vpop.f32.mrf.mxu0
        %v4124 = vadd.f32 %v3869, %v4123
        %v4125 = vpop.f32.mrf.mxu0
        %v4126 = vadd.f32 %v3869, %v4125
        %4127 = vmatmul.bf16.gmra.mxu0 %v3861
        %v4128 = vpop.f32.mrf.mxu0
        %v4129 = vadd.f32 %v3869, %v4128
        %v4130 = vpop.f32.mrf.mxu0
        %v4131 = vadd.f32 %v3869, %v4130
        %4132 = vmatmul.bf16.gmra.mxu0 %v3862
        %v4133 = vpop.f32.mrf.mxu0
        %v4134 = vadd.f32 %v3869, %v4133
        %v4135 = vpop.f32.mrf.mxu0
        %v4136 = vadd.f32 %v3869, %v4135
        %4137 = vmatmul.bf16.gmra.mxu0 %v3863
        %v4138 = vpop.f32.mrf.mxu0
        %v4139 = vadd.f32 %v3869, %v4138
        %v4140 = vpop.f32.mrf.mxu0
        %v4141 = vadd.f32 %v3869, %v4140
        %4142 = vmatmul.bf16.gmra.mxu0 %v3864
        %v4143 = vpop.f32.mrf.mxu0
        %v4144 = vadd.f32 %v3869, %v4143
        %v4145 = vpop.f32.mrf.mxu0
        %v4146 = vadd.f32 %v3869, %v4145
        %4147 = vdwg.mxu0
        %vm4148 = vcmp.gt.f32.partialorder %v4011, 0.0
        %vm4149 = vcmp.gt.f32.partialorder %v4013, 0.0
        %vm4150 = vcmp.gt.f32.partialorder %v4016, 0.0
        %vm4151 = vcmp.gt.f32.partialorder %v4018, 0.0
        %vm4152 = vcmp.gt.f32.partialorder %v4021, 0.0
        %vm4153 = vcmp.gt.f32.partialorder %v4023, 0.0
        %vm4154 = vcmp.gt.f32.partialorder %v4026, 0.0
        %vm4155 = vcmp.gt.f32.partialorder %v4028, 0.0
        %vm4156 = vcmp.gt.f32.partialorder %v4031, 0.0
        %vm4157 = vcmp.gt.f32.partialorder %v4033, 0.0
        %vm4158 = vcmp.gt.f32.partialorder %v4036, 0.0
        %vm4159 = vcmp.gt.f32.partialorder %v4038, 0.0
        %vm4160 = vcmp.gt.f32.partialorder %v4041, 0.0
        %vm4161 = vcmp.gt.f32.partialorder %v4043, 0.0
        %vm4162 = vcmp.gt.f32.partialorder %v4046, 0.0
        %vm4163 = vcmp.gt.f32.partialorder %v4048, 0.0
        %v4164 = vadd.f32 %v4011, 1.0
        %v4165 = vadd.f32 %v4013, 1.0
        %v4166 = vadd.f32 %v4016, 1.0
        %v4167 = vadd.f32 %v4018, 1.0
        %v4168 = vadd.f32 %v4021, 1.0
        %v4169 = vadd.f32 %v4023, 1.0
        %v4170 = vadd.f32 %v4026, 1.0
        %v4171 = vadd.f32 %v4028, 1.0
        %v4172 = vadd.f32 %v4031, 1.0
        %v4173 = vadd.f32 %v4033, 1.0
        %v4174 = vadd.f32 %v4036, 1.0
        %v4175 = vadd.f32 %v4038, 1.0
        %v4176 = vadd.f32 %v4041, 1.0
        %v4177 = vadd.f32 %v4043, 1.0
        %v4178 = vadd.f32 %v4046, 1.0
        %v4179 = vadd.f32 %v4048, 1.0
        %v4180 = vmin.f32 %v4011, 0.0
        %v4181 = vmin.f32 %v4013, 0.0
        %v4182 = vmin.f32 %v4016, 0.0
        %v4183 = vmin.f32 %v4018, 0.0
        %v4184 = vmin.f32 %v4021, 0.0
        %v4185 = vmin.f32 %v4023, 0.0
        %v4186 = vmin.f32 %v4026, 0.0
        %v4187 = vmin.f32 %v4028, 0.0
        %v4188 = vmin.f32 %v4031, 0.0
        %v4189 = vmin.f32 %v4033, 0.0
        %v4190 = vmin.f32 %v4036, 0.0
        %v4191 = vmin.f32 %v4038, 0.0
        %v4192 = vmin.f32 %v4041, 0.0
        %v4193 = vmin.f32 %v4043, 0.0
        %v4194 = vmin.f32 %v4046, 0.0
        %v4195 = vmin.f32 %v4048, 0.0
        %v4196 = vmul.f32 %v4180, 1.442695
        %v4197 = vpow.pop %v4196
        %v4198 = vmul.f32 %v4181, 1.442695
        %v4199 = vpow.pop %v4198
        %v4200 = vmul.f32 %v4182, 1.442695
        %v4201 = vpow.pop %v4200
        %v4202 = vmul.f32 %v4183, 1.442695
        %v4203 = vpow.pop %v4202
        %v4204 = vmul.f32 %v4184, 1.442695
        %v4205 = vpow.pop %v4204
        %v4206 = vmul.f32 %v4185, 1.442695
        %v4207 = vpow.pop %v4206
        %v4208 = vmul.f32 %v4186, 1.442695
        %v4209 = vpow.pop %v4208
        %v4210 = vmul.f32 %v4187, 1.442695
        %v4211 = vpow.pop %v4210
        %v4212 = vmul.f32 %v4188, 1.442695
        %v4213 = vpow.pop %v4212
        %v4214 = vmul.f32 %v4189, 1.442695
        %v4215 = vpow.pop %v4214
        %v4216 = vmul.f32 %v4190, 1.442695
        %v4217 = vpow.pop %v4216
        %v4218 = vmul.f32 %v4191, 1.442695
        %v4219 = vpow.pop %v4218
        %v4220 = vmul.f32 %v4192, 1.442695
        %v4221 = vpow.pop %v4220
        %v4222 = vmul.f32 %v4193, 1.442695
        %v4223 = vpow.pop %v4222
        %v4224 = vmul.f32 %v4194, 1.442695
        %v4225 = vpow.pop %v4224
        %v4226 = vmul.f32 %v4195, 1.442695
        %v4227 = vpow.pop %v4226
        %v4228 = vsel %vm4148, %v4164, %v4197
        %v4229 = vsel %vm4149, %v4165, %v4199
        %v4230 = vsel %vm4150, %v4166, %v4201
        %v4231 = vsel %vm4151, %v4167, %v4203
        %v4232 = vsel %vm4152, %v4168, %v4205
        %v4233 = vsel %vm4153, %v4169, %v4207
        %v4234 = vsel %vm4154, %v4170, %v4209
        %v4235 = vsel %vm4155, %v4171, %v4211
        %v4236 = vsel %vm4156, %v4172, %v4213
        %v4237 = vsel %vm4157, %v4173, %v4215
        %v4238 = vsel %vm4158, %v4174, %v4217
        %v4239 = vsel %vm4159, %v4175, %v4219
        %v4240 = vsel %vm4160, %v4176, %v4221
        %v4241 = vsel %vm4161, %v4177, %v4223
        %v4242 = vsel %vm4162, %v4178, %v4225
        %v4243 = vsel %vm4163, %v4179, %v4227
        %vm4244 = vcmp.gt.f32.partialorder %v4060, 0.0
        %vm4245 = vcmp.gt.f32.partialorder %v4062, 0.0
        %vm4246 = vcmp.gt.f32.partialorder %v4065, 0.0
        %vm4247 = vcmp.gt.f32.partialorder %v4067, 0.0
        %vm4248 = vcmp.gt.f32.partialorder %v4070, 0.0
        %vm4249 = vcmp.gt.f32.partialorder %v4072, 0.0
        %vm4250 = vcmp.gt.f32.partialorder %v4075, 0.0
        %vm4251 = vcmp.gt.f32.partialorder %v4077, 0.0
        %vm4252 = vcmp.gt.f32.partialorder %v4080, 0.0
        %vm4253 = vcmp.gt.f32.partialorder %v4082, 0.0
        %vm4254 = vcmp.gt.f32.partialorder %v4085, 0.0
        %vm4255 = vcmp.gt.f32.partialorder %v4087, 0.0
        %vm4256 = vcmp.gt.f32.partialorder %v4090, 0.0
        %vm4257 = vcmp.gt.f32.partialorder %v4092, 0.0
        %vm4258 = vcmp.gt.f32.partialorder %v4095, 0.0
        %vm4259 = vcmp.gt.f32.partialorder %v4097, 0.0
        %v4260 = vadd.f32 %v4060, 1.0
        %v4261 = vadd.f32 %v4062, 1.0
        %v4262 = vadd.f32 %v4065, 1.0
        %v4263 = vadd.f32 %v4067, 1.0
        %v4264 = vadd.f32 %v4070, 1.0
        %v4265 = vadd.f32 %v4072, 1.0
        %v4266 = vadd.f32 %v4075, 1.0
        %v4267 = vadd.f32 %v4077, 1.0
        %v4268 = vadd.f32 %v4080, 1.0
        %v4269 = vadd.f32 %v4082, 1.0
        %v4270 = vadd.f32 %v4085, 1.0
        %v4271 = vadd.f32 %v4087, 1.0
        %v4272 = vadd.f32 %v4090, 1.0
        %v4273 = vadd.f32 %v4092, 1.0
        %v4274 = vadd.f32 %v4095, 1.0
        %v4275 = vadd.f32 %v4097, 1.0
        %v4276 = vmin.f32 %v4060, 0.0
        %v4277 = vmin.f32 %v4062, 0.0
        %v4278 = vmin.f32 %v4065, 0.0
        %v4279 = vmin.f32 %v4067, 0.0
        %v4280 = vmin.f32 %v4070, 0.0
        %v4281 = vmin.f32 %v4072, 0.0
        %v4282 = vmin.f32 %v4075, 0.0
        %v4283 = vmin.f32 %v4077, 0.0
        %v4284 = vmin.f32 %v4080, 0.0
        %v4285 = vmin.f32 %v4082, 0.0
        %v4286 = vmin.f32 %v4085, 0.0
        %v4287 = vmin.f32 %v4087, 0.0
        %v4288 = vmin.f32 %v4090, 0.0
        %v4289 = vmin.f32 %v4092, 0.0
        %v4290 = vmin.f32 %v4095, 0.0
        %v4291 = vmin.f32 %v4097, 0.0
        %v4292 = vmul.f32 %v4276, 1.442695
        %v4293 = vpow.pop %v4292
        %v4294 = vmul.f32 %v4277, 1.442695
        %v4295 = vpow.pop %v4294
        %v4296 = vmul.f32 %v4278, 1.442695
        %v4297 = vpow.pop %v4296
        %v4298 = vmul.f32 %v4279, 1.442695
        %v4299 = vpow.pop %v4298
        %v4300 = vmul.f32 %v4280, 1.442695
        %v4301 = vpow.pop %v4300
        %v4302 = vmul.f32 %v4281, 1.442695
        %v4303 = vpow.pop %v4302
        %v4304 = vmul.f32 %v4282, 1.442695
        %v4305 = vpow.pop %v4304
        %v4306 = vmul.f32 %v4283, 1.442695
        %v4307 = vpow.pop %v4306
        %v4308 = vmul.f32 %v4284, 1.442695
        %v4309 = vpow.pop %v4308
        %v4310 = vmul.f32 %v4285, 1.442695
        %v4311 = vpow.pop %v4310
        %v4312 = vmul.f32 %v4286, 1.442695
        %v4313 = vpow.pop %v4312
        %v4314 = vmul.f32 %v4287, 1.442695
        %v4315 = vpow.pop %v4314
        %v4316 = vmul.f32 %v4288, 1.442695
        %v4317 = vpow.pop %v4316
        %v4318 = vmul.f32 %v4289, 1.442695
        %v4319 = vpow.pop %v4318
        %v4320 = vmul.f32 %v4290, 1.442695
        %v4321 = vpow.pop %v4320
        %v4322 = vmul.f32 %v4291, 1.442695
        %v4323 = vpow.pop %v4322
        %v4324 = vsel %vm4244, %v4260, %v4293
        %v4325 = vsel %vm4245, %v4261, %v4295
        %v4326 = vsel %vm4246, %v4262, %v4297
        %v4327 = vsel %vm4247, %v4263, %v4299
        %v4328 = vsel %vm4248, %v4264, %v4301
        %v4329 = vsel %vm4249, %v4265, %v4303
        %v4330 = vsel %vm4250, %v4266, %v4305
        %v4331 = vsel %vm4251, %v4267, %v4307
        %v4332 = vsel %vm4252, %v4268, %v4309
        %v4333 = vsel %vm4253, %v4269, %v4311
        %v4334 = vsel %vm4254, %v4270, %v4313
        %v4335 = vsel %vm4255, %v4271, %v4315
        %v4336 = vsel %vm4256, %v4272, %v4317
        %v4337 = vsel %vm4257, %v4273, %v4319
        %v4338 = vsel %vm4258, %v4274, %v4321
        %v4339 = vsel %vm4259, %v4275, %v4323
        %v4340 = vmul.f32 %v4228, %v4324
        %v4341 = vmul.f32 %v4229, %v4325
        %v4342 = vmul.f32 %v4230, %v4326
        %v4343 = vmul.f32 %v4231, %v4327
        %v4344 = vmul.f32 %v4232, %v4328
        %v4345 = vmul.f32 %v4233, %v4329
        %v4346 = vmul.f32 %v4234, %v4330
        %v4347 = vmul.f32 %v4235, %v4331
        %v4348 = vmul.f32 %v4236, %v4332
        %v4349 = vmul.f32 %v4237, %v4333
        %v4350 = vmul.f32 %v4238, %v4334
        %v4351 = vmul.f32 %v4239, %v4335
        %v4352 = vmul.f32 %v4240, %v4336
        %v4353 = vmul.f32 %v4241, %v4337
        %v4354 = vmul.f32 %v4242, %v4338
        %v4355 = vmul.f32 %v4243, %v4339
        %4356 = vadd.xlane.f32.xlu0 %v4340
        %v4357 = vpop.xlane.xlu0 %4356
        %4358 = vadd.xlane.f32.xlu0 %v4341
        %v4359 = vpop.xlane.xlu0 %4358
        %4360 = vadd.xlane.f32.xlu0 %v4342
        %v4361 = vpop.xlane.xlu0 %4360
        %4362 = vadd.xlane.f32.xlu0 %v4343
        %v4363 = vpop.xlane.xlu0 %4362
        %4364 = vadd.xlane.f32.xlu0 %v4344
        %v4365 = vpop.xlane.xlu0 %4364
        %4366 = vadd.xlane.f32.xlu0 %v4345
        %v4367 = vpop.xlane.xlu0 %4366
        %4368 = vadd.xlane.f32.xlu0 %v4346
        %v4369 = vpop.xlane.xlu0 %4368
        %4370 = vadd.xlane.f32.xlu0 %v4347
        %v4371 = vpop.xlane.xlu0 %4370
        %4372 = vadd.xlane.f32.xlu0 %v4348
        %v4373 = vpop.xlane.xlu0 %4372
        %4374 = vadd.xlane.f32.xlu0 %v4349
        %v4375 = vpop.xlane.xlu0 %4374
        %4376 = vadd.xlane.f32.xlu0 %v4350
        %v4377 = vpop.xlane.xlu0 %4376
        %4378 = vadd.xlane.f32.xlu0 %v4351
        %v4379 = vpop.xlane.xlu0 %4378
        %4380 = vadd.xlane.f32.xlu0 %v4352
        %v4381 = vpop.xlane.xlu0 %4380
        %4382 = vadd.xlane.f32.xlu0 %v4353
        %v4383 = vpop.xlane.xlu0 %4382
        %4384 = vadd.xlane.f32.xlu0 %v4354
        %v4385 = vpop.xlane.xlu0 %4384
        %4386 = vadd.xlane.f32.xlu0 %v4355
        %v4387 = vpop.xlane.xlu0 %4386
        %v4388 = vmul.f32 %v4357, %v4109
        %v4389 = vmul.f32 %v4359, %v4111
        %v4390 = vmul.f32 %v4361, %v4114
        %v4391 = vmul.f32 %v4363, %v4116
        %v4392 = vmul.f32 %v4365, %v4119
        %v4393 = vmul.f32 %v4367, %v4121
        %v4394 = vmul.f32 %v4369, %v4124
        %v4395 = vmul.f32 %v4371, %v4126
        %v4396 = vmul.f32 %v4373, %v4129
        %v4397 = vmul.f32 %v4375, %v4131
        %v4398 = vmul.f32 %v4377, %v4134
        %v4399 = vmul.f32 %v4379, %v4136
        %v4400 = vmul.f32 %v4381, %v4139
        %v4401 = vmul.f32 %v4383, %v4141
        %v4402 = vmul.f32 %v4385, %v4144
        %v4403 = vmul.f32 %v4387, %v4146
        %v4404 = vadd.f32 %v4357, 1e-06
        %v4405 = vadd.f32 %v4359, 1e-06
        %v4406 = vadd.f32 %v4361, 1e-06
        %v4407 = vadd.f32 %v4363, 1e-06
        %v4408 = vadd.f32 %v4365, 1e-06
        %v4409 = vadd.f32 %v4367, 1e-06
        %v4410 = vadd.f32 %v4369, 1e-06
        %v4411 = vadd.f32 %v4371, 1e-06
        %v4412 = vadd.f32 %v4373, 1e-06
        %v4413 = vadd.f32 %v4375, 1e-06
        %v4414 = vadd.f32 %v4377, 1e-06
        %v4415 = vadd.f32 %v4379, 1e-06
        %v4416 = vadd.f32 %v4381, 1e-06
        %v4417 = vadd.f32 %v4383, 1e-06
        %v4418 = vadd.f32 %v4385, 1e-06
        %v4419 = vadd.f32 %v4387, 1e-06
        %v4420 = vrcp.pop %v4404
        %v4421 = vrcp.pop %v4405
        %v4422 = vrcp.pop %v4406
        %v4423 = vrcp.pop %v4407
        %v4424 = vrcp.pop %v4408
        %v4425 = vrcp.pop %v4409
        %v4426 = vrcp.pop %v4410
        %v4427 = vrcp.pop %v4411
        %v4428 = vrcp.pop %v4412
        %v4429 = vrcp.pop %v4413
        %v4430 = vrcp.pop %v4414
        %v4431 = vrcp.pop %v4415
        %v4432 = vrcp.pop %v4416
        %v4433 = vrcp.pop %v4417
        %v4434 = vrcp.pop %v4418
        %v4435 = vrcp.pop %v4419
        %v4436 = vmul.f32 %v4388, %v4420
        %v4437 = vmul.f32 %v4389, %v4421
        %v4438 = vmul.f32 %v4390, %v4422
        %v4439 = vmul.f32 %v4391, %v4423
        %v4440 = vmul.f32 %v4392, %v4424
        %v4441 = vmul.f32 %v4393, %v4425
        %v4442 = vmul.f32 %v4394, %v4426
        %v4443 = vmul.f32 %v4395, %v4427
        %v4444 = vmul.f32 %v4396, %v4428
        %v4445 = vmul.f32 %v4397, %v4429
        %v4446 = vmul.f32 %v4398, %v4430
        %v4447 = vmul.f32 %v4399, %v4431
        %v4448 = vmul.f32 %v4400, %v4432
        %v4449 = vmul.f32 %v4401, %v4433
        %v4450 = vmul.f32 %v4402, %v4434
        %v4451 = vmul.f32 %v4403, %v4435
        %v4452 = vld [vmem:[#allocation19] sm:$0xf]
        %v4453 = vld [vmem:[#allocation19 + $0x4] sm:$0xf]
        %v4454 = vld [vmem:[#allocation19 + $0x8] sm:$0xf]
        %v4455 = vld [vmem:[#allocation19 + $0xc] sm:$0xf]
        %v4456 = vld [vmem:[#allocation19 + $0x10] sm:$0xf]
        %v4457 = vld [vmem:[#allocation19 + $0x14] sm:$0xf]
        %v4458 = vld [vmem:[#allocation19 + $0x18] sm:$0xf]
        %v4459 = vld [vmem:[#allocation19 + $0x1c] sm:$0xf]
        %v4460 = vld [vmem:[#allocation19 + $0x20] sm:$0xf]
        %v4461 = vld [vmem:[#allocation19 + $0x24] sm:$0xf]
        %v4462 = vld [vmem:[#allocation19 + $0x28] sm:$0xf]
        %v4463 = vld [vmem:[#allocation19 + $0x2c] sm:$0xf]
        %v4464 = vld [vmem:[#allocation19 + $0x30] sm:$0xf]
        %v4465 = vld [vmem:[#allocation19 + $0x34] sm:$0xf]
        %v4466 = vld [vmem:[#allocation19 + $0x38] sm:$0xf]
        %v4467 = vld [vmem:[#allocation19 + $0x3c] sm:$0xf]
        %v4468 = vpack.c.bf16 %v4437, %v4436
        %v4469 = vpack.c.bf16 %v4439, %v4438
        %v4470 = vpack.c.bf16 %v4441, %v4440
        %v4471 = vpack.c.bf16 %v4443, %v4442
        %v4472 = vpack.c.bf16 %v4445, %v4444
        %v4473 = vpack.c.bf16 %v4447, %v4446
        %v4474 = vpack.c.bf16 %v4449, %v4448
        %v4475 = vpack.c.bf16 %v4451, %v4450
        %v4476 = vld [vmem:[%s12] sm:$0x1]
        %v4478 = vperm.slane %v4476, 0
        %v4496 = vunpack.c.l.b16 %v4452
        %v4497 = vunpack.c.l.b16 %v4453
        %v4498 = vunpack.c.l.b16 %v4454
        %v4499 = vunpack.c.l.b16 %v4455
        %v4500 = vunpack.c.l.b16 %v4456
        %v4501 = vunpack.c.l.b16 %v4457
        %v4502 = vunpack.c.l.b16 %v4458
        %v4503 = vunpack.c.l.b16 %v4459
        %v4504 = vunpack.c.l.b16 %v4460
        %v4505 = vunpack.c.l.b16 %v4461
        %v4506 = vunpack.c.l.b16 %v4462
        %v4507 = vunpack.c.l.b16 %v4463
        %v4508 = vunpack.c.l.b16 %v4464
        %v4509 = vunpack.c.l.b16 %v4465
        %v4510 = vunpack.c.l.b16 %v4466
        %v4511 = vunpack.c.l.b16 %v4467
        %v4512 = vpack.c.b16 %v4497, %v4496
        %v4513 = vpack.c.b16 %v4499, %v4498
        %v4514 = vpack.c.b16 %v4501, %v4500
        %v4515 = vpack.c.b16 %v4503, %v4502
        %v4516 = vpack.c.b16 %v4505, %v4504
        %v4517 = vpack.c.b16 %v4507, %v4506
        %v4518 = vpack.c.b16 %v4509, %v4508
        %v4519 = vpack.c.b16 %v4511, %v4510
        %4528 = vmatpush.bf16.msra.mxu0 %v4519
        %4529 = vmatpush.bf16.msra.mxu0 %v4518
        %4530 = vmatpush.bf16.msra.mxu0 %v4517
        %4531 = vmatpush.bf16.msra.mxu0 %v4516
        %4532 = vmatpush.bf16.msra.mxu0 %v4515
        %4533 = vmatpush.bf16.msra.mxu0 %v4514
        %4534 = vmatpush.bf16.msra.mxu0 %v4513
        %4535 = vmatpush.bf16.msra.mxu0 %v4512
        %4536 = vmatmul.bf16.gmra.mxu0 %v4468
        %v4537 = vpop.f32.mrf.mxu0
        %v4538 = vadd.f32 %v4478, %v4537
        %v4539 = vpop.f32.mrf.mxu0
        %v4540 = vadd.f32 %v4478, %v4539
        %4541 = vmatmul.bf16.gmra.mxu0 %v4469
        %v4542 = vpop.f32.mrf.mxu0
        %v4543 = vadd.f32 %v4478, %v4542
        %v4544 = vpop.f32.mrf.mxu0
        %v4545 = vadd.f32 %v4478, %v4544
        %4546 = vmatmul.bf16.gmra.mxu0 %v4470
        %v4547 = vpop.f32.mrf.mxu0
        %v4548 = vadd.f32 %v4478, %v4547
        %v4549 = vpop.f32.mrf.mxu0
        %v4550 = vadd.f32 %v4478, %v4549
        %4551 = vmatmul.bf16.gmra.mxu0 %v4471
        %v4552 = vpop.f32.mrf.mxu0
        %v4553 = vadd.f32 %v4478, %v4552
        %v4554 = vpop.f32.mrf.mxu0
        %v4555 = vadd.f32 %v4478, %v4554
        %4556 = vmatmul.bf16.gmra.mxu0 %v4472
        %v4557 = vpop.f32.mrf.mxu0
        %v4558 = vadd.f32 %v4478, %v4557
        %v4559 = vpop.f32.mrf.mxu0
        %v4560 = vadd.f32 %v4478, %v4559
        %4561 = vmatmul.bf16.gmra.mxu0 %v4473
        %v4562 = vpop.f32.mrf.mxu0
        %v4563 = vadd.f32 %v4478, %v4562
        %v4564 = vpop.f32.mrf.mxu0
        %v4565 = vadd.f32 %v4478, %v4564
        %4566 = vmatmul.bf16.gmra.mxu0 %v4474
        %v4567 = vpop.f32.mrf.mxu0
        %v4568 = vadd.f32 %v4478, %v4567
        %v4569 = vpop.f32.mrf.mxu0
        %v4570 = vadd.f32 %v4478, %v4569
        %4571 = vmatmul.bf16.gmra.mxu0 %v4475
        %v4572 = vpop.f32.mrf.mxu0
        %v4573 = vadd.f32 %v4478, %v4572
        %v4574 = vpop.f32.mrf.mxu0
        %v4575 = vadd.f32 %v4478, %v4574
        %4576 = vdwg.mxu0
        %v4577 = vadd.f32 %v3809, %v4538
        %v4578 = vadd.f32 %v3810, %v4540
        %v4579 = vadd.f32 %v3811, %v4543
        %v4580 = vadd.f32 %v3812, %v4545
        %v4581 = vadd.f32 %v3813, %v4548
        %v4582 = vadd.f32 %v3814, %v4550
        %v4583 = vadd.f32 %v3815, %v4553
        %v4584 = vadd.f32 %v3816, %v4555
        %v4585 = vadd.f32 %v3817, %v4558
        %v4586 = vadd.f32 %v3818, %v4560
        %v4587 = vadd.f32 %v3819, %v4563
        %v4588 = vadd.f32 %v3820, %v4565
        %v4589 = vadd.f32 %v3821, %v4568
        %v4590 = vadd.f32 %v3822, %v4570
        %v4591 = vadd.f32 %v3823, %v4573
        %v4592 = vadd.f32 %v3824, %v4575
        %4593 = vadd.xlane.f32.xlu0 %v4577
        %v4594 = vpop.xlane.xlu0 %4593
        %4595 = vadd.xlane.f32.xlu0 %v4578
        %v4596 = vpop.xlane.xlu0 %4595
        %4597 = vadd.xlane.f32.xlu0 %v4579
        %v4598 = vpop.xlane.xlu0 %4597
        %4599 = vadd.xlane.f32.xlu0 %v4580
        %v4600 = vpop.xlane.xlu0 %4599
        %4601 = vadd.xlane.f32.xlu0 %v4581
        %v4602 = vpop.xlane.xlu0 %4601
        %4603 = vadd.xlane.f32.xlu0 %v4582
        %v4604 = vpop.xlane.xlu0 %4603
        %4605 = vadd.xlane.f32.xlu0 %v4583
        %v4606 = vpop.xlane.xlu0 %4605
        %4607 = vadd.xlane.f32.xlu0 %v4584
        %v4608 = vpop.xlane.xlu0 %4607
        %4609 = vadd.xlane.f32.xlu0 %v4585
        %v4610 = vpop.xlane.xlu0 %4609
        %4611 = vadd.xlane.f32.xlu0 %v4586
        %v4612 = vpop.xlane.xlu0 %4611
        %4613 = vadd.xlane.f32.xlu0 %v4587
        %v4614 = vpop.xlane.xlu0 %4613
        %4615 = vadd.xlane.f32.xlu0 %v4588
        %v4616 = vpop.xlane.xlu0 %4615
        %4617 = vadd.xlane.f32.xlu0 %v4589
        %v4618 = vpop.xlane.xlu0 %4617
        %4619 = vadd.xlane.f32.xlu0 %v4590
        %v4620 = vpop.xlane.xlu0 %4619
        %4621 = vadd.xlane.f32.xlu0 %v4591
        %v4622 = vpop.xlane.xlu0 %4621
        %4623 = vadd.xlane.f32.xlu0 %v4592
        %v4624 = vpop.xlane.xlu0 %4623
        %v4625 = vmul.f32 %v4594, %v1207
        %v4626 = vmul.f32 %v4596, %v1207
        %v4627 = vmul.f32 %v4598, %v1207
        %v4628 = vmul.f32 %v4600, %v1207
        %v4629 = vmul.f32 %v4602, %v1207
        %v4630 = vmul.f32 %v4604, %v1207
        %v4631 = vmul.f32 %v4606, %v1207
        %v4632 = vmul.f32 %v4608, %v1207
        %v4633 = vmul.f32 %v4610, %v1207
        %v4634 = vmul.f32 %v4612, %v1207
        %v4635 = vmul.f32 %v4614, %v1207
        %v4636 = vmul.f32 %v4616, %v1207
        %v4637 = vmul.f32 %v4618, %v1207
        %v4638 = vmul.f32 %v4620, %v1207
        %v4639 = vmul.f32 %v4622, %v1207
        %v4640 = vmul.f32 %v4624, %v1207
        %v4641 = vsub.f32 %v4577, %v4625
        %v4642 = vsub.f32 %v4578, %v4626
        %v4643 = vsub.f32 %v4579, %v4627
        %v4644 = vsub.f32 %v4580, %v4628
        %v4645 = vsub.f32 %v4581, %v4629
        %v4646 = vsub.f32 %v4582, %v4630
        %v4647 = vsub.f32 %v4583, %v4631
        %v4648 = vsub.f32 %v4584, %v4632
        %v4649 = vsub.f32 %v4585, %v4633
        %v4650 = vsub.f32 %v4586, %v4634
        %v4651 = vsub.f32 %v4587, %v4635
        %v4652 = vsub.f32 %v4588, %v4636
        %v4653 = vsub.f32 %v4589, %v4637
        %v4654 = vsub.f32 %v4590, %v4638
        %v4655 = vsub.f32 %v4591, %v4639
        %v4656 = vsub.f32 %v4592, %v4640
        %v4657 = vmul.f32 %v4641, %v4641
        %v4658 = vmul.f32 %v4642, %v4642
        %v4659 = vmul.f32 %v4643, %v4643
        %v4660 = vmul.f32 %v4644, %v4644
        %v4661 = vmul.f32 %v4645, %v4645
        %v4662 = vmul.f32 %v4646, %v4646
        %v4663 = vmul.f32 %v4647, %v4647
        %v4664 = vmul.f32 %v4648, %v4648
        %v4665 = vmul.f32 %v4649, %v4649
        %v4666 = vmul.f32 %v4650, %v4650
        %v4667 = vmul.f32 %v4651, %v4651
        %v4668 = vmul.f32 %v4652, %v4652
        %v4669 = vmul.f32 %v4653, %v4653
        %v4670 = vmul.f32 %v4654, %v4654
        %v4671 = vmul.f32 %v4655, %v4655
        %v4672 = vmul.f32 %v4656, %v4656
        %4673 = vadd.xlane.f32.xlu0 %v4657
        %v4674 = vpop.xlane.xlu0 %4673
        %4675 = vadd.xlane.f32.xlu0 %v4658
        %v4676 = vpop.xlane.xlu0 %4675
        %4677 = vadd.xlane.f32.xlu0 %v4659
        %v4678 = vpop.xlane.xlu0 %4677
        %4679 = vadd.xlane.f32.xlu0 %v4660
        %v4680 = vpop.xlane.xlu0 %4679
        %4681 = vadd.xlane.f32.xlu0 %v4661
        %v4682 = vpop.xlane.xlu0 %4681
        %4683 = vadd.xlane.f32.xlu0 %v4662
        %v4684 = vpop.xlane.xlu0 %4683
        %4685 = vadd.xlane.f32.xlu0 %v4663
        %v4686 = vpop.xlane.xlu0 %4685
        %4687 = vadd.xlane.f32.xlu0 %v4664
        %v4688 = vpop.xlane.xlu0 %4687
        %4689 = vadd.xlane.f32.xlu0 %v4665
        %v4690 = vpop.xlane.xlu0 %4689
        %4691 = vadd.xlane.f32.xlu0 %v4666
        %v4692 = vpop.xlane.xlu0 %4691
        %4693 = vadd.xlane.f32.xlu0 %v4667
        %v4694 = vpop.xlane.xlu0 %4693
        %4695 = vadd.xlane.f32.xlu0 %v4668
        %v4696 = vpop.xlane.xlu0 %4695
        %4697 = vadd.xlane.f32.xlu0 %v4669
        %v4698 = vpop.xlane.xlu0 %4697
        %4699 = vadd.xlane.f32.xlu0 %v4670
        %v4700 = vpop.xlane.xlu0 %4699
        %4701 = vadd.xlane.f32.xlu0 %v4671
        %v4702 = vpop.xlane.xlu0 %4701
        %4703 = vadd.xlane.f32.xlu0 %v4672
        %v4704 = vpop.xlane.xlu0 %4703
        %v4705 = vmul.f32 %v4674, %v1207
        %v4706 = vmul.f32 %v4676, %v1207
        %v4707 = vmul.f32 %v4678, %v1207
        %v4708 = vmul.f32 %v4680, %v1207
        %v4709 = vmul.f32 %v4682, %v1207
        %v4710 = vmul.f32 %v4684, %v1207
        %v4711 = vmul.f32 %v4686, %v1207
        %v4712 = vmul.f32 %v4688, %v1207
        %v4713 = vmul.f32 %v4690, %v1207
        %v4714 = vmul.f32 %v4692, %v1207
        %v4715 = vmul.f32 %v4694, %v1207
        %v4716 = vmul.f32 %v4696, %v1207
        %v4717 = vmul.f32 %v4698, %v1207
        %v4718 = vmul.f32 %v4700, %v1207
        %v4719 = vmul.f32 %v4702, %v1207
        %v4720 = vmul.f32 %v4704, %v1207
        %v4721 = vadd.f32 %v4705, 1e-05
        %v4722 = vadd.f32 %v4706, 1e-05
        %v4723 = vadd.f32 %v4707, 1e-05
        %v4724 = vadd.f32 %v4708, 1e-05
        %v4725 = vadd.f32 %v4709, 1e-05
        %v4726 = vadd.f32 %v4710, 1e-05
        %v4727 = vadd.f32 %v4711, 1e-05
        %v4728 = vadd.f32 %v4712, 1e-05
        %v4729 = vadd.f32 %v4713, 1e-05
        %v4730 = vadd.f32 %v4714, 1e-05
        %v4731 = vadd.f32 %v4715, 1e-05
        %v4732 = vadd.f32 %v4716, 1e-05
        %v4733 = vadd.f32 %v4717, 1e-05
        %v4734 = vadd.f32 %v4718, 1e-05
        %v4735 = vadd.f32 %v4719, 1e-05
        %v4736 = vadd.f32 %v4720, 1e-05
        %v4737 = vrsqrt.pop %v4721
        %v4738 = vmul.f32 %v4737, %v4721
        %v4739 = vmul.f32 %v4738, %v4737
        %v4740 = vmul.f32 0.5, %v4739
        %v4741 = vsub.f32 1.5, %v4740
        %v4742 = vmul.f32 %v4737, %v4741
        %vm4743 = vweird.f32 %v4721
        %vm4744 = vweird.f32 %v4737
        %vm4745 = vmor %vm4743, %vm4744
        %v4746 = vsel %vm4745, %v4737, %v4742
        %v4747 = vrsqrt.pop %v4722
        %v4748 = vmul.f32 %v4747, %v4722
        %v4749 = vmul.f32 %v4748, %v4747
        %v4750 = vmul.f32 0.5, %v4749
        %v4751 = vsub.f32 1.5, %v4750
        %v4752 = vmul.f32 %v4747, %v4751
        %vm4753 = vweird.f32 %v4722
        %vm4754 = vweird.f32 %v4747
        %vm4755 = vmor %vm4753, %vm4754
        %v4756 = vsel %vm4755, %v4747, %v4752
        %v4757 = vrsqrt.pop %v4723
        %v4758 = vmul.f32 %v4757, %v4723
        %v4759 = vmul.f32 %v4758, %v4757
        %v4760 = vmul.f32 0.5, %v4759
        %v4761 = vsub.f32 1.5, %v4760
        %v4762 = vmul.f32 %v4757, %v4761
        %vm4763 = vweird.f32 %v4723
        %vm4764 = vweird.f32 %v4757
        %vm4765 = vmor %vm4763, %vm4764
        %v4766 = vsel %vm4765, %v4757, %v4762
        %v4767 = vrsqrt.pop %v4724
        %v4768 = vmul.f32 %v4767, %v4724
        %v4769 = vmul.f32 %v4768, %v4767
        %v4770 = vmul.f32 0.5, %v4769
        %v4771 = vsub.f32 1.5, %v4770
        %v4772 = vmul.f32 %v4767, %v4771
        %vm4773 = vweird.f32 %v4724
        %vm4774 = vweird.f32 %v4767
        %vm4775 = vmor %vm4773, %vm4774
        %v4776 = vsel %vm4775, %v4767, %v4772
        %v4777 = vrsqrt.pop %v4725
        %v4778 = vmul.f32 %v4777, %v4725
        %v4779 = vmul.f32 %v4778, %v4777
        %v4780 = vmul.f32 0.5, %v4779
        %v4781 = vsub.f32 1.5, %v4780
        %v4782 = vmul.f32 %v4777, %v4781
        %vm4783 = vweird.f32 %v4725
        %vm4784 = vweird.f32 %v4777
        %vm4785 = vmor %vm4783, %vm4784
        %v4786 = vsel %vm4785, %v4777, %v4782
        %v4787 = vrsqrt.pop %v4726
        %v4788 = vmul.f32 %v4787, %v4726
        %v4789 = vmul.f32 %v4788, %v4787
        %v4790 = vmul.f32 0.5, %v4789
        %v4791 = vsub.f32 1.5, %v4790
        %v4792 = vmul.f32 %v4787, %v4791
        %vm4793 = vweird.f32 %v4726
        %vm4794 = vweird.f32 %v4787
        %vm4795 = vmor %vm4793, %vm4794
        %v4796 = vsel %vm4795, %v4787, %v4792
        %v4797 = vrsqrt.pop %v4727
        %v4798 = vmul.f32 %v4797, %v4727
        %v4799 = vmul.f32 %v4798, %v4797
        %v4800 = vmul.f32 0.5, %v4799
        %v4801 = vsub.f32 1.5, %v4800
        %v4802 = vmul.f32 %v4797, %v4801
        %vm4803 = vweird.f32 %v4727
        %vm4804 = vweird.f32 %v4797
        %vm4805 = vmor %vm4803, %vm4804
        %v4806 = vsel %vm4805, %v4797, %v4802
        %v4807 = vrsqrt.pop %v4728
        %v4808 = vmul.f32 %v4807, %v4728
        %v4809 = vmul.f32 %v4808, %v4807
        %v4810 = vmul.f32 0.5, %v4809
        %v4811 = vsub.f32 1.5, %v4810
        %v4812 = vmul.f32 %v4807, %v4811
        %vm4813 = vweird.f32 %v4728
        %vm4814 = vweird.f32 %v4807
        %vm4815 = vmor %vm4813, %vm4814
        %v4816 = vsel %vm4815, %v4807, %v4812
        %v4817 = vrsqrt.pop %v4729
        %v4818 = vmul.f32 %v4817, %v4729
        %v4819 = vmul.f32 %v4818, %v4817
        %v4820 = vmul.f32 0.5, %v4819
        %v4821 = vsub.f32 1.5, %v4820
        %v4822 = vmul.f32 %v4817, %v4821
        %vm4823 = vweird.f32 %v4729
        %vm4824 = vweird.f32 %v4817
        %vm4825 = vmor %vm4823, %vm4824
        %v4826 = vsel %vm4825, %v4817, %v4822
        %v4827 = vrsqrt.pop %v4730
        %v4828 = vmul.f32 %v4827, %v4730
        %v4829 = vmul.f32 %v4828, %v4827
        %v4830 = vmul.f32 0.5, %v4829
        %v4831 = vsub.f32 1.5, %v4830
        %v4832 = vmul.f32 %v4827, %v4831
        %vm4833 = vweird.f32 %v4730
        %vm4834 = vweird.f32 %v4827
        %vm4835 = vmor %vm4833, %vm4834
        %v4836 = vsel %vm4835, %v4827, %v4832
        %v4837 = vrsqrt.pop %v4731
        %v4838 = vmul.f32 %v4837, %v4731
        %v4839 = vmul.f32 %v4838, %v4837
        %v4840 = vmul.f32 0.5, %v4839
        %v4841 = vsub.f32 1.5, %v4840
        %v4842 = vmul.f32 %v4837, %v4841
        %vm4843 = vweird.f32 %v4731
        %vm4844 = vweird.f32 %v4837
        %vm4845 = vmor %vm4843, %vm4844
        %v4846 = vsel %vm4845, %v4837, %v4842
        %v4847 = vrsqrt.pop %v4732
        %v4848 = vmul.f32 %v4847, %v4732
        %v4849 = vmul.f32 %v4848, %v4847
        %v4850 = vmul.f32 0.5, %v4849
        %v4851 = vsub.f32 1.5, %v4850
        %v4852 = vmul.f32 %v4847, %v4851
        %vm4853 = vweird.f32 %v4732
        %vm4854 = vweird.f32 %v4847
        %vm4855 = vmor %vm4853, %vm4854
        %v4856 = vsel %vm4855, %v4847, %v4852
        %v4857 = vrsqrt.pop %v4733
        %v4858 = vmul.f32 %v4857, %v4733
        %v4859 = vmul.f32 %v4858, %v4857
        %v4860 = vmul.f32 0.5, %v4859
        %v4861 = vsub.f32 1.5, %v4860
        %v4862 = vmul.f32 %v4857, %v4861
        %vm4863 = vweird.f32 %v4733
        %vm4864 = vweird.f32 %v4857
        %vm4865 = vmor %vm4863, %vm4864
        %v4866 = vsel %vm4865, %v4857, %v4862
        %v4867 = vrsqrt.pop %v4734
        %v4868 = vmul.f32 %v4867, %v4734
        %v4869 = vmul.f32 %v4868, %v4867
        %v4870 = vmul.f32 0.5, %v4869
        %v4871 = vsub.f32 1.5, %v4870
        %v4872 = vmul.f32 %v4867, %v4871
        %vm4873 = vweird.f32 %v4734
        %vm4874 = vweird.f32 %v4867
        %vm4875 = vmor %vm4873, %vm4874
        %v4876 = vsel %vm4875, %v4867, %v4872
        %v4877 = vrsqrt.pop %v4735
        %v4878 = vmul.f32 %v4877, %v4735
        %v4879 = vmul.f32 %v4878, %v4877
        %v4880 = vmul.f32 0.5, %v4879
        %v4881 = vsub.f32 1.5, %v4880
        %v4882 = vmul.f32 %v4877, %v4881
        %vm4883 = vweird.f32 %v4735
        %vm4884 = vweird.f32 %v4877
        %vm4885 = vmor %vm4883, %vm4884
        %v4886 = vsel %vm4885, %v4877, %v4882
        %v4887 = vrsqrt.pop %v4736
        %v4888 = vmul.f32 %v4887, %v4736
        %v4889 = vmul.f32 %v4888, %v4887
        %v4890 = vmul.f32 0.5, %v4889
        %v4891 = vsub.f32 1.5, %v4890
        %v4892 = vmul.f32 %v4887, %v4891
        %vm4893 = vweird.f32 %v4736
        %vm4894 = vweird.f32 %v4887
        %vm4895 = vmor %vm4893, %vm4894
        %v4896 = vsel %vm4895, %v4887, %v4892
        %v4897 = vmul.f32 %v4641, %v4746
        %v4898 = vmul.f32 %v4642, %v4756
        %v4899 = vmul.f32 %v4643, %v4766
        %v4900 = vmul.f32 %v4644, %v4776
        %v4901 = vmul.f32 %v4645, %v4786
        %v4902 = vmul.f32 %v4646, %v4796
        %v4903 = vmul.f32 %v4647, %v4806
        %v4904 = vmul.f32 %v4648, %v4816
        %v4905 = vmul.f32 %v4649, %v4826
        %v4906 = vmul.f32 %v4650, %v4836
        %v4907 = vmul.f32 %v4651, %v4846
        %v4908 = vmul.f32 %v4652, %v4856
        %v4909 = vmul.f32 %v4653, %v4866
        %v4910 = vmul.f32 %v4654, %v4876
        %v4911 = vmul.f32 %v4655, %v4886
        %v4912 = vmul.f32 %v4656, %v4896
        %v4913 = vperm.slane %v906, 2
        %v4914 = vmul.f32 %v4897, %v4913
        %v4915 = vmul.f32 %v4898, %v4913
        %v4916 = vmul.f32 %v4899, %v4913
        %v4917 = vmul.f32 %v4900, %v4913
        %v4918 = vmul.f32 %v4901, %v4913
        %v4919 = vmul.f32 %v4902, %v4913
        %v4920 = vmul.f32 %v4903, %v4913
        %v4921 = vmul.f32 %v4904, %v4913
        %v4922 = vmul.f32 %v4905, %v4913
        %v4923 = vmul.f32 %v4906, %v4913
        %v4924 = vmul.f32 %v4907, %v4913
        %v4925 = vmul.f32 %v4908, %v4913
        %v4926 = vmul.f32 %v4909, %v4913
        %v4927 = vmul.f32 %v4910, %v4913
        %v4928 = vmul.f32 %v4911, %v4913
        %v4929 = vmul.f32 %v4912, %v4913
        %v4930 = vperm.slane %v907, 2
        %v4931 = vadd.f32 %v4914, %v4930
        %v4932 = vadd.f32 %v4915, %v4930
        %v4933 = vadd.f32 %v4916, %v4930
        %v4934 = vadd.f32 %v4917, %v4930
        %v4935 = vadd.f32 %v4918, %v4930
        %v4936 = vadd.f32 %v4919, %v4930
        %v4937 = vadd.f32 %v4920, %v4930
        %v4938 = vadd.f32 %v4921, %v4930
        %v4939 = vadd.f32 %v4922, %v4930
        %v4940 = vadd.f32 %v4923, %v4930
        %v4941 = vadd.f32 %v4924, %v4930
        %v4942 = vadd.f32 %v4925, %v4930
        %v4943 = vadd.f32 %v4926, %v4930
        %v4944 = vadd.f32 %v4927, %v4930
        %v4945 = vadd.f32 %v4928, %v4930
        %v4946 = vadd.f32 %v4929, %v4930
        %4947 = vst [vmem:[%s887] sm:$0xff] %v4931
        %4948 = vst [vmem:[%s887 + $0x8] sm:$0xff] %v4932
        %4949 = vst [vmem:[%s887 + $0x10] sm:$0xff] %v4933
        %4950 = vst [vmem:[%s887 + $0x18] sm:$0xff] %v4934
        %4951 = vst [vmem:[%s887 + $0x20] sm:$0xff] %v4935
        %4952 = vst [vmem:[%s887 + $0x28] sm:$0xff] %v4936
        %4953 = vst [vmem:[%s887 + $0x30] sm:$0xff] %v4937
        %4954 = vst [vmem:[%s887 + $0x38] sm:$0xff] %v4938
        %4955 = vst [vmem:[%s887 + $0x40] sm:$0xff] %v4939
        %4956 = vst [vmem:[%s887 + $0x48] sm:$0xff] %v4940
        %4957 = vst [vmem:[%s887 + $0x50] sm:$0xff] %v4941
        %4958 = vst [vmem:[%s887 + $0x58] sm:$0xff] %v4942
        %4959 = vst [vmem:[%s887 + $0x60] sm:$0xff] %v4943
        %4960 = vst [vmem:[%s887 + $0x68] sm:$0xff] %v4944
        %4961 = vst [vmem:[%s887 + $0x70] sm:$0xff] %v4945
        %4962 = vst [vmem:[%s887 + $0x78] sm:$0xff] %v4946
        %s4963 = sand.u32 %s478, 1
        %s4964 = scalar_lea.sflag [#allocation4], %s4963
        %s4965 = sand.u32 %s478, 1
        %s4966 = smul.addr %s4965, 128
        %s4967 = scalar_lea.vmem [#allocation28], %s4966
        // Predicated region
        $region165: #{tpu_custom_call.1} parent=99 // pred_check
          %p4968 = pneg %p488
        $region166: #{tpu_custom_call.1} parent=99 // pred_check_branch
          %4970 = sbr.rel (%p4968) target = $region168
        $region167: #{tpu_custom_call.1} parent=99 // pred_region
          %s4971 = smul.u32 16, %s45
          %4973 = vsyncadd %s4964, 0
          %s4974 = smul.addr %s4971, 8
          %s4975 = scalar_lea.hbm %s20, %s4974
          %s4976 = sshll.u32 %s4967, 4
          %s4977 = int_to_ptr.vmem [resolvable:$true] %s4976
          %s4978 = sshll.u32 %s4975, 4
          %s4979 = int_to_ptr.hbm [resolvable:$true] %s4978
          %4984 = dma.vmem_to_hbm [thread:$0]  %s4977, 2048, %s4979, %s4964, 128, 128, 8
        $region168: #{tpu_custom_call.1} parent=99 // pred_fallthru
          _
      $region100: #{tpu_custom_call.1} parent=5 // pred_fallthru
        _
      %p4985 = scmp.le.s32.totalorder 2, %s40
      // Predicated region
      $region169: #{tpu_custom_call.1} parent=5 // pred_check
        %p4986 = pneg %p4985
      $region170: #{tpu_custom_call.1} parent=5 // pred_check_branch
        %4988 = sbr.rel (%p4986) target = $region172
      $region171: #{tpu_custom_call.1} parent=5 // pred_region
        %s4989 = ssub.s32 %s40, 2
        // Predicated region
        $region173: #{tpu_custom_call.1} parent=171 // pred_check
          %p4990 = pneg %p494
        $region174: #{tpu_custom_call.1} parent=171 // pred_check_branch
          %4992 = sbr.rel (%p4990) target = $region176
        $region175: #{tpu_custom_call.1} parent=171 // pred_region
          %s4993 = sand.u32 %s479, 1
          %s4994 = scalar_lea.sflag [#allocation4], %s4993
          %s4995 = sand.u32 %s479, 1
          %s4996 = smul.addr %s4995, 128
          %s4997 = scalar_lea.vmem [#allocation28], %s4996
          %4999 = dma.done %s4994, 2048
        $region176: #{tpu_custom_call.1} parent=171 // pred_fallthru
          _
      $region172: #{tpu_custom_call.1} parent=5 // pred_fallthru
        _
    $region6: #{tpu_custom_call.1} parent=1 // loop_footer
      %s44 = sadd.s32 1, %s40
    $region7: #{tpu_custom_call.1} parent=1 // loop_footer_branch
      %39 = sbr.rel target = $region3
    $region8: #{tpu_custom_call.1} parent=1 // loop_exit
      _
    %5000 = vsyncpa [#allocation3], 1
    %s5001 = scalar_lea.sflag [#allocation3], 1
    %5002 = vsyncpa %s5001, 1
    %5003 = vsyncpa [#allocation6], 1
    %5004 = vsyncpa [#allocation9], 1
    %5005 = vsyncpa [#allocation12], 1
    %5006 = vsyncpa [#allocation15], 1
    %5007 = vsyncpa [#allocation18], 1
    %5008 = vsyncpa [#allocation21], 1
    %5009 = vsyncpa [#allocation24], 1
    %5010 = vsyncpa [#allocation27], 1
    %5011 = vsyncpa [#allocation4], 1
    %s5012 = scalar_lea.sflag [#allocation4], 1
    %5013 = vsyncpa %s5012, 1

</llo_original>
